<compile_context>
chip_gen: v7x
topology: tpu7x:2x2x1
jax: 0.10.0
libtpu: 0.0.40
codegen_flags: <defaults>
</compile_context>

<pallas_src>
import numpy as np
import jax
import jax.numpy as jnp
from jax import lax
from jax.experimental import pallas as pl
from jax.experimental.pallas import tpu as pltpu

# Model hyper-parameters (small, consistent with batch=2, channels=4, spatial=16)
H = W = 16          # spatial size
C_IN = 4            # input channels
C_MID = 16          # backbone stage-1 channels
C_OUT = 32          # backbone stage-2 channels (feature dim into the neck/head)
NUM_CLASSES = 10    # head.fc output dim
K = 3               # 3x3 convs, stride 1, padding 1 ("SAME")
NC_PAD = 128        # lane-dense padded head width (wrapper slices back)
B_PAD = 8           # sublane-dense padded batch rows for the output tile


def _premodel_kernel(x_ref, mask_ref, w1_ref, b1_ref, w2_ref, b2_ref,
                     pool_ref, wfc_ref, bfc_ref, out_ref):
    """Fused conv1 -> ReLU -> conv2 -> ReLU -> GAP -> fc, whole batch, one call.

    Dataflow is (channel, pixel) so activations are lane-dense:
      x_ref    : (C_IN,  N)         N = B*H*W, pixel r = b*H*W + h*W + w
      mask_ref : (9, 1, N)          0/1 tap-validity masks (host-precomputed)
      w1_ref   : (9, C_MID, C_IN)   per-tap conv1 weight blocks, w[t][o, i]
      b1_ref   : (C_MID, 1)
      w2_ref   : (9, C_OUT, C_MID)  per-tap conv2 weight blocks
      b2_ref   : (C_OUT, 1)
      pool_ref : (B_PAD, N)         GAP matrix: rows b<B are 1/(H*W) over image b
      wfc_ref  : (C_OUT, NC_PAD)    fc weight, zero-padded to 128 output lanes
      bfc_ref  : (1, NC_PAD)
      out_ref  : (B_PAD, NC_PAD)    full (8,128) tile -> unmasked, lane-dense store
    """
    n = x_ref.shape[1]

    def conv3x3(x_t, w_ref, c_out):
        # Per-tap accumulation: only ONE rolled/masked copy of the activation is
        # live at a time (bounds vreg pressure, no spill traffic, no wide lane
        # concat).  Tap shifts are static lane rolls (XLU slot, off the VPU path).
        acc = jnp.zeros((c_out, n), jnp.float32)
        t = 0
        for kh in range(K):
            for kw in range(K):
                d = (kh - 1) * W + (kw - 1)   # flat pixel offset of this tap
                shifted = x_t if d == 0 else pltpu.roll(x_t, shift=(-d) % n, axis=1)
                # Roll+mask correctness: pixels are ordered b-major, then h, then
                # w.  Wherever mask[t] == 1 we have 0 <= h+dh < H and
                # 0 <= w+dw < W, so column r+d is pixel (h+dh, w+dw) of the SAME
                # image -- no row wrap and no batch-boundary wrap.  Every column
                # that could wrap is masked to zero.  Do not change the pixel
                # ordering or padding without revisiting this argument.
                acc = acc + jnp.dot(w_ref[t], shifted * mask_ref[t],
                                    preferred_element_type=jnp.float32)
                t += 1
        return acc

    x_t = x_ref[...]                                                    # (C_IN, N)
    h1 = jnp.maximum(conv3x3(x_t, w1_ref, C_MID) + b1_ref[...], 0.0)    # (C_MID, N)
    h2 = jnp.maximum(conv3x3(h1, w2_ref, C_OUT) + b2_ref[...], 0.0)     # (C_OUT, N)

    # GlobalAveragePooling neck as one MXU matmul.  Contracting both operands'
    # pixel axes (the flash-attention q@k^T dot_general pattern) lands feat
    # directly in (batch, channel) -- no in-kernel transpose before the head.
    feat = lax.dot_general(pool_ref[...], h2,
                           dimension_numbers=(((1,), (1,)), ((), ())),
                           preferred_element_type=jnp.float32)          # (B_PAD, C_OUT)

    # head.fc: lane-dense (8, 128) output tile.  Columns >= NUM_CLASSES and rows
    # >= B carry only zero-padding (plus broadcast bias); the wrapper slices them
    # off.  Consumers must not read the padded region of the raw kernel output.
    logits = jnp.dot(feat, wfc_ref[...],
                     preferred_element_type=jnp.float32) + bfc_ref[...]
    out_ref[...] = logits.astype(out_ref.dtype)                         # (B_PAD, NC_PAD)


def _tap_masks(batch):
    """(9, 1, N) 0/1 validity masks: mask[t, 0, r] = 1 iff tap t of pixel r is in-image."""
    n = batch * H * W
    r = np.arange(n)
    hh = (r // W) % H
    ww = r % W
    m = np.zeros((K * K, 1, n), np.float32)
    t = 0
    for kh in range(K):
        for kw in range(K):
            dh, dw = kh - 1, kw - 1
            m[t, 0] = ((hh + dh >= 0) & (hh + dh < H) &
                       (ww + dw >= 0) & (ww + dw < W)).astype(np.float32)
            t += 1
    return m


def _pool_matrix(batch):
    """(B_PAD, N) GAP matrix: row b averages image b's pixels; padded rows are zero."""
    p = np.zeros((B_PAD, batch * H * W), np.float32)
    for b in range(batch):
        p[b, b * H * W:(b + 1) * H * W] = 1.0 / (H * W)
    return p


def prepare_inference(params, batch_size):
    """One-time parameter/constant preparation, hoisted out of the per-call path."""
    assert batch_size <= B_PAD
    # Per-tap weight blocks: w_blk[kh*K+kw, o, i] = w[kh, kw, i, o]  (HWIO -> taps x (O,I))
    w1_blk = jnp.transpose(params["w1"], (0, 1, 3, 2)).reshape(K * K, C_MID, C_IN)
    w2_blk = jnp.transpose(params["w2"], (0, 1, 3, 2)).reshape(K * K, C_OUT, C_MID)
    wfc_p = jnp.zeros((C_OUT, NC_PAD), jnp.float32).at[:, :NUM_CLASSES].set(params["wfc"])
    bfc_p = jnp.zeros((1, NC_PAD), jnp.float32).at[:, :NUM_CLASSES].set(params["bfc"])
    return {
        "mask": jnp.asarray(_tap_masks(batch_size)),
        "pool": jnp.asarray(_pool_matrix(batch_size)),
        "w1": w1_blk,
        "b1": params["b1"].reshape(C_MID, 1),
        "w2": w2_blk,
        "b2": params["b2"].reshape(C_OUT, 1),
        "wfc": wfc_p,
        "bfc": bfc_p,
    }


@jax.jit
def premodel_forward(x_nchw, prep):
    """x_nchw: (B, C_IN, H, W) float32 (PyTorch layout). Returns (B, NUM_CLASSES)."""
    B = x_nchw.shape[0]
    n = B * H * W
    # Only per-call layout work: NCHW -> (channel, pixel), pixels ordered b, h, w.
    x_t = jnp.transpose(x_nchw, (1, 0, 2, 3)).reshape(C_IN, n).astype(jnp.float32)

    out = pl.pallas_call(
        _premodel_kernel,
        out_shape=jax.ShapeDtypeStruct((B_PAD, NC_PAD), jnp.float32),
        in_specs=[pl.BlockSpec(memory_space=pltpu.MemorySpace.VMEM)] * 9,
        out_specs=pl.BlockSpec(memory_space=pltpu.MemorySpace.VMEM),
        cost_estimate=pl.CostEstimate(flops=5_636_096, transcendentals=0,
                                      bytes_accessed=85_000),
    )(x_t, prep["mask"], prep["w1"], prep["b1"], prep["w2"], prep["b2"],
      prep["pool"], prep["wfc"], prep["bfc"])
    # Padded rows/lanes of the kernel output are zero-weight padding; slice off.
    return out[:B, :NUM_CLASSES]


def init_params(key):
    k1, k2, k3, k4, k5, k6 = jax.random.split(key, 6)
    return {
        "w1": 0.1 * jax.random.normal(k1, (K, K, C_IN, C_MID), jnp.float32),
        "b1": 0.1 * jax.random.normal(k2, (1, C_MID), jnp.float32),
        "w2": 0.1 * jax.random.normal(k3, (K, K, C_MID, C_OUT), jnp.float32),
        "b2": 0.1 * jax.random.normal(k4, (1, C_OUT), jnp.float32),
        # PyTorch Linear stores (out, in); we keep (in, out) for the kernel.
        "wfc": 0.1 * jax.random.normal(k5, (C_OUT, NUM_CLASSES), jnp.float32),
        "bfc": 0.1 * jax.random.normal(k6, (1, NUM_CLASSES), jnp.float32),
    }


def reference_forward(x_nchw, params):
    """Pure-JAX reference of the same forward pass (for correctness check)."""
    x = jnp.transpose(x_nchw, (0, 2, 3, 1)).astype(jnp.float32)
    y = lax.conv_general_dilated(
        x, params["w1"], (1, 1), "SAME",
        dimension_numbers=("NHWC", "HWIO", "NHWC")) + params["b1"]
    y = jnp.maximum(y, 0.0)
    y = lax.conv_general_dilated(
        y, params["w2"], (1, 1), "SAME",
        dimension_numbers=("NHWC", "HWIO", "NHWC")) + params["b2"]
    y = jnp.maximum(y, 0.0)
    feat = jnp.mean(y, axis=(1, 2))                       # GAP neck
    return feat @ params["wfc"] + params["bfc"][0]        # head.fc


if __name__ == "__main__":
    key = jax.random.PRNGKey(0)
    kx, kp = jax.random.split(key)
    B = 2
    x = jax.random.normal(kx, (B, C_IN, H, W), jnp.float32)   # NCHW like PyTorch
    params = init_params(kp)
    prep = prepare_inference(params, batch_size=B)

    out = premodel_forward(x, prep)
    out = jax.block_until_ready(out)

    ref = reference_forward(x, params)
    assert out.shape == (B, NUM_CLASSES)
    assert jnp.allclose(out, ref, rtol=1e-4, atol=1e-4), "mismatch vs JAX reference"

    print("KERNEL_OK")
</pallas_src>

<mosaic_0001>
module attributes {stable_mosaic.version = 11 : i64} {
  func.func @_premodel_kernel(%arg0: memref<4x512xf32, #tpu.memory_space<vmem>>, %arg1: memref<9x1x512xf32, #tpu.memory_space<vmem>>, %arg2: memref<9x16x4xf32, #tpu.memory_space<vmem>>, %arg3: memref<16x1xf32, #tpu.memory_space<vmem>>, %arg4: memref<9x32x16xf32, #tpu.memory_space<vmem>>, %arg5: memref<32x1xf32, #tpu.memory_space<vmem>>, %arg6: memref<8x512xf32, #tpu.memory_space<vmem>>, %arg7: memref<32x128xf32, #tpu.memory_space<vmem>>, %arg8: memref<1x128xf32, #tpu.memory_space<vmem>>, %arg9: memref<8x128xf32, #tpu.memory_space<vmem>>) attributes {dimension_semantics = [], scalar_prefetch = 0 : i64, scratch_operands = 0 : i64, tpu.core_type = #tpu.core_type<tc>} {
    %c0 = arith.constant 0 : index
    %c0_0 = arith.constant 0 : index
    %0 = vector.load %arg0[%c0, %c0_0] : memref<4x512xf32, #tpu.memory_space<vmem>>, vector<4x512xf32>
    %cst = arith.constant 0.000000e+00 : f32
    %1 = vector.broadcast %cst : f32 to vector<16x512xf32>
    %c17_i32 = arith.constant 17 : i32
    %2 = tpu.dynamic_rotate %0 by %c17_i32 dim 1 : vector<4x512xf32>, i32 -> vector<4x512xf32>
    %c0_1 = arith.constant 0 : index
    %c0_2 = arith.constant 0 : index
    %c0_3 = arith.constant 0 : index
    %3 = vector.load %arg2[%c0_1, %c0_2, %c0_3] : memref<9x16x4xf32, #tpu.memory_space<vmem>>, vector<1x16x4xf32>
    %4 = vector.shape_cast %3 : vector<1x16x4xf32> to vector<16x4xf32>
    %c0_4 = arith.constant 0 : index
    %c0_5 = arith.constant 0 : index
    %c0_6 = arith.constant 0 : index
    %5 = vector.load %arg1[%c0_4, %c0_5, %c0_6] : memref<9x1x512xf32, #tpu.memory_space<vmem>>, vector<1x1x512xf32>
    %6 = vector.shape_cast %5 : vector<1x1x512xf32> to vector<1x512xf32>
    %7 = vector.broadcast %6 : vector<1x512xf32> to vector<4x512xf32>
    %8 = arith.mulf %2, %7 : vector<4x512xf32>
    %cst_7 = arith.constant dense<0.000000e+00> : vector<16x512xf32>
    %9 = tpu.matmul %4, %8, %cst_7 {dimension_numbers = #tpu.dot_dimension_numbers<[1], [0], [0], [1], [0, 0, 1, 1], [], []>} : vector<16x4xf32>, vector<4x512xf32>, vector<16x512xf32> -> vector<16x512xf32>
    %10 = arith.addf %1, %9 : vector<16x512xf32>
    %c16_i32 = arith.constant 16 : i32
    %11 = tpu.dynamic_rotate %0 by %c16_i32 dim 1 : vector<4x512xf32>, i32 -> vector<4x512xf32>
    %c1 = arith.constant 1 : index
    %c0_8 = arith.constant 0 : index
    %c0_9 = arith.constant 0 : index
    %12 = vector.load %arg2[%c1, %c0_8, %c0_9] : memref<9x16x4xf32, #tpu.memory_space<vmem>>, vector<1x16x4xf32>
    %13 = vector.shape_cast %12 : vector<1x16x4xf32> to vector<16x4xf32>
    %c1_10 = arith.constant 1 : index
    %c0_11 = arith.constant 0 : index
    %c0_12 = arith.constant 0 : index
    %14 = vector.load %arg1[%c1_10, %c0_11, %c0_12] : memref<9x1x512xf32, #tpu.memory_space<vmem>>, vector<1x1x512xf32>
    %15 = vector.shape_cast %14 : vector<1x1x512xf32> to vector<1x512xf32>
    %16 = vector.broadcast %15 : vector<1x512xf32> to vector<4x512xf32>
    %17 = arith.mulf %11, %16 : vector<4x512xf32>
    %cst_13 = arith.constant dense<0.000000e+00> : vector<16x512xf32>
    %18 = tpu.matmul %13, %17, %cst_13 {dimension_numbers = #tpu.dot_dimension_numbers<[1], [0], [0], [1], [0, 0, 1, 1], [], []>} : vector<16x4xf32>, vector<4x512xf32>, vector<16x512xf32> -> vector<16x512xf32>
    %19 = arith.addf %10, %18 : vector<16x512xf32>
    %c15_i32 = arith.constant 15 : i32
    %20 = tpu.dynamic_rotate %0 by %c15_i32 dim 1 : vector<4x512xf32>, i32 -> vector<4x512xf32>
    %c2 = arith.constant 2 : index
    %c0_14 = arith.constant 0 : index
    %c0_15 = arith.constant 0 : index
    %21 = vector.load %arg2[%c2, %c0_14, %c0_15] : memref<9x16x4xf32, #tpu.memory_space<vmem>>, vector<1x16x4xf32>
    %22 = vector.shape_cast %21 : vector<1x16x4xf32> to vector<16x4xf32>
    %c2_16 = arith.constant 2 : index
    %c0_17 = arith.constant 0 : index
    %c0_18 = arith.constant 0 : index
    %23 = vector.load %arg1[%c2_16, %c0_17, %c0_18] : memref<9x1x512xf32, #tpu.memory_space<vmem>>, vector<1x1x512xf32>
    %24 = vector.shape_cast %23 : vector<1x1x512xf32> to vector<1x512xf32>
    %25 = vector.broadcast %24 : vector<1x512xf32> to vector<4x512xf32>
    %26 = arith.mulf %20, %25 : vector<4x512xf32>
    %cst_19 = arith.constant dense<0.000000e+00> : vector<16x512xf32>
    %27 = tpu.matmul %22, %26, %cst_19 {dimension_numbers = #tpu.dot_dimension_numbers<[1], [0], [0], [1], [0, 0, 1, 1], [], []>} : vector<16x4xf32>, vector<4x512xf32>, vector<16x512xf32> -> vector<16x512xf32>
    %28 = arith.addf %19, %27 : vector<16x512xf32>
    %c1_i32 = arith.constant 1 : i32
    %29 = tpu.dynamic_rotate %0 by %c1_i32 dim 1 : vector<4x512xf32>, i32 -> vector<4x512xf32>
    %c3 = arith.constant 3 : index
    %c0_20 = arith.constant 0 : index
    %c0_21 = arith.constant 0 : index
    %30 = vector.load %arg2[%c3, %c0_20, %c0_21] : memref<9x16x4xf32, #tpu.memory_space<vmem>>, vector<1x16x4xf32>
    %31 = vector.shape_cast %30 : vector<1x16x4xf32> to vector<16x4xf32>
    %c3_22 = arith.constant 3 : index
    %c0_23 = arith.constant 0 : index
    %c0_24 = arith.constant 0 : index
    %32 = vector.load %arg1[%c3_22, %c0_23, %c0_24] : memref<9x1x512xf32, #tpu.memory_space<vmem>>, vector<1x1x512xf32>
    %33 = vector.shape_cast %32 : vector<1x1x512xf32> to vector<1x512xf32>
    %34 = vector.broadcast %33 : vector<1x512xf32> to vector<4x512xf32>
    %35 = arith.mulf %29, %34 : vector<4x512xf32>
    %cst_25 = arith.constant dense<0.000000e+00> : vector<16x512xf32>
    %36 = tpu.matmul %31, %35, %cst_25 {dimension_numbers = #tpu.dot_dimension_numbers<[1], [0], [0], [1], [0, 0, 1, 1], [], []>} : vector<16x4xf32>, vector<4x512xf32>, vector<16x512xf32> -> vector<16x512xf32>
    %37 = arith.addf %28, %36 : vector<16x512xf32>
    %c4 = arith.constant 4 : index
    %c0_26 = arith.constant 0 : index
    %c0_27 = arith.constant 0 : index
    %38 = vector.load %arg2[%c4, %c0_26, %c0_27] : memref<9x16x4xf32, #tpu.memory_space<vmem>>, vector<1x16x4xf32>
    %39 = vector.shape_cast %38 : vector<1x16x4xf32> to vector<16x4xf32>
    %c4_28 = arith.constant 4 : index
    %c0_29 = arith.constant 0 : index
    %c0_30 = arith.constant 0 : index
    %40 = vector.load %arg1[%c4_28, %c0_29, %c0_30] : memref<9x1x512xf32, #tpu.memory_space<vmem>>, vector<1x1x512xf32>
    %41 = vector.shape_cast %40 : vector<1x1x512xf32> to vector<1x512xf32>
    %42 = vector.broadcast %41 : vector<1x512xf32> to vector<4x512xf32>
    %43 = arith.mulf %0, %42 : vector<4x512xf32>
    %cst_31 = arith.constant dense<0.000000e+00> : vector<16x512xf32>
    %44 = tpu.matmul %39, %43, %cst_31 {dimension_numbers = #tpu.dot_dimension_numbers<[1], [0], [0], [1], [0, 0, 1, 1], [], []>} : vector<16x4xf32>, vector<4x512xf32>, vector<16x512xf32> -> vector<16x512xf32>
    %45 = arith.addf %37, %44 : vector<16x512xf32>
    %c511_i32 = arith.constant 511 : i32
    %46 = tpu.dynamic_rotate %0 by %c511_i32 dim 1 : vector<4x512xf32>, i32 -> vector<4x512xf32>
    %c5 = arith.constant 5 : index
    %c0_32 = arith.constant 0 : index
    %c0_33 = arith.constant 0 : index
    %47 = vector.load %arg2[%c5, %c0_32, %c0_33] : memref<9x16x4xf32, #tpu.memory_space<vmem>>, vector<1x16x4xf32>
    %48 = vector.shape_cast %47 : vector<1x16x4xf32> to vector<16x4xf32>
    %c5_34 = arith.constant 5 : index
    %c0_35 = arith.constant 0 : index
    %c0_36 = arith.constant 0 : index
    %49 = vector.load %arg1[%c5_34, %c0_35, %c0_36] : memref<9x1x512xf32, #tpu.memory_space<vmem>>, vector<1x1x512xf32>
    %50 = vector.shape_cast %49 : vector<1x1x512xf32> to vector<1x512xf32>
    %51 = vector.broadcast %50 : vector<1x512xf32> to vector<4x512xf32>
    %52 = arith.mulf %46, %51 : vector<4x512xf32>
    %cst_37 = arith.constant dense<0.000000e+00> : vector<16x512xf32>
    %53 = tpu.matmul %48, %52, %cst_37 {dimension_numbers = #tpu.dot_dimension_numbers<[1], [0], [0], [1], [0, 0, 1, 1], [], []>} : vector<16x4xf32>, vector<4x512xf32>, vector<16x512xf32> -> vector<16x512xf32>
    %54 = arith.addf %45, %53 : vector<16x512xf32>
    %c497_i32 = arith.constant 497 : i32
    %55 = tpu.dynamic_rotate %0 by %c497_i32 dim 1 : vector<4x512xf32>, i32 -> vector<4x512xf32>
    %c6 = arith.constant 6 : index
    %c0_38 = arith.constant 0 : index
    %c0_39 = arith.constant 0 : index
    %56 = vector.load %arg2[%c6, %c0_38, %c0_39] : memref<9x16x4xf32, #tpu.memory_space<vmem>>, vector<1x16x4xf32>
    %57 = vector.shape_cast %56 : vector<1x16x4xf32> to vector<16x4xf32>
    %c6_40 = arith.constant 6 : index
    %c0_41 = arith.constant 0 : index
    %c0_42 = arith.constant 0 : index
    %58 = vector.load %arg1[%c6_40, %c0_41, %c0_42] : memref<9x1x512xf32, #tpu.memory_space<vmem>>, vector<1x1x512xf32>
    %59 = vector.shape_cast %58 : vector<1x1x512xf32> to vector<1x512xf32>
    %60 = vector.broadcast %59 : vector<1x512xf32> to vector<4x512xf32>
    %61 = arith.mulf %55, %60 : vector<4x512xf32>
    %cst_43 = arith.constant dense<0.000000e+00> : vector<16x512xf32>
    %62 = tpu.matmul %57, %61, %cst_43 {dimension_numbers = #tpu.dot_dimension_numbers<[1], [0], [0], [1], [0, 0, 1, 1], [], []>} : vector<16x4xf32>, vector<4x512xf32>, vector<16x512xf32> -> vector<16x512xf32>
    %63 = arith.addf %54, %62 : vector<16x512xf32>
    %c496_i32 = arith.constant 496 : i32
    %64 = tpu.dynamic_rotate %0 by %c496_i32 dim 1 : vector<4x512xf32>, i32 -> vector<4x512xf32>
    %c7 = arith.constant 7 : index
    %c0_44 = arith.constant 0 : index
    %c0_45 = arith.constant 0 : index
    %65 = vector.load %arg2[%c7, %c0_44, %c0_45] : memref<9x16x4xf32, #tpu.memory_space<vmem>>, vector<1x16x4xf32>
    %66 = vector.shape_cast %65 : vector<1x16x4xf32> to vector<16x4xf32>
    %c7_46 = arith.constant 7 : index
    %c0_47 = arith.constant 0 : index
    %c0_48 = arith.constant 0 : index
    %67 = vector.load %arg1[%c7_46, %c0_47, %c0_48] : memref<9x1x512xf32, #tpu.memory_space<vmem>>, vector<1x1x512xf32>
    %68 = vector.shape_cast %67 : vector<1x1x512xf32> to vector<1x512xf32>
    %69 = vector.broadcast %68 : vector<1x512xf32> to vector<4x512xf32>
    %70 = arith.mulf %64, %69 : vector<4x512xf32>
    %cst_49 = arith.constant dense<0.000000e+00> : vector<16x512xf32>
    %71 = tpu.matmul %66, %70, %cst_49 {dimension_numbers = #tpu.dot_dimension_numbers<[1], [0], [0], [1], [0, 0, 1, 1], [], []>} : vector<16x4xf32>, vector<4x512xf32>, vector<16x512xf32> -> vector<16x512xf32>
    %72 = arith.addf %63, %71 : vector<16x512xf32>
    %c495_i32 = arith.constant 495 : i32
    %73 = tpu.dynamic_rotate %0 by %c495_i32 dim 1 : vector<4x512xf32>, i32 -> vector<4x512xf32>
    %c8 = arith.constant 8 : index
    %c0_50 = arith.constant 0 : index
    %c0_51 = arith.constant 0 : index
    %74 = vector.load %arg2[%c8, %c0_50, %c0_51] : memref<9x16x4xf32, #tpu.memory_space<vmem>>, vector<1x16x4xf32>
    %75 = vector.shape_cast %74 : vector<1x16x4xf32> to vector<16x4xf32>
    %c8_52 = arith.constant 8 : index
    %c0_53 = arith.constant 0 : index
    %c0_54 = arith.constant 0 : index
    %76 = vector.load %arg1[%c8_52, %c0_53, %c0_54] : memref<9x1x512xf32, #tpu.memory_space<vmem>>, vector<1x1x512xf32>
    %77 = vector.shape_cast %76 : vector<1x1x512xf32> to vector<1x512xf32>
    %78 = vector.broadcast %77 : vector<1x512xf32> to vector<4x512xf32>
    %79 = arith.mulf %73, %78 : vector<4x512xf32>
    %cst_55 = arith.constant dense<0.000000e+00> : vector<16x512xf32>
    %80 = tpu.matmul %75, %79, %cst_55 {dimension_numbers = #tpu.dot_dimension_numbers<[1], [0], [0], [1], [0, 0, 1, 1], [], []>} : vector<16x4xf32>, vector<4x512xf32>, vector<16x512xf32> -> vector<16x512xf32>
    %81 = arith.addf %72, %80 : vector<16x512xf32>
    %c0_56 = arith.constant 0 : index
    %c0_57 = arith.constant 0 : index
    %82 = vector.load %arg3[%c0_56, %c0_57] : memref<16x1xf32, #tpu.memory_space<vmem>>, vector<16x1xf32>
    %83 = vector.broadcast %82 : vector<16x1xf32> to vector<16x512xf32>
    %84 = arith.addf %81, %83 : vector<16x512xf32>
    %cst_58 = arith.constant 0.000000e+00 : f32
    %85 = vector.broadcast %cst_58 : f32 to vector<16x512xf32>
    %86 = arith.maximumf %84, %85 : vector<16x512xf32>
    %cst_59 = arith.constant 0.000000e+00 : f32
    %87 = vector.broadcast %cst_59 : f32 to vector<32x512xf32>
    %c17_i32_60 = arith.constant 17 : i32
    %88 = tpu.dynamic_rotate %86 by %c17_i32_60 dim 1 : vector<16x512xf32>, i32 -> vector<16x512xf32>
    %c0_61 = arith.constant 0 : index
    %c0_62 = arith.constant 0 : index
    %c0_63 = arith.constant 0 : index
    %89 = vector.load %arg4[%c0_61, %c0_62, %c0_63] : memref<9x32x16xf32, #tpu.memory_space<vmem>>, vector<1x32x16xf32>
    %90 = vector.shape_cast %89 : vector<1x32x16xf32> to vector<32x16xf32>
    %c0_64 = arith.constant 0 : index
    %c0_65 = arith.constant 0 : index
    %c0_66 = arith.constant 0 : index
    %91 = vector.load %arg1[%c0_64, %c0_65, %c0_66] : memref<9x1x512xf32, #tpu.memory_space<vmem>>, vector<1x1x512xf32>
    %92 = vector.shape_cast %91 : vector<1x1x512xf32> to vector<1x512xf32>
    %93 = vector.broadcast %92 : vector<1x512xf32> to vector<16x512xf32>
    %94 = arith.mulf %88, %93 : vector<16x512xf32>
    %cst_67 = arith.constant dense<0.000000e+00> : vector<32x512xf32>
    %95 = tpu.matmul %90, %94, %cst_67 {dimension_numbers = #tpu.dot_dimension_numbers<[1], [0], [0], [1], [0, 0, 1, 1], [], []>} : vector<32x16xf32>, vector<16x512xf32>, vector<32x512xf32> -> vector<32x512xf32>
    %96 = arith.addf %87, %95 : vector<32x512xf32>
    %c16_i32_68 = arith.constant 16 : i32
    %97 = tpu.dynamic_rotate %86 by %c16_i32_68 dim 1 : vector<16x512xf32>, i32 -> vector<16x512xf32>
    %c1_69 = arith.constant 1 : index
    %c0_70 = arith.constant 0 : index
    %c0_71 = arith.constant 0 : index
    %98 = vector.load %arg4[%c1_69, %c0_70, %c0_71] : memref<9x32x16xf32, #tpu.memory_space<vmem>>, vector<1x32x16xf32>
    %99 = vector.shape_cast %98 : vector<1x32x16xf32> to vector<32x16xf32>
    %c1_72 = arith.constant 1 : index
    %c0_73 = arith.constant 0 : index
    %c0_74 = arith.constant 0 : index
    %100 = vector.load %arg1[%c1_72, %c0_73, %c0_74] : memref<9x1x512xf32, #tpu.memory_space<vmem>>, vector<1x1x512xf32>
    %101 = vector.shape_cast %100 : vector<1x1x512xf32> to vector<1x512xf32>
    %102 = vector.broadcast %101 : vector<1x512xf32> to vector<16x512xf32>
    %103 = arith.mulf %97, %102 : vector<16x512xf32>
    %cst_75 = arith.constant dense<0.000000e+00> : vector<32x512xf32>
    %104 = tpu.matmul %99, %103, %cst_75 {dimension_numbers = #tpu.dot_dimension_numbers<[1], [0], [0], [1], [0, 0, 1, 1], [], []>} : vector<32x16xf32>, vector<16x512xf32>, vector<32x512xf32> -> vector<32x512xf32>
    %105 = arith.addf %96, %104 : vector<32x512xf32>
    %c15_i32_76 = arith.constant 15 : i32
    %106 = tpu.dynamic_rotate %86 by %c15_i32_76 dim 1 : vector<16x512xf32>, i32 -> vector<16x512xf32>
    %c2_77 = arith.constant 2 : index
    %c0_78 = arith.constant 0 : index
    %c0_79 = arith.constant 0 : index
    %107 = vector.load %arg4[%c2_77, %c0_78, %c0_79] : memref<9x32x16xf32, #tpu.memory_space<vmem>>, vector<1x32x16xf32>
    %108 = vector.shape_cast %107 : vector<1x32x16xf32> to vector<32x16xf32>
    %c2_80 = arith.constant 2 : index
    %c0_81 = arith.constant 0 : index
    %c0_82 = arith.constant 0 : index
    %109 = vector.load %arg1[%c2_80, %c0_81, %c0_82] : memref<9x1x512xf32, #tpu.memory_space<vmem>>, vector<1x1x512xf32>
    %110 = vector.shape_cast %109 : vector<1x1x512xf32> to vector<1x512xf32>
    %111 = vector.broadcast %110 : vector<1x512xf32> to vector<16x512xf32>
    %112 = arith.mulf %106, %111 : vector<16x512xf32>
    %cst_83 = arith.constant dense<0.000000e+00> : vector<32x512xf32>
    %113 = tpu.matmul %108, %112, %cst_83 {dimension_numbers = #tpu.dot_dimension_numbers<[1], [0], [0], [1], [0, 0, 1, 1], [], []>} : vector<32x16xf32>, vector<16x512xf32>, vector<32x512xf32> -> vector<32x512xf32>
    %114 = arith.addf %105, %113 : vector<32x512xf32>
    %c1_i32_84 = arith.constant 1 : i32
    %115 = tpu.dynamic_rotate %86 by %c1_i32_84 dim 1 : vector<16x512xf32>, i32 -> vector<16x512xf32>
    %c3_85 = arith.constant 3 : index
    %c0_86 = arith.constant 0 : index
    %c0_87 = arith.constant 0 : index
    %116 = vector.load %arg4[%c3_85, %c0_86, %c0_87] : memref<9x32x16xf32, #tpu.memory_space<vmem>>, vector<1x32x16xf32>
    %117 = vector.shape_cast %116 : vector<1x32x16xf32> to vector<32x16xf32>
    %c3_88 = arith.constant 3 : index
    %c0_89 = arith.constant 0 : index
    %c0_90 = arith.constant 0 : index
    %118 = vector.load %arg1[%c3_88, %c0_89, %c0_90] : memref<9x1x512xf32, #tpu.memory_space<vmem>>, vector<1x1x512xf32>
    %119 = vector.shape_cast %118 : vector<1x1x512xf32> to vector<1x512xf32>
    %120 = vector.broadcast %119 : vector<1x512xf32> to vector<16x512xf32>
    %121 = arith.mulf %115, %120 : vector<16x512xf32>
    %cst_91 = arith.constant dense<0.000000e+00> : vector<32x512xf32>
    %122 = tpu.matmul %117, %121, %cst_91 {dimension_numbers = #tpu.dot_dimension_numbers<[1], [0], [0], [1], [0, 0, 1, 1], [], []>} : vector<32x16xf32>, vector<16x512xf32>, vector<32x512xf32> -> vector<32x512xf32>
    %123 = arith.addf %114, %122 : vector<32x512xf32>
    %c4_92 = arith.constant 4 : index
    %c0_93 = arith.constant 0 : index
    %c0_94 = arith.constant 0 : index
    %124 = vector.load %arg4[%c4_92, %c0_93, %c0_94] : memref<9x32x16xf32, #tpu.memory_space<vmem>>, vector<1x32x16xf32>
    %125 = vector.shape_cast %124 : vector<1x32x16xf32> to vector<32x16xf32>
    %c4_95 = arith.constant 4 : index
    %c0_96 = arith.constant 0 : index
    %c0_97 = arith.constant 0 : index
    %126 = vector.load %arg1[%c4_95, %c0_96, %c0_97] : memref<9x1x512xf32, #tpu.memory_space<vmem>>, vector<1x1x512xf32>
    %127 = vector.shape_cast %126 : vector<1x1x512xf32> to vector<1x512xf32>
    %128 = vector.broadcast %127 : vector<1x512xf32> to vector<16x512xf32>
    %129 = arith.mulf %86, %128 : vector<16x512xf32>
    %cst_98 = arith.constant dense<0.000000e+00> : vector<32x512xf32>
    %130 = tpu.matmul %125, %129, %cst_98 {dimension_numbers = #tpu.dot_dimension_numbers<[1], [0], [0], [1], [0, 0, 1, 1], [], []>} : vector<32x16xf32>, vector<16x512xf32>, vector<32x512xf32> -> vector<32x512xf32>
    %131 = arith.addf %123, %130 : vector<32x512xf32>
    %c511_i32_99 = arith.constant 511 : i32
    %132 = tpu.dynamic_rotate %86 by %c511_i32_99 dim 1 : vector<16x512xf32>, i32 -> vector<16x512xf32>
    %c5_100 = arith.constant 5 : index
    %c0_101 = arith.constant 0 : index
    %c0_102 = arith.constant 0 : index
    %133 = vector.load %arg4[%c5_100, %c0_101, %c0_102] : memref<9x32x16xf32, #tpu.memory_space<vmem>>, vector<1x32x16xf32>
    %134 = vector.shape_cast %133 : vector<1x32x16xf32> to vector<32x16xf32>
    %c5_103 = arith.constant 5 : index
    %c0_104 = arith.constant 0 : index
    %c0_105 = arith.constant 0 : index
    %135 = vector.load %arg1[%c5_103, %c0_104, %c0_105] : memref<9x1x512xf32, #tpu.memory_space<vmem>>, vector<1x1x512xf32>
    %136 = vector.shape_cast %135 : vector<1x1x512xf32> to vector<1x512xf32>
    %137 = vector.broadcast %136 : vector<1x512xf32> to vector<16x512xf32>
    %138 = arith.mulf %132, %137 : vector<16x512xf32>
    %cst_106 = arith.constant dense<0.000000e+00> : vector<32x512xf32>
    %139 = tpu.matmul %134, %138, %cst_106 {dimension_numbers = #tpu.dot_dimension_numbers<[1], [0], [0], [1], [0, 0, 1, 1], [], []>} : vector<32x16xf32>, vector<16x512xf32>, vector<32x512xf32> -> vector<32x512xf32>
    %140 = arith.addf %131, %139 : vector<32x512xf32>
    %c497_i32_107 = arith.constant 497 : i32
    %141 = tpu.dynamic_rotate %86 by %c497_i32_107 dim 1 : vector<16x512xf32>, i32 -> vector<16x512xf32>
    %c6_108 = arith.constant 6 : index
    %c0_109 = arith.constant 0 : index
    %c0_110 = arith.constant 0 : index
    %142 = vector.load %arg4[%c6_108, %c0_109, %c0_110] : memref<9x32x16xf32, #tpu.memory_space<vmem>>, vector<1x32x16xf32>
    %143 = vector.shape_cast %142 : vector<1x32x16xf32> to vector<32x16xf32>
    %c6_111 = arith.constant 6 : index
    %c0_112 = arith.constant 0 : index
    %c0_113 = arith.constant 0 : index
    %144 = vector.load %arg1[%c6_111, %c0_112, %c0_113] : memref<9x1x512xf32, #tpu.memory_space<vmem>>, vector<1x1x512xf32>
    %145 = vector.shape_cast %144 : vector<1x1x512xf32> to vector<1x512xf32>
    %146 = vector.broadcast %145 : vector<1x512xf32> to vector<16x512xf32>
    %147 = arith.mulf %141, %146 : vector<16x512xf32>
    %cst_114 = arith.constant dense<0.000000e+00> : vector<32x512xf32>
    %148 = tpu.matmul %143, %147, %cst_114 {dimension_numbers = #tpu.dot_dimension_numbers<[1], [0], [0], [1], [0, 0, 1, 1], [], []>} : vector<32x16xf32>, vector<16x512xf32>, vector<32x512xf32> -> vector<32x512xf32>
    %149 = arith.addf %140, %148 : vector<32x512xf32>
    %c496_i32_115 = arith.constant 496 : i32
    %150 = tpu.dynamic_rotate %86 by %c496_i32_115 dim 1 : vector<16x512xf32>, i32 -> vector<16x512xf32>
    %c7_116 = arith.constant 7 : index
    %c0_117 = arith.constant 0 : index
    %c0_118 = arith.constant 0 : index
    %151 = vector.load %arg4[%c7_116, %c0_117, %c0_118] : memref<9x32x16xf32, #tpu.memory_space<vmem>>, vector<1x32x16xf32>
    %152 = vector.shape_cast %151 : vector<1x32x16xf32> to vector<32x16xf32>
    %c7_119 = arith.constant 7 : index
    %c0_120 = arith.constant 0 : index
    %c0_121 = arith.constant 0 : index
    %153 = vector.load %arg1[%c7_119, %c0_120, %c0_121] : memref<9x1x512xf32, #tpu.memory_space<vmem>>, vector<1x1x512xf32>
    %154 = vector.shape_cast %153 : vector<1x1x512xf32> to vector<1x512xf32>
    %155 = vector.broadcast %154 : vector<1x512xf32> to vector<16x512xf32>
    %156 = arith.mulf %150, %155 : vector<16x512xf32>
    %cst_122 = arith.constant dense<0.000000e+00> : vector<32x512xf32>
    %157 = tpu.matmul %152, %156, %cst_122 {dimension_numbers = #tpu.dot_dimension_numbers<[1], [0], [0], [1], [0, 0, 1, 1], [], []>} : vector<32x16xf32>, vector<16x512xf32>, vector<32x512xf32> -> vector<32x512xf32>
    %158 = arith.addf %149, %157 : vector<32x512xf32>
    %c495_i32_123 = arith.constant 495 : i32
    %159 = tpu.dynamic_rotate %86 by %c495_i32_123 dim 1 : vector<16x512xf32>, i32 -> vector<16x512xf32>
    %c8_124 = arith.constant 8 : index
    %c0_125 = arith.constant 0 : index
    %c0_126 = arith.constant 0 : index
    %160 = vector.load %arg4[%c8_124, %c0_125, %c0_126] : memref<9x32x16xf32, #tpu.memory_space<vmem>>, vector<1x32x16xf32>
    %161 = vector.shape_cast %160 : vector<1x32x16xf32> to vector<32x16xf32>
    %c8_127 = arith.constant 8 : index
    %c0_128 = arith.constant 0 : index
    %c0_129 = arith.constant 0 : index
    %162 = vector.load %arg1[%c8_127, %c0_128, %c0_129] : memref<9x1x512xf32, #tpu.memory_space<vmem>>, vector<1x1x512xf32>
    %163 = vector.shape_cast %162 : vector<1x1x512xf32> to vector<1x512xf32>
    %164 = vector.broadcast %163 : vector<1x512xf32> to vector<16x512xf32>
    %165 = arith.mulf %159, %164 : vector<16x512xf32>
    %cst_130 = arith.constant dense<0.000000e+00> : vector<32x512xf32>
    %166 = tpu.matmul %161, %165, %cst_130 {dimension_numbers = #tpu.dot_dimension_numbers<[1], [0], [0], [1], [0, 0, 1, 1], [], []>} : vector<32x16xf32>, vector<16x512xf32>, vector<32x512xf32> -> vector<32x512xf32>
    %167 = arith.addf %158, %166 : vector<32x512xf32>
    %c0_131 = arith.constant 0 : index
    %c0_132 = arith.constant 0 : index
    %168 = vector.load %arg5[%c0_131, %c0_132] : memref<32x1xf32, #tpu.memory_space<vmem>>, vector<32x1xf32>
    %169 = vector.broadcast %168 : vector<32x1xf32> to vector<32x512xf32>
    %170 = arith.addf %167, %169 : vector<32x512xf32>
    %cst_133 = arith.constant 0.000000e+00 : f32
    %171 = vector.broadcast %cst_133 : f32 to vector<32x512xf32>
    %172 = arith.maximumf %170, %171 : vector<32x512xf32>
    %c0_134 = arith.constant 0 : index
    %c0_135 = arith.constant 0 : index
    %173 = vector.load %arg6[%c0_134, %c0_135] : memref<8x512xf32, #tpu.memory_space<vmem>>, vector<8x512xf32>
    %cst_136 = arith.constant dense<0.000000e+00> : vector<8x32xf32>
    %174 = tpu.matmul %173, %172, %cst_136 {dimension_numbers = #tpu.dot_dimension_numbers<[1], [1], [0], [0], [0, 0, 1, 0], [], []>} : vector<8x512xf32>, vector<32x512xf32>, vector<8x32xf32> -> vector<8x32xf32>
    %c0_137 = arith.constant 0 : index
    %c0_138 = arith.constant 0 : index
    %175 = vector.load %arg7[%c0_137, %c0_138] : memref<32x128xf32, #tpu.memory_space<vmem>>, vector<32x128xf32>
    %cst_139 = arith.constant dense<0.000000e+00> : vector<8x128xf32>
    %176 = tpu.matmul %174, %175, %cst_139 {dimension_numbers = #tpu.dot_dimension_numbers<[1], [0], [0], [1], [0, 0, 1, 1], [], []>} : vector<8x32xf32>, vector<32x128xf32>, vector<8x128xf32> -> vector<8x128xf32>
    %c0_140 = arith.constant 0 : index
    %c0_141 = arith.constant 0 : index
    %177 = vector.load %arg8[%c0_140, %c0_141] : memref<1x128xf32, #tpu.memory_space<vmem>>, vector<1x128xf32>
    %178 = vector.broadcast %177 : vector<1x128xf32> to vector<8x128xf32>
    %179 = arith.addf %176, %178 : vector<8x128xf32>
    %c0_142 = arith.constant 0 : index
    %c0_143 = arith.constant 0 : index
    %180 = vector.load %arg9[%c0_142, %c0_143] : memref<8x128xf32, #tpu.memory_space<vmem>>, vector<8x128xf32>
    tpu.vector_store %arg9[%c0_142, %c0_143], %179 {strides = array<i32>} : memref<8x128xf32, #tpu.memory_space<vmem>>, vector<8x128xf32>,
    return
  }
}

</mosaic_0001>

<llo_original>
// kernel: premodel_forward.1
$region0: #{premodel_forward.1}
  #allocation0 [shape = 'u32[]', space=smem, size = 0x4, offset = 0x4, fixed_abs, tag = 'smem constant byte address 0x4 - core index']
  #allocation1 [shape = 'u32[144,128]{1,0:T(1,128)}', space=vmem, size = 0x12000, scoped, tag = 'internal scratch']
  %s0 = inlined_call_operand.vmem [shape: f32[4,512], index: 0, kind: input, shape index: {}]
  %s1 = inlined_call_operand.vmem [shape: f32[9,1,512], index: 1, kind: input, shape index: {}]
  %s2 = inlined_call_operand.vmem [shape: f32[9,16,4], index: 2, kind: input, shape index: {}]
  %s3 = inlined_call_operand.vmem [shape: f32[16,1], index: 3, kind: input, shape index: {}]
  %s4 = inlined_call_operand.vmem [shape: f32[9,32,16], index: 4, kind: input, shape index: {}]
  %s5 = inlined_call_operand.vmem [shape: f32[32,1], index: 5, kind: input, shape index: {}]
  %s6 = inlined_call_operand.vmem [shape: f32[8,512], index: 6, kind: input, shape index: {}]
  %s7 = inlined_call_operand.vmem [shape: f32[32,128], index: 7, kind: input, shape index: {}]
  %s8 = inlined_call_operand.vmem [shape: f32[1,128], index: 8, kind: input, shape index: {}]
  %s9 = inlined_call_operand.vmem [shape: f32[8,128], index: 9, kind: output, shape index: {}]
  %s10 = sld [smem:[#allocation0]]
  $region46: #{premodel_forward.1} parent=0
    _
  %s12 = ssub.s32 1, %s10
  %s13 = scalar_select 0, %s12, %s10
  // Predicated region
  $region2: #{premodel_forward.1} parent=0 // pred_check
    _
  $region3: #{premodel_forward.1} parent=0 // pred_check_branch
    %15 = sbr.rel (0) target = $region5
  $region4: #{premodel_forward.1} parent=0 // pred_region
    _
  $region5: #{premodel_forward.1} parent=0 // pred_fallthru
    _
  // Predicated region
  $region6: #{premodel_forward.1} parent=0 // pred_check
    _
  $region7: #{premodel_forward.1} parent=0 // pred_check_branch
    %17 = sbr.rel (0) target = $region9
  $region8: #{premodel_forward.1} parent=0 // pred_region
    _
  $region9: #{premodel_forward.1} parent=0 // pred_fallthru
    _
  // Predicated region
  $region10: #{premodel_forward.1} parent=0 // pred_check
    _
  $region11: #{premodel_forward.1} parent=0 // pred_check_branch
    %19 = sbr.rel (0) target = $region13
  $region12: #{premodel_forward.1} parent=0 // pred_region
    _
  $region13: #{premodel_forward.1} parent=0 // pred_fallthru
    _
  // Predicated region
  $region14: #{premodel_forward.1} parent=0 // pred_check
    _
  $region15: #{premodel_forward.1} parent=0 // pred_check_branch
    %21 = sbr.rel (0) target = $region17
  $region16: #{premodel_forward.1} parent=0 // pred_region
    _
  $region17: #{premodel_forward.1} parent=0 // pred_fallthru
    _
  // Predicated region
  $region18: #{premodel_forward.1} parent=0 // pred_check
    _
  $region19: #{premodel_forward.1} parent=0 // pred_check_branch
    %23 = sbr.rel (0) target = $region21
  $region20: #{premodel_forward.1} parent=0 // pred_region
    _
  $region21: #{premodel_forward.1} parent=0 // pred_fallthru
    _
  // Predicated region
  $region22: #{premodel_forward.1} parent=0 // pred_check
    _
  $region23: #{premodel_forward.1} parent=0 // pred_check_branch
    %25 = sbr.rel (0) target = $region25
  $region24: #{premodel_forward.1} parent=0 // pred_region
    _
  $region25: #{premodel_forward.1} parent=0 // pred_fallthru
    _
  // Predicated region
  $region26: #{premodel_forward.1} parent=0 // pred_check
    _
  $region27: #{premodel_forward.1} parent=0 // pred_check_branch
    %27 = sbr.rel (0) target = $region29
  $region28: #{premodel_forward.1} parent=0 // pred_region
    _
  $region29: #{premodel_forward.1} parent=0 // pred_fallthru
    _
  // Predicated region
  $region30: #{premodel_forward.1} parent=0 // pred_check
    _
  $region31: #{premodel_forward.1} parent=0 // pred_check_branch
    %29 = sbr.rel (0) target = $region33
  $region32: #{premodel_forward.1} parent=0 // pred_region
    _
  $region33: #{premodel_forward.1} parent=0 // pred_fallthru
    _
  // Predicated region
  $region34: #{premodel_forward.1} parent=0 // pred_check
    _
  $region35: #{premodel_forward.1} parent=0 // pred_check_branch
    %31 = sbr.rel (0) target = $region37
  $region36: #{premodel_forward.1} parent=0 // pred_region
    _
  $region37: #{premodel_forward.1} parent=0 // pred_fallthru
    _
  %v32 = vld [vmem:[%s0] sm:$0xff]
  %v33 = vld [vmem:[%s0 + $0x8] sm:$0xff]
  %v36 = vcombine.high %v32, %v32
  %v37 = vcombine.high %v33, %v33
  %40 = vrot.lane.b32.xlu0 %v32, 17
  %v41 = vpop.permute.xlu0 %40
  %42 = vrot.lane.b32.xlu0 %v36, 17
  %v43 = vpop.permute.xlu0 %42
  %44 = vrot.lane.b32.xlu0 %v33, 17
  %v45 = vpop.permute.xlu0 %44
  %46 = vrot.lane.b32.xlu0 %v37, 17
  %v47 = vpop.permute.xlu0 %46
  %v48 = vlaneseq
  %v49 = vand.u32 %v48, 127
  %vm50 = vcmp.lt.s32.totalorder %v49, 17
  %v51 = vsel %vm50, %v45, %v47
  %v52 = vsel %vm50, %v43, %v45
  %v53 = vsel %vm50, %v41, %v43
  %v54 = vsel %vm50, %v47, %v41
  %v55 = vld [vmem:[%s2] sm:$0xff]
  %v56 = vld [vmem:[%s2 + $0x8] sm:$0xff]
  %v57 = vld [vmem:[%s1] sm:$0xf]
  %v59 = vlaneseq
  %v60 = vshrl.u32 %v59, 7
  %v61 = vsub.s32 0, %v60
  %v62 = vrot.slane %v57, %v61
  %v63 = vlaneseq
  %v64 = vshrl.u32 %v63, 7
  %v65 = vsub.s32 1, %v64
  %v66 = vrot.slane %v57, %v65
  %v67 = vlaneseq
  %v68 = vshrl.u32 %v67, 7
  %v69 = vsub.s32 2, %v68
  %v70 = vrot.slane %v57, %v69
  %v71 = vlaneseq
  %v72 = vshrl.u32 %v71, 7
  %v73 = vsub.s32 3, %v72
  %v74 = vrot.slane %v57, %v73
  %v79 = vmul.f32 %v54, %v62
  %v80 = vmul.f32 %v53, %v66
  %v81 = vmul.f32 %v52, %v70
  %v82 = vmul.f32 %v51, %v74
  %83 = vrot.lane.b32.xlu0 %v32, 16
  %v84 = vpop.permute.xlu0 %83
  %85 = vrot.lane.b32.xlu0 %v36, 16
  %v86 = vpop.permute.xlu0 %85
  %87 = vrot.lane.b32.xlu0 %v33, 16
  %v88 = vpop.permute.xlu0 %87
  %89 = vrot.lane.b32.xlu0 %v37, 16
  %v90 = vpop.permute.xlu0 %89
  %vm91 = vcmp.lt.s32.totalorder %v49, 16
  %v92 = vsel %vm91, %v88, %v90
  %v93 = vsel %vm91, %v86, %v88
  %v94 = vsel %vm91, %v84, %v86
  %v95 = vsel %vm91, %v90, %v84
  %s96 = scalar_lea.vmem %s2, 16
  %v97 = vld [vmem:[%s96] sm:$0xff]
  %v98 = vld [vmem:[%s96 + $0x8] sm:$0xff]
  %s99 = scalar_lea.vmem %s1, 4
  %v100 = vld [vmem:[%s99] sm:$0xf]
  %v102 = vlaneseq
  %v103 = vshrl.u32 %v102, 7
  %v104 = vsub.s32 0, %v103
  %v105 = vrot.slane %v100, %v104
  %v106 = vlaneseq
  %v107 = vshrl.u32 %v106, 7
  %v108 = vsub.s32 1, %v107
  %v109 = vrot.slane %v100, %v108
  %v110 = vlaneseq
  %v111 = vshrl.u32 %v110, 7
  %v112 = vsub.s32 2, %v111
  %v113 = vrot.slane %v100, %v112
  %v114 = vlaneseq
  %v115 = vshrl.u32 %v114, 7
  %v116 = vsub.s32 3, %v115
  %v117 = vrot.slane %v100, %v116
  %v122 = vmul.f32 %v95, %v105
  %v123 = vmul.f32 %v94, %v109
  %v124 = vmul.f32 %v93, %v113
  %v125 = vmul.f32 %v92, %v117
  %vm126 = vcmask 31744
  %v128 = vsel %vm126, %v97, 0
  %v131 = vsel %vm126, %v98, 0
  %vm133 = vcmask 1043456
  %v135 = vsel %vm133, %v122, 0
  %v138 = vsel %vm133, %v123, 0
  %v141 = vsel %vm133, %v124, 0
  %v144 = vsel %vm133, %v125, 0
  %146 = vmatprep.subr.mxu0 %v138
  %147 = vmatpush1.msra.mxu0 %v135
  %148 = vmatprep.subr.mxu0 0.0
  %149 = vmatpush1.msra.mxu0 0.0
  %150 = vmatprep.subr.mxu0 0.0
  %151 = vmatpush1.msra.mxu0 0.0
  %152 = vmatprep.subr.mxu0 0.0
  %153 = vmatpush1.msra.mxu0 0.0
  %154 = vmatprep.subr.mxu0 0.0
  %155 = vmatpush1.msra.mxu0 0.0
  %156 = vmatprep.subr.mxu0 0.0
  %157 = vmatpush1.msra.mxu0 0.0
  %158 = vmatprep.subr.mxu0 0.0
  %159 = vmatpush1.msra.mxu0 0.0
  %160 = vmatprep.subr.mxu0 0.0
  %161 = vmatpush1.msra.mxu0 0.0
  %162 = vmatprep.subr.mxu0 0.0
  %163 = vmatpush1.msra.mxu0 0.0
  %164 = vmatprep.subr.mxu0 0.0
  %165 = vmatpush1.msra.mxu0 0.0
  %166 = vmatprep.subr.mxu0 0.0
  %167 = vmatpush1.msra.mxu0 0.0
  %168 = vmatprep.subr.mxu0 0.0
  %169 = vmatpush1.msra.mxu0 0.0
  %170 = vmatprep.subr.mxu0 0.0
  %171 = vmatpush1.msra.mxu0 0.0
  %172 = vmatprep.subr.mxu0 0.0
  %173 = vmatpush1.msra.mxu0 0.0
  %174 = vmatprep.subr.mxu0 0.0
  %175 = vmatpush1.msra.mxu0 0.0
  %176 = vmatprep.subr.mxu0 0.0
  %177 = vmatpush1.msra.mxu0 0.0
  %178 = vmatprep.subr.mxu0 0.0
  %179 = vmatpush1.msra.mxu0 0.0
  %180 = vmatprep.subr.mxu0 0.0
  %181 = vmatpush1.msra.mxu0 0.0
  %182 = vmatprep.subr.mxu0 0.0
  %183 = vmatpush1.msra.mxu0 0.0
  %184 = vmatprep.subr.mxu0 0.0
  %185 = vmatpush1.msra.mxu0 0.0
  %186 = vmatprep.subr.mxu0 0.0
  %187 = vmatpush1.msra.mxu0 0.0
  %188 = vmatprep.subr.mxu0 0.0
  %189 = vmatpush1.msra.mxu0 0.0
  %190 = vmatprep.subr.mxu0 0.0
  %191 = vmatpush1.msra.mxu0 0.0
  %192 = vmatprep.subr.mxu0 0.0
  %193 = vmatpush1.msra.mxu0 0.0
  %194 = vmatprep.subr.mxu0 0.0
  %195 = vmatpush1.msra.mxu0 0.0
  %196 = vmatprep.subr.mxu0 0.0
  %197 = vmatpush1.msra.mxu0 0.0
  %198 = vmatprep.subr.mxu0 0.0
  %199 = vmatpush1.msra.mxu0 0.0
  %200 = vmatprep.subr.mxu0 0.0
  %201 = vmatpush1.msra.mxu0 0.0
  %202 = vmatprep.subr.mxu0 0.0
  %203 = vmatpush1.msra.mxu0 0.0
  %204 = vmatprep.subr.mxu0 0.0
  %205 = vmatpush1.msra.mxu0 0.0
  %206 = vmatprep.subr.mxu0 0.0
  %207 = vmatpush1.msra.mxu0 0.0
  %208 = vmatprep.subr.mxu0 0.0
  %209 = vmatpush1.msra.mxu0 0.0
  %210 = vmatprep.mubr.f32.mxu0 0.0
  %211 = vmatmul.mubr.f32.gmra.mrb[0].mxu0 %v128
  %v212 = vpop.f32.mrb[0].mxu0
  %v213 = vadd.f32 0.0, %v212
  %v214 = vpop.f32.mrb[0].mxu0
  %v215 = vadd.f32 0.0, %v214
  %216 = vmatprep.mubr.f32.mxu0 0.0
  %217 = vmatmul.mubr.f32.gmra.mrb[0].mxu0 %v131
  %v218 = vpop.f32.mrb[0].mxu0
  %v219 = vadd.f32 0.0, %v218
  %v220 = vpop.f32.mrb[0].mxu0
  %v221 = vadd.f32 0.0, %v220
  %222 = vdwg.mxu0
  %223 = vmatprep.subr.mxu0 %v144
  %224 = vmatpush1.msra.mxu0 %v141
  %225 = vmatprep.subr.mxu0 0.0
  %226 = vmatpush1.msra.mxu0 0.0
  %227 = vmatprep.subr.mxu0 0.0
  %228 = vmatpush1.msra.mxu0 0.0
  %229 = vmatprep.subr.mxu0 0.0
  %230 = vmatpush1.msra.mxu0 0.0
  %231 = vmatprep.subr.mxu0 0.0
  %232 = vmatpush1.msra.mxu0 0.0
  %233 = vmatprep.subr.mxu0 0.0
  %234 = vmatpush1.msra.mxu0 0.0
  %235 = vmatprep.subr.mxu0 0.0
  %236 = vmatpush1.msra.mxu0 0.0
  %237 = vmatprep.subr.mxu0 0.0
  %238 = vmatpush1.msra.mxu0 0.0
  %239 = vmatprep.subr.mxu0 0.0
  %240 = vmatpush1.msra.mxu0 0.0
  %241 = vmatprep.subr.mxu0 0.0
  %242 = vmatpush1.msra.mxu0 0.0
  %243 = vmatprep.subr.mxu0 0.0
  %244 = vmatpush1.msra.mxu0 0.0
  %245 = vmatprep.subr.mxu0 0.0
  %246 = vmatpush1.msra.mxu0 0.0
  %247 = vmatprep.subr.mxu0 0.0
  %248 = vmatpush1.msra.mxu0 0.0
  %249 = vmatprep.subr.mxu0 0.0
  %250 = vmatpush1.msra.mxu0 0.0
  %251 = vmatprep.subr.mxu0 0.0
  %252 = vmatpush1.msra.mxu0 0.0
  %253 = vmatprep.subr.mxu0 0.0
  %254 = vmatpush1.msra.mxu0 0.0
  %255 = vmatprep.subr.mxu0 0.0
  %256 = vmatpush1.msra.mxu0 0.0
  %257 = vmatprep.subr.mxu0 0.0
  %258 = vmatpush1.msra.mxu0 0.0
  %259 = vmatprep.subr.mxu0 0.0
  %260 = vmatpush1.msra.mxu0 0.0
  %261 = vmatprep.subr.mxu0 0.0
  %262 = vmatpush1.msra.mxu0 0.0
  %263 = vmatprep.subr.mxu0 0.0
  %264 = vmatpush1.msra.mxu0 0.0
  %265 = vmatprep.subr.mxu0 0.0
  %266 = vmatpush1.msra.mxu0 0.0
  %267 = vmatprep.subr.mxu0 0.0
  %268 = vmatpush1.msra.mxu0 0.0
  %269 = vmatprep.subr.mxu0 0.0
  %270 = vmatpush1.msra.mxu0 0.0
  %271 = vmatprep.subr.mxu0 0.0
  %272 = vmatpush1.msra.mxu0 0.0
  %273 = vmatprep.subr.mxu0 0.0
  %274 = vmatpush1.msra.mxu0 0.0
  %275 = vmatprep.subr.mxu0 0.0
  %276 = vmatpush1.msra.mxu0 0.0
  %277 = vmatprep.subr.mxu0 0.0
  %278 = vmatpush1.msra.mxu0 0.0
  %279 = vmatprep.subr.mxu0 0.0
  %280 = vmatpush1.msra.mxu0 0.0
  %281 = vmatprep.subr.mxu0 0.0
  %282 = vmatpush1.msra.mxu0 0.0
  %283 = vmatprep.subr.mxu0 0.0
  %284 = vmatpush1.msra.mxu0 0.0
  %285 = vmatprep.subr.mxu0 0.0
  %286 = vmatpush1.msra.mxu0 0.0
  %287 = vmatprep.mubr.f32.mxu0 0.0
  %288 = vmatmul.mubr.f32.gmra.mrb[0].mxu0 %v128
  %v289 = vpop.f32.mrb[0].mxu0
  %v290 = vadd.f32 0.0, %v289
  %v291 = vpop.f32.mrb[0].mxu0
  %v292 = vadd.f32 0.0, %v291
  %293 = vmatprep.mubr.f32.mxu0 0.0
  %294 = vmatmul.mubr.f32.gmra.mrb[0].mxu0 %v131
  %v295 = vpop.f32.mrb[0].mxu0
  %v296 = vadd.f32 0.0, %v295
  %v297 = vpop.f32.mrb[0].mxu0
  %v298 = vadd.f32 0.0, %v297
  %299 = vdwg.mxu0
  %v301 = vsel %vm126, %v55, 0
  %v304 = vsel %vm126, %v56, 0
  %v307 = vsel %vm133, %v79, 0
  %v310 = vsel %vm133, %v80, 0
  %v313 = vsel %vm133, %v81, 0
  %v316 = vsel %vm133, %v82, 0
  %318 = vmatprep.subr.mxu0 %v310
  %319 = vmatpush1.msra.mxu0 %v307
  %320 = vmatprep.subr.mxu0 0.0
  %321 = vmatpush1.msra.mxu0 0.0
  %322 = vmatprep.subr.mxu0 0.0
  %323 = vmatpush1.msra.mxu0 0.0
  %324 = vmatprep.subr.mxu0 0.0
  %325 = vmatpush1.msra.mxu0 0.0
  %326 = vmatprep.subr.mxu0 0.0
  %327 = vmatpush1.msra.mxu0 0.0
  %328 = vmatprep.subr.mxu0 0.0
  %329 = vmatpush1.msra.mxu0 0.0
  %330 = vmatprep.subr.mxu0 0.0
  %331 = vmatpush1.msra.mxu0 0.0
  %332 = vmatprep.subr.mxu0 0.0
  %333 = vmatpush1.msra.mxu0 0.0
  %334 = vmatprep.subr.mxu0 0.0
  %335 = vmatpush1.msra.mxu0 0.0
  %336 = vmatprep.subr.mxu0 0.0
  %337 = vmatpush1.msra.mxu0 0.0
  %338 = vmatprep.subr.mxu0 0.0
  %339 = vmatpush1.msra.mxu0 0.0
  %340 = vmatprep.subr.mxu0 0.0
  %341 = vmatpush1.msra.mxu0 0.0
  %342 = vmatprep.subr.mxu0 0.0
  %343 = vmatpush1.msra.mxu0 0.0
  %344 = vmatprep.subr.mxu0 0.0
  %345 = vmatpush1.msra.mxu0 0.0
  %346 = vmatprep.subr.mxu0 0.0
  %347 = vmatpush1.msra.mxu0 0.0
  %348 = vmatprep.subr.mxu0 0.0
  %349 = vmatpush1.msra.mxu0 0.0
  %350 = vmatprep.subr.mxu0 0.0
  %351 = vmatpush1.msra.mxu0 0.0
  %352 = vmatprep.subr.mxu0 0.0
  %353 = vmatpush1.msra.mxu0 0.0
  %354 = vmatprep.subr.mxu0 0.0
  %355 = vmatpush1.msra.mxu0 0.0
  %356 = vmatprep.subr.mxu0 0.0
  %357 = vmatpush1.msra.mxu0 0.0
  %358 = vmatprep.subr.mxu0 0.0
  %359 = vmatpush1.msra.mxu0 0.0
  %360 = vmatprep.subr.mxu0 0.0
  %361 = vmatpush1.msra.mxu0 0.0
  %362 = vmatprep.subr.mxu0 0.0
  %363 = vmatpush1.msra.mxu0 0.0
  %364 = vmatprep.subr.mxu0 0.0
  %365 = vmatpush1.msra.mxu0 0.0
  %366 = vmatprep.subr.mxu0 0.0
  %367 = vmatpush1.msra.mxu0 0.0
  %368 = vmatprep.subr.mxu0 0.0
  %369 = vmatpush1.msra.mxu0 0.0
  %370 = vmatprep.subr.mxu0 0.0
  %371 = vmatpush1.msra.mxu0 0.0
  %372 = vmatprep.subr.mxu0 0.0
  %373 = vmatpush1.msra.mxu0 0.0
  %374 = vmatprep.subr.mxu0 0.0
  %375 = vmatpush1.msra.mxu0 0.0
  %376 = vmatprep.subr.mxu0 0.0
  %377 = vmatpush1.msra.mxu0 0.0
  %378 = vmatprep.subr.mxu0 0.0
  %379 = vmatpush1.msra.mxu0 0.0
  %380 = vmatprep.subr.mxu0 0.0
  %381 = vmatpush1.msra.mxu0 0.0
  %382 = vmatprep.mubr.f32.mxu0 0.0
  %383 = vmatmul.mubr.f32.gmra.mrb[0].mxu0 %v301
  %v384 = vpop.f32.mrb[0].mxu0
  %v385 = vadd.f32 %v213, %v384
  %v386 = vpop.f32.mrb[0].mxu0
  %v387 = vadd.f32 %v215, %v386
  %388 = vmatprep.mubr.f32.mxu0 0.0
  %389 = vmatmul.mubr.f32.gmra.mrb[0].mxu0 %v304
  %v390 = vpop.f32.mrb[0].mxu0
  %v391 = vadd.f32 %v219, %v390
  %v392 = vpop.f32.mrb[0].mxu0
  %v393 = vadd.f32 %v221, %v392
  %394 = vdwg.mxu0
  %395 = vmatprep.subr.mxu0 %v316
  %396 = vmatpush1.msra.mxu0 %v313
  %397 = vmatprep.subr.mxu0 0.0
  %398 = vmatpush1.msra.mxu0 0.0
  %399 = vmatprep.subr.mxu0 0.0
  %400 = vmatpush1.msra.mxu0 0.0
  %401 = vmatprep.subr.mxu0 0.0
  %402 = vmatpush1.msra.mxu0 0.0
  %403 = vmatprep.subr.mxu0 0.0
  %404 = vmatpush1.msra.mxu0 0.0
  %405 = vmatprep.subr.mxu0 0.0
  %406 = vmatpush1.msra.mxu0 0.0
  %407 = vmatprep.subr.mxu0 0.0
  %408 = vmatpush1.msra.mxu0 0.0
  %409 = vmatprep.subr.mxu0 0.0
  %410 = vmatpush1.msra.mxu0 0.0
  %411 = vmatprep.subr.mxu0 0.0
  %412 = vmatpush1.msra.mxu0 0.0
  %413 = vmatprep.subr.mxu0 0.0
  %414 = vmatpush1.msra.mxu0 0.0
  %415 = vmatprep.subr.mxu0 0.0
  %416 = vmatpush1.msra.mxu0 0.0
  %417 = vmatprep.subr.mxu0 0.0
  %418 = vmatpush1.msra.mxu0 0.0
  %419 = vmatprep.subr.mxu0 0.0
  %420 = vmatpush1.msra.mxu0 0.0
  %421 = vmatprep.subr.mxu0 0.0
  %422 = vmatpush1.msra.mxu0 0.0
  %423 = vmatprep.subr.mxu0 0.0
  %424 = vmatpush1.msra.mxu0 0.0
  %425 = vmatprep.subr.mxu0 0.0
  %426 = vmatpush1.msra.mxu0 0.0
  %427 = vmatprep.subr.mxu0 0.0
  %428 = vmatpush1.msra.mxu0 0.0
  %429 = vmatprep.subr.mxu0 0.0
  %430 = vmatpush1.msra.mxu0 0.0
  %431 = vmatprep.subr.mxu0 0.0
  %432 = vmatpush1.msra.mxu0 0.0
  %433 = vmatprep.subr.mxu0 0.0
  %434 = vmatpush1.msra.mxu0 0.0
  %435 = vmatprep.subr.mxu0 0.0
  %436 = vmatpush1.msra.mxu0 0.0
  %437 = vmatprep.subr.mxu0 0.0
  %438 = vmatpush1.msra.mxu0 0.0
  %439 = vmatprep.subr.mxu0 0.0
  %440 = vmatpush1.msra.mxu0 0.0
  %441 = vmatprep.subr.mxu0 0.0
  %442 = vmatpush1.msra.mxu0 0.0
  %443 = vmatprep.subr.mxu0 0.0
  %444 = vmatpush1.msra.mxu0 0.0
  %445 = vmatprep.subr.mxu0 0.0
  %446 = vmatpush1.msra.mxu0 0.0
  %447 = vmatprep.subr.mxu0 0.0
  %448 = vmatpush1.msra.mxu0 0.0
  %449 = vmatprep.subr.mxu0 0.0
  %450 = vmatpush1.msra.mxu0 0.0
  %451 = vmatprep.subr.mxu0 0.0
  %452 = vmatpush1.msra.mxu0 0.0
  %453 = vmatprep.subr.mxu0 0.0
  %454 = vmatpush1.msra.mxu0 0.0
  %455 = vmatprep.subr.mxu0 0.0
  %456 = vmatpush1.msra.mxu0 0.0
  %457 = vmatprep.subr.mxu0 0.0
  %458 = vmatpush1.msra.mxu0 0.0
  %459 = vmatprep.mubr.f32.mxu0 0.0
  %460 = vmatmul.mubr.f32.gmra.mrb[0].mxu0 %v301
  %v461 = vpop.f32.mrb[0].mxu0
  %v462 = vadd.f32 %v290, %v461
  %v463 = vpop.f32.mrb[0].mxu0
  %v464 = vadd.f32 %v292, %v463
  %465 = vmatprep.mubr.f32.mxu0 0.0
  %466 = vmatmul.mubr.f32.gmra.mrb[0].mxu0 %v304
  %v467 = vpop.f32.mrb[0].mxu0
  %v468 = vadd.f32 %v296, %v467
  %v469 = vpop.f32.mrb[0].mxu0
  %v470 = vadd.f32 %v298, %v469
  %471 = vdwg.mxu0
  %472 = vrot.lane.b32.xlu0 %v32, 15
  %v473 = vpop.permute.xlu0 %472
  %474 = vrot.lane.b32.xlu0 %v36, 15
  %v475 = vpop.permute.xlu0 %474
  %476 = vrot.lane.b32.xlu0 %v33, 15
  %v477 = vpop.permute.xlu0 %476
  %478 = vrot.lane.b32.xlu0 %v37, 15
  %v479 = vpop.permute.xlu0 %478
  %vm480 = vcmp.lt.s32.totalorder %v49, 15
  %v481 = vsel %vm480, %v477, %v479
  %v482 = vsel %vm480, %v475, %v477
  %v483 = vsel %vm480, %v473, %v475
  %v484 = vsel %vm480, %v479, %v473
  %s485 = scalar_lea.vmem %s2, 32
  %v486 = vld [vmem:[%s485] sm:$0xff]
  %v487 = vld [vmem:[%s485 + $0x8] sm:$0xff]
  %s488 = scalar_lea.vmem %s1, 8
  %v489 = vld [vmem:[%s488] sm:$0xf]
  %v491 = vlaneseq
  %v492 = vshrl.u32 %v491, 7
  %v493 = vsub.s32 0, %v492
  %v494 = vrot.slane %v489, %v493
  %v495 = vlaneseq
  %v496 = vshrl.u32 %v495, 7
  %v497 = vsub.s32 1, %v496
  %v498 = vrot.slane %v489, %v497
  %v499 = vlaneseq
  %v500 = vshrl.u32 %v499, 7
  %v501 = vsub.s32 2, %v500
  %v502 = vrot.slane %v489, %v501
  %v503 = vlaneseq
  %v504 = vshrl.u32 %v503, 7
  %v505 = vsub.s32 3, %v504
  %v506 = vrot.slane %v489, %v505
  %v511 = vmul.f32 %v484, %v494
  %v512 = vmul.f32 %v483, %v498
  %v513 = vmul.f32 %v482, %v502
  %v514 = vmul.f32 %v481, %v506
  %v516 = vsel %vm126, %v486, 0
  %v519 = vsel %vm126, %v487, 0
  %v522 = vsel %vm133, %v511, 0
  %v525 = vsel %vm133, %v512, 0
  %v528 = vsel %vm133, %v513, 0
  %v531 = vsel %vm133, %v514, 0
  %533 = vmatprep.subr.mxu0 %v525
  %534 = vmatpush1.msra.mxu0 %v522
  %535 = vmatprep.subr.mxu0 0.0
  %536 = vmatpush1.msra.mxu0 0.0
  %537 = vmatprep.subr.mxu0 0.0
  %538 = vmatpush1.msra.mxu0 0.0
  %539 = vmatprep.subr.mxu0 0.0
  %540 = vmatpush1.msra.mxu0 0.0
  %541 = vmatprep.subr.mxu0 0.0
  %542 = vmatpush1.msra.mxu0 0.0
  %543 = vmatprep.subr.mxu0 0.0
  %544 = vmatpush1.msra.mxu0 0.0
  %545 = vmatprep.subr.mxu0 0.0
  %546 = vmatpush1.msra.mxu0 0.0
  %547 = vmatprep.subr.mxu0 0.0
  %548 = vmatpush1.msra.mxu0 0.0
  %549 = vmatprep.subr.mxu0 0.0
  %550 = vmatpush1.msra.mxu0 0.0
  %551 = vmatprep.subr.mxu0 0.0
  %552 = vmatpush1.msra.mxu0 0.0
  %553 = vmatprep.subr.mxu0 0.0
  %554 = vmatpush1.msra.mxu0 0.0
  %555 = vmatprep.subr.mxu0 0.0
  %556 = vmatpush1.msra.mxu0 0.0
  %557 = vmatprep.subr.mxu0 0.0
  %558 = vmatpush1.msra.mxu0 0.0
  %559 = vmatprep.subr.mxu0 0.0
  %560 = vmatpush1.msra.mxu0 0.0
  %561 = vmatprep.subr.mxu0 0.0
  %562 = vmatpush1.msra.mxu0 0.0
  %563 = vmatprep.subr.mxu0 0.0
  %564 = vmatpush1.msra.mxu0 0.0
  %565 = vmatprep.subr.mxu0 0.0
  %566 = vmatpush1.msra.mxu0 0.0
  %567 = vmatprep.subr.mxu0 0.0
  %568 = vmatpush1.msra.mxu0 0.0
  %569 = vmatprep.subr.mxu0 0.0
  %570 = vmatpush1.msra.mxu0 0.0
  %571 = vmatprep.subr.mxu0 0.0
  %572 = vmatpush1.msra.mxu0 0.0
  %573 = vmatprep.subr.mxu0 0.0
  %574 = vmatpush1.msra.mxu0 0.0
  %575 = vmatprep.subr.mxu0 0.0
  %576 = vmatpush1.msra.mxu0 0.0
  %577 = vmatprep.subr.mxu0 0.0
  %578 = vmatpush1.msra.mxu0 0.0
  %579 = vmatprep.subr.mxu0 0.0
  %580 = vmatpush1.msra.mxu0 0.0
  %581 = vmatprep.subr.mxu0 0.0
  %582 = vmatpush1.msra.mxu0 0.0
  %583 = vmatprep.subr.mxu0 0.0
  %584 = vmatpush1.msra.mxu0 0.0
  %585 = vmatprep.subr.mxu0 0.0
  %586 = vmatpush1.msra.mxu0 0.0
  %587 = vmatprep.subr.mxu0 0.0
  %588 = vmatpush1.msra.mxu0 0.0
  %589 = vmatprep.subr.mxu0 0.0
  %590 = vmatpush1.msra.mxu0 0.0
  %591 = vmatprep.subr.mxu0 0.0
  %592 = vmatpush1.msra.mxu0 0.0
  %593 = vmatprep.subr.mxu0 0.0
  %594 = vmatpush1.msra.mxu0 0.0
  %595 = vmatprep.subr.mxu0 0.0
  %596 = vmatpush1.msra.mxu0 0.0
  %597 = vmatprep.mubr.f32.mxu0 0.0
  %598 = vmatmul.mubr.f32.gmra.mrb[0].mxu0 %v516
  %v599 = vpop.f32.mrb[0].mxu0
  %v600 = vadd.f32 0.0, %v599
  %v601 = vpop.f32.mrb[0].mxu0
  %v602 = vadd.f32 0.0, %v601
  %603 = vmatprep.mubr.f32.mxu0 0.0
  %604 = vmatmul.mubr.f32.gmra.mrb[0].mxu0 %v519
  %v605 = vpop.f32.mrb[0].mxu0
  %v606 = vadd.f32 0.0, %v605
  %v607 = vpop.f32.mrb[0].mxu0
  %v608 = vadd.f32 0.0, %v607
  %609 = vdwg.mxu0
  %610 = vmatprep.subr.mxu0 %v531
  %611 = vmatpush1.msra.mxu0 %v528
  %612 = vmatprep.subr.mxu0 0.0
  %613 = vmatpush1.msra.mxu0 0.0
  %614 = vmatprep.subr.mxu0 0.0
  %615 = vmatpush1.msra.mxu0 0.0
  %616 = vmatprep.subr.mxu0 0.0
  %617 = vmatpush1.msra.mxu0 0.0
  %618 = vmatprep.subr.mxu0 0.0
  %619 = vmatpush1.msra.mxu0 0.0
  %620 = vmatprep.subr.mxu0 0.0
  %621 = vmatpush1.msra.mxu0 0.0
  %622 = vmatprep.subr.mxu0 0.0
  %623 = vmatpush1.msra.mxu0 0.0
  %624 = vmatprep.subr.mxu0 0.0
  %625 = vmatpush1.msra.mxu0 0.0
  %626 = vmatprep.subr.mxu0 0.0
  %627 = vmatpush1.msra.mxu0 0.0
  %628 = vmatprep.subr.mxu0 0.0
  %629 = vmatpush1.msra.mxu0 0.0
  %630 = vmatprep.subr.mxu0 0.0
  %631 = vmatpush1.msra.mxu0 0.0
  %632 = vmatprep.subr.mxu0 0.0
  %633 = vmatpush1.msra.mxu0 0.0
  %634 = vmatprep.subr.mxu0 0.0
  %635 = vmatpush1.msra.mxu0 0.0
  %636 = vmatprep.subr.mxu0 0.0
  %637 = vmatpush1.msra.mxu0 0.0
  %638 = vmatprep.subr.mxu0 0.0
  %639 = vmatpush1.msra.mxu0 0.0
  %640 = vmatprep.subr.mxu0 0.0
  %641 = vmatpush1.msra.mxu0 0.0
  %642 = vmatprep.subr.mxu0 0.0
  %643 = vmatpush1.msra.mxu0 0.0
  %644 = vmatprep.subr.mxu0 0.0
  %645 = vmatpush1.msra.mxu0 0.0
  %646 = vmatprep.subr.mxu0 0.0
  %647 = vmatpush1.msra.mxu0 0.0
  %648 = vmatprep.subr.mxu0 0.0
  %649 = vmatpush1.msra.mxu0 0.0
  %650 = vmatprep.subr.mxu0 0.0
  %651 = vmatpush1.msra.mxu0 0.0
  %652 = vmatprep.subr.mxu0 0.0
  %653 = vmatpush1.msra.mxu0 0.0
  %654 = vmatprep.subr.mxu0 0.0
  %655 = vmatpush1.msra.mxu0 0.0
  %656 = vmatprep.subr.mxu0 0.0
  %657 = vmatpush1.msra.mxu0 0.0
  %658 = vmatprep.subr.mxu0 0.0
  %659 = vmatpush1.msra.mxu0 0.0
  %660 = vmatprep.subr.mxu0 0.0
  %661 = vmatpush1.msra.mxu0 0.0
  %662 = vmatprep.subr.mxu0 0.0
  %663 = vmatpush1.msra.mxu0 0.0
  %664 = vmatprep.subr.mxu0 0.0
  %665 = vmatpush1.msra.mxu0 0.0
  %666 = vmatprep.subr.mxu0 0.0
  %667 = vmatpush1.msra.mxu0 0.0
  %668 = vmatprep.subr.mxu0 0.0
  %669 = vmatpush1.msra.mxu0 0.0
  %670 = vmatprep.subr.mxu0 0.0
  %671 = vmatpush1.msra.mxu0 0.0
  %672 = vmatprep.subr.mxu0 0.0
  %673 = vmatpush1.msra.mxu0 0.0
  %674 = vmatprep.mubr.f32.mxu0 0.0
  %675 = vmatmul.mubr.f32.gmra.mrb[0].mxu0 %v516
  %v676 = vpop.f32.mrb[0].mxu0
  %v677 = vadd.f32 0.0, %v676
  %v678 = vpop.f32.mrb[0].mxu0
  %v679 = vadd.f32 0.0, %v678
  %680 = vmatprep.mubr.f32.mxu0 0.0
  %681 = vmatmul.mubr.f32.gmra.mrb[0].mxu0 %v519
  %v682 = vpop.f32.mrb[0].mxu0
  %v683 = vadd.f32 0.0, %v682
  %v684 = vpop.f32.mrb[0].mxu0
  %v685 = vadd.f32 0.0, %v684
  %686 = vdwg.mxu0
  %v687 = vadd.f32 %v385, %v600
  %v688 = vadd.f32 %v387, %v602
  %v689 = vadd.f32 %v462, %v677
  %v690 = vadd.f32 %v464, %v679
  %v691 = vadd.f32 %v391, %v606
  %v692 = vadd.f32 %v393, %v608
  %v693 = vadd.f32 %v468, %v683
  %v694 = vadd.f32 %v470, %v685
  %695 = vrot.lane.b32.xlu0 %v32, 1
  %v696 = vpop.permute.xlu0 %695
  %697 = vrot.lane.b32.xlu0 %v36, 1
  %v698 = vpop.permute.xlu0 %697
  %699 = vrot.lane.b32.xlu0 %v33, 1
  %v700 = vpop.permute.xlu0 %699
  %701 = vrot.lane.b32.xlu0 %v37, 1
  %v702 = vpop.permute.xlu0 %701
  %vm703 = vcmp.lt.s32.totalorder %v49, 1
  %v704 = vsel %vm703, %v700, %v702
  %v705 = vsel %vm703, %v698, %v700
  %v706 = vsel %vm703, %v696, %v698
  %v707 = vsel %vm703, %v702, %v696
  %s708 = scalar_lea.vmem %s2, 48
  %v709 = vld [vmem:[%s708] sm:$0xff]
  %v710 = vld [vmem:[%s708 + $0x8] sm:$0xff]
  %s711 = scalar_lea.vmem %s1, 12
  %v712 = vld [vmem:[%s711] sm:$0xf]
  %v714 = vlaneseq
  %v715 = vshrl.u32 %v714, 7
  %v716 = vsub.s32 0, %v715
  %v717 = vrot.slane %v712, %v716
  %v718 = vlaneseq
  %v719 = vshrl.u32 %v718, 7
  %v720 = vsub.s32 1, %v719
  %v721 = vrot.slane %v712, %v720
  %v722 = vlaneseq
  %v723 = vshrl.u32 %v722, 7
  %v724 = vsub.s32 2, %v723
  %v725 = vrot.slane %v712, %v724
  %v726 = vlaneseq
  %v727 = vshrl.u32 %v726, 7
  %v728 = vsub.s32 3, %v727
  %v729 = vrot.slane %v712, %v728
  %v734 = vmul.f32 %v707, %v717
  %v735 = vmul.f32 %v706, %v721
  %v736 = vmul.f32 %v705, %v725
  %v737 = vmul.f32 %v704, %v729
  %v739 = vsel %vm126, %v709, 0
  %v742 = vsel %vm126, %v710, 0
  %v745 = vsel %vm133, %v734, 0
  %v748 = vsel %vm133, %v735, 0
  %v751 = vsel %vm133, %v736, 0
  %v754 = vsel %vm133, %v737, 0
  %756 = vmatprep.subr.mxu0 %v748
  %757 = vmatpush1.msra.mxu0 %v745
  %758 = vmatprep.subr.mxu0 0.0
  %759 = vmatpush1.msra.mxu0 0.0
  %760 = vmatprep.subr.mxu0 0.0
  %761 = vmatpush1.msra.mxu0 0.0
  %762 = vmatprep.subr.mxu0 0.0
  %763 = vmatpush1.msra.mxu0 0.0
  %764 = vmatprep.subr.mxu0 0.0
  %765 = vmatpush1.msra.mxu0 0.0
  %766 = vmatprep.subr.mxu0 0.0
  %767 = vmatpush1.msra.mxu0 0.0
  %768 = vmatprep.subr.mxu0 0.0
  %769 = vmatpush1.msra.mxu0 0.0
  %770 = vmatprep.subr.mxu0 0.0
  %771 = vmatpush1.msra.mxu0 0.0
  %772 = vmatprep.subr.mxu0 0.0
  %773 = vmatpush1.msra.mxu0 0.0
  %774 = vmatprep.subr.mxu0 0.0
  %775 = vmatpush1.msra.mxu0 0.0
  %776 = vmatprep.subr.mxu0 0.0
  %777 = vmatpush1.msra.mxu0 0.0
  %778 = vmatprep.subr.mxu0 0.0
  %779 = vmatpush1.msra.mxu0 0.0
  %780 = vmatprep.subr.mxu0 0.0
  %781 = vmatpush1.msra.mxu0 0.0
  %782 = vmatprep.subr.mxu0 0.0
  %783 = vmatpush1.msra.mxu0 0.0
  %784 = vmatprep.subr.mxu0 0.0
  %785 = vmatpush1.msra.mxu0 0.0
  %786 = vmatprep.subr.mxu0 0.0
  %787 = vmatpush1.msra.mxu0 0.0
  %788 = vmatprep.subr.mxu0 0.0
  %789 = vmatpush1.msra.mxu0 0.0
  %790 = vmatprep.subr.mxu0 0.0
  %791 = vmatpush1.msra.mxu0 0.0
  %792 = vmatprep.subr.mxu0 0.0
  %793 = vmatpush1.msra.mxu0 0.0
  %794 = vmatprep.subr.mxu0 0.0
  %795 = vmatpush1.msra.mxu0 0.0
  %796 = vmatprep.subr.mxu0 0.0
  %797 = vmatpush1.msra.mxu0 0.0
  %798 = vmatprep.subr.mxu0 0.0
  %799 = vmatpush1.msra.mxu0 0.0
  %800 = vmatprep.subr.mxu0 0.0
  %801 = vmatpush1.msra.mxu0 0.0
  %802 = vmatprep.subr.mxu0 0.0
  %803 = vmatpush1.msra.mxu0 0.0
  %804 = vmatprep.subr.mxu0 0.0
  %805 = vmatpush1.msra.mxu0 0.0
  %806 = vmatprep.subr.mxu0 0.0
  %807 = vmatpush1.msra.mxu0 0.0
  %808 = vmatprep.subr.mxu0 0.0
  %809 = vmatpush1.msra.mxu0 0.0
  %810 = vmatprep.subr.mxu0 0.0
  %811 = vmatpush1.msra.mxu0 0.0
  %812 = vmatprep.subr.mxu0 0.0
  %813 = vmatpush1.msra.mxu0 0.0
  %814 = vmatprep.subr.mxu0 0.0
  %815 = vmatpush1.msra.mxu0 0.0
  %816 = vmatprep.subr.mxu0 0.0
  %817 = vmatpush1.msra.mxu0 0.0
  %818 = vmatprep.subr.mxu0 0.0
  %819 = vmatpush1.msra.mxu0 0.0
  %820 = vmatprep.mubr.f32.mxu0 0.0
  %821 = vmatmul.mubr.f32.gmra.mrb[0].mxu0 %v739
  %v822 = vpop.f32.mrb[0].mxu0
  %v823 = vadd.f32 0.0, %v822
  %v824 = vpop.f32.mrb[0].mxu0
  %v825 = vadd.f32 0.0, %v824
  %826 = vmatprep.mubr.f32.mxu0 0.0
  %827 = vmatmul.mubr.f32.gmra.mrb[0].mxu0 %v742
  %v828 = vpop.f32.mrb[0].mxu0
  %v829 = vadd.f32 0.0, %v828
  %v830 = vpop.f32.mrb[0].mxu0
  %v831 = vadd.f32 0.0, %v830
  %832 = vdwg.mxu0
  %833 = vmatprep.subr.mxu0 %v754
  %834 = vmatpush1.msra.mxu0 %v751
  %835 = vmatprep.subr.mxu0 0.0
  %836 = vmatpush1.msra.mxu0 0.0
  %837 = vmatprep.subr.mxu0 0.0
  %838 = vmatpush1.msra.mxu0 0.0
  %839 = vmatprep.subr.mxu0 0.0
  %840 = vmatpush1.msra.mxu0 0.0
  %841 = vmatprep.subr.mxu0 0.0
  %842 = vmatpush1.msra.mxu0 0.0
  %843 = vmatprep.subr.mxu0 0.0
  %844 = vmatpush1.msra.mxu0 0.0
  %845 = vmatprep.subr.mxu0 0.0
  %846 = vmatpush1.msra.mxu0 0.0
  %847 = vmatprep.subr.mxu0 0.0
  %848 = vmatpush1.msra.mxu0 0.0
  %849 = vmatprep.subr.mxu0 0.0
  %850 = vmatpush1.msra.mxu0 0.0
  %851 = vmatprep.subr.mxu0 0.0
  %852 = vmatpush1.msra.mxu0 0.0
  %853 = vmatprep.subr.mxu0 0.0
  %854 = vmatpush1.msra.mxu0 0.0
  %855 = vmatprep.subr.mxu0 0.0
  %856 = vmatpush1.msra.mxu0 0.0
  %857 = vmatprep.subr.mxu0 0.0
  %858 = vmatpush1.msra.mxu0 0.0
  %859 = vmatprep.subr.mxu0 0.0
  %860 = vmatpush1.msra.mxu0 0.0
  %861 = vmatprep.subr.mxu0 0.0
  %862 = vmatpush1.msra.mxu0 0.0
  %863 = vmatprep.subr.mxu0 0.0
  %864 = vmatpush1.msra.mxu0 0.0
  %865 = vmatprep.subr.mxu0 0.0
  %866 = vmatpush1.msra.mxu0 0.0
  %867 = vmatprep.subr.mxu0 0.0
  %868 = vmatpush1.msra.mxu0 0.0
  %869 = vmatprep.subr.mxu0 0.0
  %870 = vmatpush1.msra.mxu0 0.0
  %871 = vmatprep.subr.mxu0 0.0
  %872 = vmatpush1.msra.mxu0 0.0
  %873 = vmatprep.subr.mxu0 0.0
  %874 = vmatpush1.msra.mxu0 0.0
  %875 = vmatprep.subr.mxu0 0.0
  %876 = vmatpush1.msra.mxu0 0.0
  %877 = vmatprep.subr.mxu0 0.0
  %878 = vmatpush1.msra.mxu0 0.0
  %879 = vmatprep.subr.mxu0 0.0
  %880 = vmatpush1.msra.mxu0 0.0
  %881 = vmatprep.subr.mxu0 0.0
  %882 = vmatpush1.msra.mxu0 0.0
  %883 = vmatprep.subr.mxu0 0.0
  %884 = vmatpush1.msra.mxu0 0.0
  %885 = vmatprep.subr.mxu0 0.0
  %886 = vmatpush1.msra.mxu0 0.0
  %887 = vmatprep.subr.mxu0 0.0
  %888 = vmatpush1.msra.mxu0 0.0
  %889 = vmatprep.subr.mxu0 0.0
  %890 = vmatpush1.msra.mxu0 0.0
  %891 = vmatprep.subr.mxu0 0.0
  %892 = vmatpush1.msra.mxu0 0.0
  %893 = vmatprep.subr.mxu0 0.0
  %894 = vmatpush1.msra.mxu0 0.0
  %895 = vmatprep.subr.mxu0 0.0
  %896 = vmatpush1.msra.mxu0 0.0
  %897 = vmatprep.mubr.f32.mxu0 0.0
  %898 = vmatmul.mubr.f32.gmra.mrb[0].mxu0 %v739
  %v899 = vpop.f32.mrb[0].mxu0
  %v900 = vadd.f32 0.0, %v899
  %v901 = vpop.f32.mrb[0].mxu0
  %v902 = vadd.f32 0.0, %v901
  %903 = vmatprep.mubr.f32.mxu0 0.0
  %904 = vmatmul.mubr.f32.gmra.mrb[0].mxu0 %v742
  %v905 = vpop.f32.mrb[0].mxu0
  %v906 = vadd.f32 0.0, %v905
  %v907 = vpop.f32.mrb[0].mxu0
  %v908 = vadd.f32 0.0, %v907
  %909 = vdwg.mxu0
  %v910 = vadd.f32 %v687, %v823
  %v911 = vadd.f32 %v688, %v825
  %v912 = vadd.f32 %v689, %v900
  %v913 = vadd.f32 %v690, %v902
  %v914 = vadd.f32 %v691, %v829
  %v915 = vadd.f32 %v692, %v831
  %v916 = vadd.f32 %v693, %v906
  %v917 = vadd.f32 %v694, %v908
  %s918 = scalar_lea.vmem %s2, 64
  %v919 = vld [vmem:[%s918] sm:$0xff]
  %v920 = vld [vmem:[%s918 + $0x8] sm:$0xff]
  %s921 = scalar_lea.vmem %s1, 16
  %v922 = vld [vmem:[%s921] sm:$0xf]
  %v924 = vlaneseq
  %v925 = vshrl.u32 %v924, 7
  %v926 = vsub.s32 0, %v925
  %v927 = vrot.slane %v922, %v926
  %v928 = vlaneseq
  %v929 = vshrl.u32 %v928, 7
  %v930 = vsub.s32 1, %v929
  %v931 = vrot.slane %v922, %v930
  %v932 = vlaneseq
  %v933 = vshrl.u32 %v932, 7
  %v934 = vsub.s32 2, %v933
  %v935 = vrot.slane %v922, %v934
  %v936 = vlaneseq
  %v937 = vshrl.u32 %v936, 7
  %v938 = vsub.s32 3, %v937
  %v939 = vrot.slane %v922, %v938
  %v940 = vcombine.low %v927, %v931
  %v941 = vcombine.low %v935, %v939
  %v944 = vmul.f32 %v32, %v940
  %v945 = vmul.f32 %v33, %v941
  %v948 = vcombine.high %v944, %v944
  %v949 = vcombine.high %v945, %v945
  %v951 = vsel %vm126, %v919, 0
  %v954 = vsel %vm126, %v920, 0
  %v956 = vsel %vm133, %v944, 0
  %v958 = vsel %vm133, %v948, 0
  %v960 = vsel %vm133, %v945, 0
  %v962 = vsel %vm133, %v949, 0
  %964 = vmatprep.subr.mxu0 %v958
  %965 = vmatpush1.msra.mxu0 %v956
  %966 = vmatprep.subr.mxu0 0.0
  %967 = vmatpush1.msra.mxu0 0.0
  %968 = vmatprep.subr.mxu0 0.0
  %969 = vmatpush1.msra.mxu0 0.0
  %970 = vmatprep.subr.mxu0 0.0
  %971 = vmatpush1.msra.mxu0 0.0
  %972 = vmatprep.subr.mxu0 0.0
  %973 = vmatpush1.msra.mxu0 0.0
  %974 = vmatprep.subr.mxu0 0.0
  %975 = vmatpush1.msra.mxu0 0.0
  %976 = vmatprep.subr.mxu0 0.0
  %977 = vmatpush1.msra.mxu0 0.0
  %978 = vmatprep.subr.mxu0 0.0
  %979 = vmatpush1.msra.mxu0 0.0
  %980 = vmatprep.subr.mxu0 0.0
  %981 = vmatpush1.msra.mxu0 0.0
  %982 = vmatprep.subr.mxu0 0.0
  %983 = vmatpush1.msra.mxu0 0.0
  %984 = vmatprep.subr.mxu0 0.0
  %985 = vmatpush1.msra.mxu0 0.0
  %986 = vmatprep.subr.mxu0 0.0
  %987 = vmatpush1.msra.mxu0 0.0
  %988 = vmatprep.subr.mxu0 0.0
  %989 = vmatpush1.msra.mxu0 0.0
  %990 = vmatprep.subr.mxu0 0.0
  %991 = vmatpush1.msra.mxu0 0.0
  %992 = vmatprep.subr.mxu0 0.0
  %993 = vmatpush1.msra.mxu0 0.0
  %994 = vmatprep.subr.mxu0 0.0
  %995 = vmatpush1.msra.mxu0 0.0
  %996 = vmatprep.subr.mxu0 0.0
  %997 = vmatpush1.msra.mxu0 0.0
  %998 = vmatprep.subr.mxu0 0.0
  %999 = vmatpush1.msra.mxu0 0.0
  %1000 = vmatprep.subr.mxu0 0.0
  %1001 = vmatpush1.msra.mxu0 0.0
  %1002 = vmatprep.subr.mxu0 0.0
  %1003 = vmatpush1.msra.mxu0 0.0
  %1004 = vmatprep.subr.mxu0 0.0
  %1005 = vmatpush1.msra.mxu0 0.0
  %1006 = vmatprep.subr.mxu0 0.0
  %1007 = vmatpush1.msra.mxu0 0.0
  %1008 = vmatprep.subr.mxu0 0.0
  %1009 = vmatpush1.msra.mxu0 0.0
  %1010 = vmatprep.subr.mxu0 0.0
  %1011 = vmatpush1.msra.mxu0 0.0
  %1012 = vmatprep.subr.mxu0 0.0
  %1013 = vmatpush1.msra.mxu0 0.0
  %1014 = vmatprep.subr.mxu0 0.0
  %1015 = vmatpush1.msra.mxu0 0.0
  %1016 = vmatprep.subr.mxu0 0.0
  %1017 = vmatpush1.msra.mxu0 0.0
  %1018 = vmatprep.subr.mxu0 0.0
  %1019 = vmatpush1.msra.mxu0 0.0
  %1020 = vmatprep.subr.mxu0 0.0
  %1021 = vmatpush1.msra.mxu0 0.0
  %1022 = vmatprep.subr.mxu0 0.0
  %1023 = vmatpush1.msra.mxu0 0.0
  %1024 = vmatprep.subr.mxu0 0.0
  %1025 = vmatpush1.msra.mxu0 0.0
  %1026 = vmatprep.subr.mxu0 0.0
  %1027 = vmatpush1.msra.mxu0 0.0
  %1028 = vmatprep.mubr.f32.mxu0 0.0
  %1029 = vmatmul.mubr.f32.gmra.mrb[0].mxu0 %v951
  %v1030 = vpop.f32.mrb[0].mxu0
  %v1031 = vadd.f32 0.0, %v1030
  %v1032 = vpop.f32.mrb[0].mxu0
  %v1033 = vadd.f32 0.0, %v1032
  %1034 = vmatprep.mubr.f32.mxu0 0.0
  %1035 = vmatmul.mubr.f32.gmra.mrb[0].mxu0 %v954
  %v1036 = vpop.f32.mrb[0].mxu0
  %v1037 = vadd.f32 0.0, %v1036
  %v1038 = vpop.f32.mrb[0].mxu0
  %v1039 = vadd.f32 0.0, %v1038
  %1040 = vdwg.mxu0
  %1041 = vmatprep.subr.mxu0 %v962
  %1042 = vmatpush1.msra.mxu0 %v960
  %1043 = vmatprep.subr.mxu0 0.0
  %1044 = vmatpush1.msra.mxu0 0.0
  %1045 = vmatprep.subr.mxu0 0.0
  %1046 = vmatpush1.msra.mxu0 0.0
  %1047 = vmatprep.subr.mxu0 0.0
  %1048 = vmatpush1.msra.mxu0 0.0
  %1049 = vmatprep.subr.mxu0 0.0
  %1050 = vmatpush1.msra.mxu0 0.0
  %1051 = vmatprep.subr.mxu0 0.0
  %1052 = vmatpush1.msra.mxu0 0.0
  %1053 = vmatprep.subr.mxu0 0.0
  %1054 = vmatpush1.msra.mxu0 0.0
  %1055 = vmatprep.subr.mxu0 0.0
  %1056 = vmatpush1.msra.mxu0 0.0
  %1057 = vmatprep.subr.mxu0 0.0
  %1058 = vmatpush1.msra.mxu0 0.0
  %1059 = vmatprep.subr.mxu0 0.0
  %1060 = vmatpush1.msra.mxu0 0.0
  %1061 = vmatprep.subr.mxu0 0.0
  %1062 = vmatpush1.msra.mxu0 0.0
  %1063 = vmatprep.subr.mxu0 0.0
  %1064 = vmatpush1.msra.mxu0 0.0
  %1065 = vmatprep.subr.mxu0 0.0
  %1066 = vmatpush1.msra.mxu0 0.0
  %1067 = vmatprep.subr.mxu0 0.0
  %1068 = vmatpush1.msra.mxu0 0.0
  %1069 = vmatprep.subr.mxu0 0.0
  %1070 = vmatpush1.msra.mxu0 0.0
  %1071 = vmatprep.subr.mxu0 0.0
  %1072 = vmatpush1.msra.mxu0 0.0
  %1073 = vmatprep.subr.mxu0 0.0
  %1074 = vmatpush1.msra.mxu0 0.0
  %1075 = vmatprep.subr.mxu0 0.0
  %1076 = vmatpush1.msra.mxu0 0.0
  %1077 = vmatprep.subr.mxu0 0.0
  %1078 = vmatpush1.msra.mxu0 0.0
  %1079 = vmatprep.subr.mxu0 0.0
  %1080 = vmatpush1.msra.mxu0 0.0
  %1081 = vmatprep.subr.mxu0 0.0
  %1082 = vmatpush1.msra.mxu0 0.0
  %1083 = vmatprep.subr.mxu0 0.0
  %1084 = vmatpush1.msra.mxu0 0.0
  %1085 = vmatprep.subr.mxu0 0.0
  %1086 = vmatpush1.msra.mxu0 0.0
  %1087 = vmatprep.subr.mxu0 0.0
  %1088 = vmatpush1.msra.mxu0 0.0
  %1089 = vmatprep.subr.mxu0 0.0
  %1090 = vmatpush1.msra.mxu0 0.0
  %1091 = vmatprep.subr.mxu0 0.0
  %1092 = vmatpush1.msra.mxu0 0.0
  %1093 = vmatprep.subr.mxu0 0.0
  %1094 = vmatpush1.msra.mxu0 0.0
  %1095 = vmatprep.subr.mxu0 0.0
  %1096 = vmatpush1.msra.mxu0 0.0
  %1097 = vmatprep.subr.mxu0 0.0
  %1098 = vmatpush1.msra.mxu0 0.0
  %1099 = vmatprep.subr.mxu0 0.0
  %1100 = vmatpush1.msra.mxu0 0.0
  %1101 = vmatprep.subr.mxu0 0.0
  %1102 = vmatpush1.msra.mxu0 0.0
  %1103 = vmatprep.subr.mxu0 0.0
  %1104 = vmatpush1.msra.mxu0 0.0
  %1105 = vmatprep.mubr.f32.mxu0 0.0
  %1106 = vmatmul.mubr.f32.gmra.mrb[0].mxu0 %v951
  %v1107 = vpop.f32.mrb[0].mxu0
  %v1108 = vadd.f32 0.0, %v1107
  %v1109 = vpop.f32.mrb[0].mxu0
  %v1110 = vadd.f32 0.0, %v1109
  %1111 = vmatprep.mubr.f32.mxu0 0.0
  %1112 = vmatmul.mubr.f32.gmra.mrb[0].mxu0 %v954
  %v1113 = vpop.f32.mrb[0].mxu0
  %v1114 = vadd.f32 0.0, %v1113
  %v1115 = vpop.f32.mrb[0].mxu0
  %v1116 = vadd.f32 0.0, %v1115
  %1117 = vdwg.mxu0
  %v1118 = vadd.f32 %v910, %v1031
  %v1119 = vadd.f32 %v911, %v1033
  %v1120 = vadd.f32 %v912, %v1108
  %v1121 = vadd.f32 %v913, %v1110
  %v1122 = vadd.f32 %v914, %v1037
  %v1123 = vadd.f32 %v915, %v1039
  %v1124 = vadd.f32 %v916, %v1114
  %v1125 = vadd.f32 %v917, %v1116
  %1126 = vrot.lane.b32.xlu0 %v32, 127
  %v1127 = vpop.permute.xlu0 %1126
  %1128 = vrot.lane.b32.xlu0 %v36, 127
  %v1129 = vpop.permute.xlu0 %1128
  %1130 = vrot.lane.b32.xlu0 %v33, 127
  %v1131 = vpop.permute.xlu0 %1130
  %1132 = vrot.lane.b32.xlu0 %v37, 127
  %v1133 = vpop.permute.xlu0 %1132
  %vm1134 = vcmp.lt.s32.totalorder %v49, 127
  %v1135 = vsel %vm1134, %v1131, %v1133
  %v1136 = vsel %vm1134, %v1129, %v1131
  %v1137 = vsel %vm1134, %v1127, %v1129
  %v1138 = vsel %vm1134, %v1133, %v1127
  %s1139 = scalar_lea.vmem %s2, 80
  %v1140 = vld [vmem:[%s1139] sm:$0xff]
  %v1141 = vld [vmem:[%s1139 + $0x8] sm:$0xff]
  %s1142 = scalar_lea.vmem %s1, 20
  %v1143 = vld [vmem:[%s1142] sm:$0xf]
  %v1145 = vlaneseq
  %v1146 = vshrl.u32 %v1145, 7
  %v1147 = vsub.s32 0, %v1146
  %v1148 = vrot.slane %v1143, %v1147
  %v1149 = vlaneseq
  %v1150 = vshrl.u32 %v1149, 7
  %v1151 = vsub.s32 1, %v1150
  %v1152 = vrot.slane %v1143, %v1151
  %v1153 = vlaneseq
  %v1154 = vshrl.u32 %v1153, 7
  %v1155 = vsub.s32 2, %v1154
  %v1156 = vrot.slane %v1143, %v1155
  %v1157 = vlaneseq
  %v1158 = vshrl.u32 %v1157, 7
  %v1159 = vsub.s32 3, %v1158
  %v1160 = vrot.slane %v1143, %v1159
  %v1165 = vmul.f32 %v1137, %v1148
  %v1166 = vmul.f32 %v1136, %v1152
  %v1167 = vmul.f32 %v1135, %v1156
  %v1168 = vmul.f32 %v1138, %v1160
  %v1170 = vsel %vm126, %v1140, 0
  %v1173 = vsel %vm126, %v1141, 0
  %v1176 = vsel %vm133, %v1165, 0
  %v1179 = vsel %vm133, %v1166, 0
  %v1182 = vsel %vm133, %v1167, 0
  %v1185 = vsel %vm133, %v1168, 0
  %1187 = vmatprep.subr.mxu0 %v1179
  %1188 = vmatpush1.msra.mxu0 %v1176
  %1189 = vmatprep.subr.mxu0 0.0
  %1190 = vmatpush1.msra.mxu0 0.0
  %1191 = vmatprep.subr.mxu0 0.0
  %1192 = vmatpush1.msra.mxu0 0.0
  %1193 = vmatprep.subr.mxu0 0.0
  %1194 = vmatpush1.msra.mxu0 0.0
  %1195 = vmatprep.subr.mxu0 0.0
  %1196 = vmatpush1.msra.mxu0 0.0
  %1197 = vmatprep.subr.mxu0 0.0
  %1198 = vmatpush1.msra.mxu0 0.0
  %1199 = vmatprep.subr.mxu0 0.0
  %1200 = vmatpush1.msra.mxu0 0.0
  %1201 = vmatprep.subr.mxu0 0.0
  %1202 = vmatpush1.msra.mxu0 0.0
  %1203 = vmatprep.subr.mxu0 0.0
  %1204 = vmatpush1.msra.mxu0 0.0
  %1205 = vmatprep.subr.mxu0 0.0
  %1206 = vmatpush1.msra.mxu0 0.0
  %1207 = vmatprep.subr.mxu0 0.0
  %1208 = vmatpush1.msra.mxu0 0.0
  %1209 = vmatprep.subr.mxu0 0.0
  %1210 = vmatpush1.msra.mxu0 0.0
  %1211 = vmatprep.subr.mxu0 0.0
  %1212 = vmatpush1.msra.mxu0 0.0
  %1213 = vmatprep.subr.mxu0 0.0
  %1214 = vmatpush1.msra.mxu0 0.0
  %1215 = vmatprep.subr.mxu0 0.0
  %1216 = vmatpush1.msra.mxu0 0.0
  %1217 = vmatprep.subr.mxu0 0.0
  %1218 = vmatpush1.msra.mxu0 0.0
  %1219 = vmatprep.subr.mxu0 0.0
  %1220 = vmatpush1.msra.mxu0 0.0
  %1221 = vmatprep.subr.mxu0 0.0
  %1222 = vmatpush1.msra.mxu0 0.0
  %1223 = vmatprep.subr.mxu0 0.0
  %1224 = vmatpush1.msra.mxu0 0.0
  %1225 = vmatprep.subr.mxu0 0.0
  %1226 = vmatpush1.msra.mxu0 0.0
  %1227 = vmatprep.subr.mxu0 0.0
  %1228 = vmatpush1.msra.mxu0 0.0
  %1229 = vmatprep.subr.mxu0 0.0
  %1230 = vmatpush1.msra.mxu0 0.0
  %1231 = vmatprep.subr.mxu0 0.0
  %1232 = vmatpush1.msra.mxu0 0.0
  %1233 = vmatprep.subr.mxu0 0.0
  %1234 = vmatpush1.msra.mxu0 0.0
  %1235 = vmatprep.subr.mxu0 0.0
  %1236 = vmatpush1.msra.mxu0 0.0
  %1237 = vmatprep.subr.mxu0 0.0
  %1238 = vmatpush1.msra.mxu0 0.0
  %1239 = vmatprep.subr.mxu0 0.0
  %1240 = vmatpush1.msra.mxu0 0.0
  %1241 = vmatprep.subr.mxu0 0.0
  %1242 = vmatpush1.msra.mxu0 0.0
  %1243 = vmatprep.subr.mxu0 0.0
  %1244 = vmatpush1.msra.mxu0 0.0
  %1245 = vmatprep.subr.mxu0 0.0
  %1246 = vmatpush1.msra.mxu0 0.0
  %1247 = vmatprep.subr.mxu0 0.0
  %1248 = vmatpush1.msra.mxu0 0.0
  %1249 = vmatprep.subr.mxu0 0.0
  %1250 = vmatpush1.msra.mxu0 0.0
  %1251 = vmatprep.mubr.f32.mxu0 0.0
  %1252 = vmatmul.mubr.f32.gmra.mrb[0].mxu0 %v1170
  %v1253 = vpop.f32.mrb[0].mxu0
  %v1254 = vadd.f32 0.0, %v1253
  %v1255 = vpop.f32.mrb[0].mxu0
  %v1256 = vadd.f32 0.0, %v1255
  %1257 = vmatprep.mubr.f32.mxu0 0.0
  %1258 = vmatmul.mubr.f32.gmra.mrb[0].mxu0 %v1173
  %v1259 = vpop.f32.mrb[0].mxu0
  %v1260 = vadd.f32 0.0, %v1259
  %v1261 = vpop.f32.mrb[0].mxu0
  %v1262 = vadd.f32 0.0, %v1261
  %1263 = vdwg.mxu0
  %1264 = vmatprep.subr.mxu0 %v1185
  %1265 = vmatpush1.msra.mxu0 %v1182
  %1266 = vmatprep.subr.mxu0 0.0
  %1267 = vmatpush1.msra.mxu0 0.0
  %1268 = vmatprep.subr.mxu0 0.0
  %1269 = vmatpush1.msra.mxu0 0.0
  %1270 = vmatprep.subr.mxu0 0.0
  %1271 = vmatpush1.msra.mxu0 0.0
  %1272 = vmatprep.subr.mxu0 0.0
  %1273 = vmatpush1.msra.mxu0 0.0
  %1274 = vmatprep.subr.mxu0 0.0
  %1275 = vmatpush1.msra.mxu0 0.0
  %1276 = vmatprep.subr.mxu0 0.0
  %1277 = vmatpush1.msra.mxu0 0.0
  %1278 = vmatprep.subr.mxu0 0.0
  %1279 = vmatpush1.msra.mxu0 0.0
  %1280 = vmatprep.subr.mxu0 0.0
  %1281 = vmatpush1.msra.mxu0 0.0
  %1282 = vmatprep.subr.mxu0 0.0
  %1283 = vmatpush1.msra.mxu0 0.0
  %1284 = vmatprep.subr.mxu0 0.0
  %1285 = vmatpush1.msra.mxu0 0.0
  %1286 = vmatprep.subr.mxu0 0.0
  %1287 = vmatpush1.msra.mxu0 0.0
  %1288 = vmatprep.subr.mxu0 0.0
  %1289 = vmatpush1.msra.mxu0 0.0
  %1290 = vmatprep.subr.mxu0 0.0
  %1291 = vmatpush1.msra.mxu0 0.0
  %1292 = vmatprep.subr.mxu0 0.0
  %1293 = vmatpush1.msra.mxu0 0.0
  %1294 = vmatprep.subr.mxu0 0.0
  %1295 = vmatpush1.msra.mxu0 0.0
  %1296 = vmatprep.subr.mxu0 0.0
  %1297 = vmatpush1.msra.mxu0 0.0
  %1298 = vmatprep.subr.mxu0 0.0
  %1299 = vmatpush1.msra.mxu0 0.0
  %1300 = vmatprep.subr.mxu0 0.0
  %1301 = vmatpush1.msra.mxu0 0.0
  %1302 = vmatprep.subr.mxu0 0.0
  %1303 = vmatpush1.msra.mxu0 0.0
  %1304 = vmatprep.subr.mxu0 0.0
  %1305 = vmatpush1.msra.mxu0 0.0
  %1306 = vmatprep.subr.mxu0 0.0
  %1307 = vmatpush1.msra.mxu0 0.0
  %1308 = vmatprep.subr.mxu0 0.0
  %1309 = vmatpush1.msra.mxu0 0.0
  %1310 = vmatprep.subr.mxu0 0.0
  %1311 = vmatpush1.msra.mxu0 0.0
  %1312 = vmatprep.subr.mxu0 0.0
  %1313 = vmatpush1.msra.mxu0 0.0
  %1314 = vmatprep.subr.mxu0 0.0
  %1315 = vmatpush1.msra.mxu0 0.0
  %1316 = vmatprep.subr.mxu0 0.0
  %1317 = vmatpush1.msra.mxu0 0.0
  %1318 = vmatprep.subr.mxu0 0.0
  %1319 = vmatpush1.msra.mxu0 0.0
  %1320 = vmatprep.subr.mxu0 0.0
  %1321 = vmatpush1.msra.mxu0 0.0
  %1322 = vmatprep.subr.mxu0 0.0
  %1323 = vmatpush1.msra.mxu0 0.0
  %1324 = vmatprep.subr.mxu0 0.0
  %1325 = vmatpush1.msra.mxu0 0.0
  %1326 = vmatprep.subr.mxu0 0.0
  %1327 = vmatpush1.msra.mxu0 0.0
  %1328 = vmatprep.mubr.f32.mxu0 0.0
  %1329 = vmatmul.mubr.f32.gmra.mrb[0].mxu0 %v1170
  %v1330 = vpop.f32.mrb[0].mxu0
  %v1331 = vadd.f32 0.0, %v1330
  %v1332 = vpop.f32.mrb[0].mxu0
  %v1333 = vadd.f32 0.0, %v1332
  %1334 = vmatprep.mubr.f32.mxu0 0.0
  %1335 = vmatmul.mubr.f32.gmra.mrb[0].mxu0 %v1173
  %v1336 = vpop.f32.mrb[0].mxu0
  %v1337 = vadd.f32 0.0, %v1336
  %v1338 = vpop.f32.mrb[0].mxu0
  %v1339 = vadd.f32 0.0, %v1338
  %1340 = vdwg.mxu0
  %v1341 = vadd.f32 %v1118, %v1254
  %v1342 = vadd.f32 %v1119, %v1256
  %v1343 = vadd.f32 %v1120, %v1331
  %v1344 = vadd.f32 %v1121, %v1333
  %v1345 = vadd.f32 %v1122, %v1260
  %v1346 = vadd.f32 %v1123, %v1262
  %v1347 = vadd.f32 %v1124, %v1337
  %v1348 = vadd.f32 %v1125, %v1339
  %1349 = vrot.lane.b32.xlu0 %v32, 113
  %v1350 = vpop.permute.xlu0 %1349
  %1351 = vrot.lane.b32.xlu0 %v36, 113
  %v1352 = vpop.permute.xlu0 %1351
  %1353 = vrot.lane.b32.xlu0 %v33, 113
  %v1354 = vpop.permute.xlu0 %1353
  %1355 = vrot.lane.b32.xlu0 %v37, 113
  %v1356 = vpop.permute.xlu0 %1355
  %vm1357 = vcmp.lt.s32.totalorder %v49, 113
  %v1358 = vsel %vm1357, %v1354, %v1356
  %v1359 = vsel %vm1357, %v1352, %v1354
  %v1360 = vsel %vm1357, %v1350, %v1352
  %v1361 = vsel %vm1357, %v1356, %v1350
  %s1362 = scalar_lea.vmem %s2, 96
  %v1363 = vld [vmem:[%s1362] sm:$0xff]
  %v1364 = vld [vmem:[%s1362 + $0x8] sm:$0xff]
  %s1365 = scalar_lea.vmem %s1, 24
  %v1366 = vld [vmem:[%s1365] sm:$0xf]
  %v1368 = vlaneseq
  %v1369 = vshrl.u32 %v1368, 7
  %v1370 = vsub.s32 0, %v1369
  %v1371 = vrot.slane %v1366, %v1370
  %v1372 = vlaneseq
  %v1373 = vshrl.u32 %v1372, 7
  %v1374 = vsub.s32 1, %v1373
  %v1375 = vrot.slane %v1366, %v1374
  %v1376 = vlaneseq
  %v1377 = vshrl.u32 %v1376, 7
  %v1378 = vsub.s32 2, %v1377
  %v1379 = vrot.slane %v1366, %v1378
  %v1380 = vlaneseq
  %v1381 = vshrl.u32 %v1380, 7
  %v1382 = vsub.s32 3, %v1381
  %v1383 = vrot.slane %v1366, %v1382
  %v1388 = vmul.f32 %v1360, %v1371
  %v1389 = vmul.f32 %v1359, %v1375
  %v1390 = vmul.f32 %v1358, %v1379
  %v1391 = vmul.f32 %v1361, %v1383
  %v1393 = vsel %vm126, %v1363, 0
  %v1396 = vsel %vm126, %v1364, 0
  %v1399 = vsel %vm133, %v1388, 0
  %v1402 = vsel %vm133, %v1389, 0
  %v1405 = vsel %vm133, %v1390, 0
  %v1408 = vsel %vm133, %v1391, 0
  %1410 = vmatprep.subr.mxu0 %v1402
  %1411 = vmatpush1.msra.mxu0 %v1399
  %1412 = vmatprep.subr.mxu0 0.0
  %1413 = vmatpush1.msra.mxu0 0.0
  %1414 = vmatprep.subr.mxu0 0.0
  %1415 = vmatpush1.msra.mxu0 0.0
  %1416 = vmatprep.subr.mxu0 0.0
  %1417 = vmatpush1.msra.mxu0 0.0
  %1418 = vmatprep.subr.mxu0 0.0
  %1419 = vmatpush1.msra.mxu0 0.0
  %1420 = vmatprep.subr.mxu0 0.0
  %1421 = vmatpush1.msra.mxu0 0.0
  %1422 = vmatprep.subr.mxu0 0.0
  %1423 = vmatpush1.msra.mxu0 0.0
  %1424 = vmatprep.subr.mxu0 0.0
  %1425 = vmatpush1.msra.mxu0 0.0
  %1426 = vmatprep.subr.mxu0 0.0
  %1427 = vmatpush1.msra.mxu0 0.0
  %1428 = vmatprep.subr.mxu0 0.0
  %1429 = vmatpush1.msra.mxu0 0.0
  %1430 = vmatprep.subr.mxu0 0.0
  %1431 = vmatpush1.msra.mxu0 0.0
  %1432 = vmatprep.subr.mxu0 0.0
  %1433 = vmatpush1.msra.mxu0 0.0
  %1434 = vmatprep.subr.mxu0 0.0
  %1435 = vmatpush1.msra.mxu0 0.0
  %1436 = vmatprep.subr.mxu0 0.0
  %1437 = vmatpush1.msra.mxu0 0.0
  %1438 = vmatprep.subr.mxu0 0.0
  %1439 = vmatpush1.msra.mxu0 0.0
  %1440 = vmatprep.subr.mxu0 0.0
  %1441 = vmatpush1.msra.mxu0 0.0
  %1442 = vmatprep.subr.mxu0 0.0
  %1443 = vmatpush1.msra.mxu0 0.0
  %1444 = vmatprep.subr.mxu0 0.0
  %1445 = vmatpush1.msra.mxu0 0.0
  %1446 = vmatprep.subr.mxu0 0.0
  %1447 = vmatpush1.msra.mxu0 0.0
  %1448 = vmatprep.subr.mxu0 0.0
  %1449 = vmatpush1.msra.mxu0 0.0
  %1450 = vmatprep.subr.mxu0 0.0
  %1451 = vmatpush1.msra.mxu0 0.0
  %1452 = vmatprep.subr.mxu0 0.0
  %1453 = vmatpush1.msra.mxu0 0.0
  %1454 = vmatprep.subr.mxu0 0.0
  %1455 = vmatpush1.msra.mxu0 0.0
  %1456 = vmatprep.subr.mxu0 0.0
  %1457 = vmatpush1.msra.mxu0 0.0
  %1458 = vmatprep.subr.mxu0 0.0
  %1459 = vmatpush1.msra.mxu0 0.0
  %1460 = vmatprep.subr.mxu0 0.0
  %1461 = vmatpush1.msra.mxu0 0.0
  %1462 = vmatprep.subr.mxu0 0.0
  %1463 = vmatpush1.msra.mxu0 0.0
  %1464 = vmatprep.subr.mxu0 0.0
  %1465 = vmatpush1.msra.mxu0 0.0
  %1466 = vmatprep.subr.mxu0 0.0
  %1467 = vmatpush1.msra.mxu0 0.0
  %1468 = vmatprep.subr.mxu0 0.0
  %1469 = vmatpush1.msra.mxu0 0.0
  %1470 = vmatprep.subr.mxu0 0.0
  %1471 = vmatpush1.msra.mxu0 0.0
  %1472 = vmatprep.subr.mxu0 0.0
  %1473 = vmatpush1.msra.mxu0 0.0
  %1474 = vmatprep.mubr.f32.mxu0 0.0
  %1475 = vmatmul.mubr.f32.gmra.mrb[0].mxu0 %v1393
  %v1476 = vpop.f32.mrb[0].mxu0
  %v1477 = vadd.f32 0.0, %v1476
  %v1478 = vpop.f32.mrb[0].mxu0
  %v1479 = vadd.f32 0.0, %v1478
  %1480 = vmatprep.mubr.f32.mxu0 0.0
  %1481 = vmatmul.mubr.f32.gmra.mrb[0].mxu0 %v1396
  %v1482 = vpop.f32.mrb[0].mxu0
  %v1483 = vadd.f32 0.0, %v1482
  %v1484 = vpop.f32.mrb[0].mxu0
  %v1485 = vadd.f32 0.0, %v1484
  %1486 = vdwg.mxu0
  %1487 = vmatprep.subr.mxu0 %v1408
  %1488 = vmatpush1.msra.mxu0 %v1405
  %1489 = vmatprep.subr.mxu0 0.0
  %1490 = vmatpush1.msra.mxu0 0.0
  %1491 = vmatprep.subr.mxu0 0.0
  %1492 = vmatpush1.msra.mxu0 0.0
  %1493 = vmatprep.subr.mxu0 0.0
  %1494 = vmatpush1.msra.mxu0 0.0
  %1495 = vmatprep.subr.mxu0 0.0
  %1496 = vmatpush1.msra.mxu0 0.0
  %1497 = vmatprep.subr.mxu0 0.0
  %1498 = vmatpush1.msra.mxu0 0.0
  %1499 = vmatprep.subr.mxu0 0.0
  %1500 = vmatpush1.msra.mxu0 0.0
  %1501 = vmatprep.subr.mxu0 0.0
  %1502 = vmatpush1.msra.mxu0 0.0
  %1503 = vmatprep.subr.mxu0 0.0
  %1504 = vmatpush1.msra.mxu0 0.0
  %1505 = vmatprep.subr.mxu0 0.0
  %1506 = vmatpush1.msra.mxu0 0.0
  %1507 = vmatprep.subr.mxu0 0.0
  %1508 = vmatpush1.msra.mxu0 0.0
  %1509 = vmatprep.subr.mxu0 0.0
  %1510 = vmatpush1.msra.mxu0 0.0
  %1511 = vmatprep.subr.mxu0 0.0
  %1512 = vmatpush1.msra.mxu0 0.0
  %1513 = vmatprep.subr.mxu0 0.0
  %1514 = vmatpush1.msra.mxu0 0.0
  %1515 = vmatprep.subr.mxu0 0.0
  %1516 = vmatpush1.msra.mxu0 0.0
  %1517 = vmatprep.subr.mxu0 0.0
  %1518 = vmatpush1.msra.mxu0 0.0
  %1519 = vmatprep.subr.mxu0 0.0
  %1520 = vmatpush1.msra.mxu0 0.0
  %1521 = vmatprep.subr.mxu0 0.0
  %1522 = vmatpush1.msra.mxu0 0.0
  %1523 = vmatprep.subr.mxu0 0.0
  %1524 = vmatpush1.msra.mxu0 0.0
  %1525 = vmatprep.subr.mxu0 0.0
  %1526 = vmatpush1.msra.mxu0 0.0
  %1527 = vmatprep.subr.mxu0 0.0
  %1528 = vmatpush1.msra.mxu0 0.0
  %1529 = vmatprep.subr.mxu0 0.0
  %1530 = vmatpush1.msra.mxu0 0.0
  %1531 = vmatprep.subr.mxu0 0.0
  %1532 = vmatpush1.msra.mxu0 0.0
  %1533 = vmatprep.subr.mxu0 0.0
  %1534 = vmatpush1.msra.mxu0 0.0
  %1535 = vmatprep.subr.mxu0 0.0
  %1536 = vmatpush1.msra.mxu0 0.0
  %1537 = vmatprep.subr.mxu0 0.0
  %1538 = vmatpush1.msra.mxu0 0.0
  %1539 = vmatprep.subr.mxu0 0.0
  %1540 = vmatpush1.msra.mxu0 0.0
  %1541 = vmatprep.subr.mxu0 0.0
  %1542 = vmatpush1.msra.mxu0 0.0
  %1543 = vmatprep.subr.mxu0 0.0
  %1544 = vmatpush1.msra.mxu0 0.0
  %1545 = vmatprep.subr.mxu0 0.0
  %1546 = vmatpush1.msra.mxu0 0.0
  %1547 = vmatprep.subr.mxu0 0.0
  %1548 = vmatpush1.msra.mxu0 0.0
  %1549 = vmatprep.subr.mxu0 0.0
  %1550 = vmatpush1.msra.mxu0 0.0
  %1551 = vmatprep.mubr.f32.mxu0 0.0
  %1552 = vmatmul.mubr.f32.gmra.mrb[0].mxu0 %v1393
  %v1553 = vpop.f32.mrb[0].mxu0
  %v1554 = vadd.f32 0.0, %v1553
  %v1555 = vpop.f32.mrb[0].mxu0
  %v1556 = vadd.f32 0.0, %v1555
  %1557 = vmatprep.mubr.f32.mxu0 0.0
  %1558 = vmatmul.mubr.f32.gmra.mrb[0].mxu0 %v1396
  %v1559 = vpop.f32.mrb[0].mxu0
  %v1560 = vadd.f32 0.0, %v1559
  %v1561 = vpop.f32.mrb[0].mxu0
  %v1562 = vadd.f32 0.0, %v1561
  %1563 = vdwg.mxu0
  %v1564 = vadd.f32 %v1341, %v1477
  %v1565 = vadd.f32 %v1342, %v1479
  %v1566 = vadd.f32 %v1343, %v1554
  %v1567 = vadd.f32 %v1344, %v1556
  %v1568 = vadd.f32 %v1345, %v1483
  %v1569 = vadd.f32 %v1346, %v1485
  %v1570 = vadd.f32 %v1347, %v1560
  %v1571 = vadd.f32 %v1348, %v1562
  %1572 = vrot.lane.b32.xlu0 %v32, 112
  %v1573 = vpop.permute.xlu0 %1572
  %1574 = vrot.lane.b32.xlu0 %v36, 112
  %v1575 = vpop.permute.xlu0 %1574
  %1576 = vrot.lane.b32.xlu0 %v33, 112
  %v1577 = vpop.permute.xlu0 %1576
  %1578 = vrot.lane.b32.xlu0 %v37, 112
  %v1579 = vpop.permute.xlu0 %1578
  %vm1580 = vcmp.lt.s32.totalorder %v49, 112
  %v1581 = vsel %vm1580, %v1577, %v1579
  %v1582 = vsel %vm1580, %v1575, %v1577
  %v1583 = vsel %vm1580, %v1573, %v1575
  %v1584 = vsel %vm1580, %v1579, %v1573
  %s1585 = scalar_lea.vmem %s2, 112
  %v1586 = vld [vmem:[%s1585] sm:$0xff]
  %v1587 = vld [vmem:[%s1585 + $0x8] sm:$0xff]
  %s1588 = scalar_lea.vmem %s1, 28
  %v1589 = vld [vmem:[%s1588] sm:$0xf]
  %v1591 = vlaneseq
  %v1592 = vshrl.u32 %v1591, 7
  %v1593 = vsub.s32 0, %v1592
  %v1594 = vrot.slane %v1589, %v1593
  %v1595 = vlaneseq
  %v1596 = vshrl.u32 %v1595, 7
  %v1597 = vsub.s32 1, %v1596
  %v1598 = vrot.slane %v1589, %v1597
  %v1599 = vlaneseq
  %v1600 = vshrl.u32 %v1599, 7
  %v1601 = vsub.s32 2, %v1600
  %v1602 = vrot.slane %v1589, %v1601
  %v1603 = vlaneseq
  %v1604 = vshrl.u32 %v1603, 7
  %v1605 = vsub.s32 3, %v1604
  %v1606 = vrot.slane %v1589, %v1605
  %v1611 = vmul.f32 %v1583, %v1594
  %v1612 = vmul.f32 %v1582, %v1598
  %v1613 = vmul.f32 %v1581, %v1602
  %v1614 = vmul.f32 %v1584, %v1606
  %v1616 = vsel %vm126, %v1586, 0
  %v1619 = vsel %vm126, %v1587, 0
  %v1622 = vsel %vm133, %v1611, 0
  %v1625 = vsel %vm133, %v1612, 0
  %v1628 = vsel %vm133, %v1613, 0
  %v1631 = vsel %vm133, %v1614, 0
  %1633 = vmatprep.subr.mxu0 %v1625
  %1634 = vmatpush1.msra.mxu0 %v1622
  %1635 = vmatprep.subr.mxu0 0.0
  %1636 = vmatpush1.msra.mxu0 0.0
  %1637 = vmatprep.subr.mxu0 0.0
  %1638 = vmatpush1.msra.mxu0 0.0
  %1639 = vmatprep.subr.mxu0 0.0
  %1640 = vmatpush1.msra.mxu0 0.0
  %1641 = vmatprep.subr.mxu0 0.0
  %1642 = vmatpush1.msra.mxu0 0.0
  %1643 = vmatprep.subr.mxu0 0.0
  %1644 = vmatpush1.msra.mxu0 0.0
  %1645 = vmatprep.subr.mxu0 0.0
  %1646 = vmatpush1.msra.mxu0 0.0
  %1647 = vmatprep.subr.mxu0 0.0
  %1648 = vmatpush1.msra.mxu0 0.0
  %1649 = vmatprep.subr.mxu0 0.0
  %1650 = vmatpush1.msra.mxu0 0.0
  %1651 = vmatprep.subr.mxu0 0.0
  %1652 = vmatpush1.msra.mxu0 0.0
  %1653 = vmatprep.subr.mxu0 0.0
  %1654 = vmatpush1.msra.mxu0 0.0
  %1655 = vmatprep.subr.mxu0 0.0
  %1656 = vmatpush1.msra.mxu0 0.0
  %1657 = vmatprep.subr.mxu0 0.0
  %1658 = vmatpush1.msra.mxu0 0.0
  %1659 = vmatprep.subr.mxu0 0.0
  %1660 = vmatpush1.msra.mxu0 0.0
  %1661 = vmatprep.subr.mxu0 0.0
  %1662 = vmatpush1.msra.mxu0 0.0
  %1663 = vmatprep.subr.mxu0 0.0
  %1664 = vmatpush1.msra.mxu0 0.0
  %1665 = vmatprep.subr.mxu0 0.0
  %1666 = vmatpush1.msra.mxu0 0.0
  %1667 = vmatprep.subr.mxu0 0.0
  %1668 = vmatpush1.msra.mxu0 0.0
  %1669 = vmatprep.subr.mxu0 0.0
  %1670 = vmatpush1.msra.mxu0 0.0
  %1671 = vmatprep.subr.mxu0 0.0
  %1672 = vmatpush1.msra.mxu0 0.0
  %1673 = vmatprep.subr.mxu0 0.0
  %1674 = vmatpush1.msra.mxu0 0.0
  %1675 = vmatprep.subr.mxu0 0.0
  %1676 = vmatpush1.msra.mxu0 0.0
  %1677 = vmatprep.subr.mxu0 0.0
  %1678 = vmatpush1.msra.mxu0 0.0
  %1679 = vmatprep.subr.mxu0 0.0
  %1680 = vmatpush1.msra.mxu0 0.0
  %1681 = vmatprep.subr.mxu0 0.0
  %1682 = vmatpush1.msra.mxu0 0.0
  %1683 = vmatprep.subr.mxu0 0.0
  %1684 = vmatpush1.msra.mxu0 0.0
  %1685 = vmatprep.subr.mxu0 0.0
  %1686 = vmatpush1.msra.mxu0 0.0
  %1687 = vmatprep.subr.mxu0 0.0
  %1688 = vmatpush1.msra.mxu0 0.0
  %1689 = vmatprep.subr.mxu0 0.0
  %1690 = vmatpush1.msra.mxu0 0.0
  %1691 = vmatprep.subr.mxu0 0.0
  %1692 = vmatpush1.msra.mxu0 0.0
  %1693 = vmatprep.subr.mxu0 0.0
  %1694 = vmatpush1.msra.mxu0 0.0
  %1695 = vmatprep.subr.mxu0 0.0
  %1696 = vmatpush1.msra.mxu0 0.0
  %1697 = vmatprep.mubr.f32.mxu0 0.0
  %1698 = vmatmul.mubr.f32.gmra.mrb[0].mxu0 %v1616
  %v1699 = vpop.f32.mrb[0].mxu0
  %v1700 = vadd.f32 0.0, %v1699
  %v1701 = vpop.f32.mrb[0].mxu0
  %v1702 = vadd.f32 0.0, %v1701
  %1703 = vmatprep.mubr.f32.mxu0 0.0
  %1704 = vmatmul.mubr.f32.gmra.mrb[0].mxu0 %v1619
  %v1705 = vpop.f32.mrb[0].mxu0
  %v1706 = vadd.f32 0.0, %v1705
  %v1707 = vpop.f32.mrb[0].mxu0
  %v1708 = vadd.f32 0.0, %v1707
  %1709 = vdwg.mxu0
  %1710 = vmatprep.subr.mxu0 %v1631
  %1711 = vmatpush1.msra.mxu0 %v1628
  %1712 = vmatprep.subr.mxu0 0.0
  %1713 = vmatpush1.msra.mxu0 0.0
  %1714 = vmatprep.subr.mxu0 0.0
  %1715 = vmatpush1.msra.mxu0 0.0
  %1716 = vmatprep.subr.mxu0 0.0
  %1717 = vmatpush1.msra.mxu0 0.0
  %1718 = vmatprep.subr.mxu0 0.0
  %1719 = vmatpush1.msra.mxu0 0.0
  %1720 = vmatprep.subr.mxu0 0.0
  %1721 = vmatpush1.msra.mxu0 0.0
  %1722 = vmatprep.subr.mxu0 0.0
  %1723 = vmatpush1.msra.mxu0 0.0
  %1724 = vmatprep.subr.mxu0 0.0
  %1725 = vmatpush1.msra.mxu0 0.0
  %1726 = vmatprep.subr.mxu0 0.0
  %1727 = vmatpush1.msra.mxu0 0.0
  %1728 = vmatprep.subr.mxu0 0.0
  %1729 = vmatpush1.msra.mxu0 0.0
  %1730 = vmatprep.subr.mxu0 0.0
  %1731 = vmatpush1.msra.mxu0 0.0
  %1732 = vmatprep.subr.mxu0 0.0
  %1733 = vmatpush1.msra.mxu0 0.0
  %1734 = vmatprep.subr.mxu0 0.0
  %1735 = vmatpush1.msra.mxu0 0.0
  %1736 = vmatprep.subr.mxu0 0.0
  %1737 = vmatpush1.msra.mxu0 0.0
  %1738 = vmatprep.subr.mxu0 0.0
  %1739 = vmatpush1.msra.mxu0 0.0
  %1740 = vmatprep.subr.mxu0 0.0
  %1741 = vmatpush1.msra.mxu0 0.0
  %1742 = vmatprep.subr.mxu0 0.0
  %1743 = vmatpush1.msra.mxu0 0.0
  %1744 = vmatprep.subr.mxu0 0.0
  %1745 = vmatpush1.msra.mxu0 0.0
  %1746 = vmatprep.subr.mxu0 0.0
  %1747 = vmatpush1.msra.mxu0 0.0
  %1748 = vmatprep.subr.mxu0 0.0
  %1749 = vmatpush1.msra.mxu0 0.0
  %1750 = vmatprep.subr.mxu0 0.0
  %1751 = vmatpush1.msra.mxu0 0.0
  %1752 = vmatprep.subr.mxu0 0.0
  %1753 = vmatpush1.msra.mxu0 0.0
  %1754 = vmatprep.subr.mxu0 0.0
  %1755 = vmatpush1.msra.mxu0 0.0
  %1756 = vmatprep.subr.mxu0 0.0
  %1757 = vmatpush1.msra.mxu0 0.0
  %1758 = vmatprep.subr.mxu0 0.0
  %1759 = vmatpush1.msra.mxu0 0.0
  %1760 = vmatprep.subr.mxu0 0.0
  %1761 = vmatpush1.msra.mxu0 0.0
  %1762 = vmatprep.subr.mxu0 0.0
  %1763 = vmatpush1.msra.mxu0 0.0
  %1764 = vmatprep.subr.mxu0 0.0
  %1765 = vmatpush1.msra.mxu0 0.0
  %1766 = vmatprep.subr.mxu0 0.0
  %1767 = vmatpush1.msra.mxu0 0.0
  %1768 = vmatprep.subr.mxu0 0.0
  %1769 = vmatpush1.msra.mxu0 0.0
  %1770 = vmatprep.subr.mxu0 0.0
  %1771 = vmatpush1.msra.mxu0 0.0
  %1772 = vmatprep.subr.mxu0 0.0
  %1773 = vmatpush1.msra.mxu0 0.0
  %1774 = vmatprep.mubr.f32.mxu0 0.0
  %1775 = vmatmul.mubr.f32.gmra.mrb[0].mxu0 %v1616
  %v1776 = vpop.f32.mrb[0].mxu0
  %v1777 = vadd.f32 0.0, %v1776
  %v1778 = vpop.f32.mrb[0].mxu0
  %v1779 = vadd.f32 0.0, %v1778
  %1780 = vmatprep.mubr.f32.mxu0 0.0
  %1781 = vmatmul.mubr.f32.gmra.mrb[0].mxu0 %v1619
  %v1782 = vpop.f32.mrb[0].mxu0
  %v1783 = vadd.f32 0.0, %v1782
  %v1784 = vpop.f32.mrb[0].mxu0
  %v1785 = vadd.f32 0.0, %v1784
  %1786 = vdwg.mxu0
  %v1787 = vadd.f32 %v1564, %v1700
  %v1788 = vadd.f32 %v1565, %v1702
  %v1789 = vadd.f32 %v1566, %v1777
  %v1790 = vadd.f32 %v1567, %v1779
  %v1791 = vadd.f32 %v1568, %v1706
  %v1792 = vadd.f32 %v1569, %v1708
  %v1793 = vadd.f32 %v1570, %v1783
  %v1794 = vadd.f32 %v1571, %v1785
  %1795 = vrot.lane.b32.xlu0 %v32, 111
  %v1796 = vpop.permute.xlu0 %1795
  %1797 = vrot.lane.b32.xlu0 %v36, 111
  %v1798 = vpop.permute.xlu0 %1797
  %1799 = vrot.lane.b32.xlu0 %v33, 111
  %v1800 = vpop.permute.xlu0 %1799
  %1801 = vrot.lane.b32.xlu0 %v37, 111
  %v1802 = vpop.permute.xlu0 %1801
  %vm1803 = vcmp.lt.s32.totalorder %v49, 111
  %v1804 = vsel %vm1803, %v1800, %v1802
  %v1805 = vsel %vm1803, %v1798, %v1800
  %v1806 = vsel %vm1803, %v1796, %v1798
  %v1807 = vsel %vm1803, %v1802, %v1796
  %s1808 = scalar_lea.vmem %s2, 128
  %v1809 = vld [vmem:[%s1808] sm:$0xff]
  %v1810 = vld [vmem:[%s1808 + $0x8] sm:$0xff]
  %s1811 = scalar_lea.vmem %s1, 32
  %v1812 = vld [vmem:[%s1811] sm:$0xf]
  %v1814 = vlaneseq
  %v1815 = vshrl.u32 %v1814, 7
  %v1816 = vsub.s32 0, %v1815
  %v1817 = vrot.slane %v1812, %v1816
  %v1818 = vlaneseq
  %v1819 = vshrl.u32 %v1818, 7
  %v1820 = vsub.s32 1, %v1819
  %v1821 = vrot.slane %v1812, %v1820
  %v1822 = vlaneseq
  %v1823 = vshrl.u32 %v1822, 7
  %v1824 = vsub.s32 2, %v1823
  %v1825 = vrot.slane %v1812, %v1824
  %v1826 = vlaneseq
  %v1827 = vshrl.u32 %v1826, 7
  %v1828 = vsub.s32 3, %v1827
  %v1829 = vrot.slane %v1812, %v1828
  %v1834 = vmul.f32 %v1806, %v1817
  %v1835 = vmul.f32 %v1805, %v1821
  %v1836 = vmul.f32 %v1804, %v1825
  %v1837 = vmul.f32 %v1807, %v1829
  %v1839 = vsel %vm126, %v1809, 0
  %v1842 = vsel %vm126, %v1810, 0
  %v1845 = vsel %vm133, %v1834, 0
  %v1848 = vsel %vm133, %v1835, 0
  %v1851 = vsel %vm133, %v1836, 0
  %v1854 = vsel %vm133, %v1837, 0
  %1856 = vmatprep.subr.mxu0 %v1848
  %1857 = vmatpush1.msra.mxu0 %v1845
  %1858 = vmatprep.subr.mxu0 0.0
  %1859 = vmatpush1.msra.mxu0 0.0
  %1860 = vmatprep.subr.mxu0 0.0
  %1861 = vmatpush1.msra.mxu0 0.0
  %1862 = vmatprep.subr.mxu0 0.0
  %1863 = vmatpush1.msra.mxu0 0.0
  %1864 = vmatprep.subr.mxu0 0.0
  %1865 = vmatpush1.msra.mxu0 0.0
  %1866 = vmatprep.subr.mxu0 0.0
  %1867 = vmatpush1.msra.mxu0 0.0
  %1868 = vmatprep.subr.mxu0 0.0
  %1869 = vmatpush1.msra.mxu0 0.0
  %1870 = vmatprep.subr.mxu0 0.0
  %1871 = vmatpush1.msra.mxu0 0.0
  %1872 = vmatprep.subr.mxu0 0.0
  %1873 = vmatpush1.msra.mxu0 0.0
  %1874 = vmatprep.subr.mxu0 0.0
  %1875 = vmatpush1.msra.mxu0 0.0
  %1876 = vmatprep.subr.mxu0 0.0
  %1877 = vmatpush1.msra.mxu0 0.0
  %1878 = vmatprep.subr.mxu0 0.0
  %1879 = vmatpush1.msra.mxu0 0.0
  %1880 = vmatprep.subr.mxu0 0.0
  %1881 = vmatpush1.msra.mxu0 0.0
  %1882 = vmatprep.subr.mxu0 0.0
  %1883 = vmatpush1.msra.mxu0 0.0
  %1884 = vmatprep.subr.mxu0 0.0
  %1885 = vmatpush1.msra.mxu0 0.0
  %1886 = vmatprep.subr.mxu0 0.0
  %1887 = vmatpush1.msra.mxu0 0.0
  %1888 = vmatprep.subr.mxu0 0.0
  %1889 = vmatpush1.msra.mxu0 0.0
  %1890 = vmatprep.subr.mxu0 0.0
  %1891 = vmatpush1.msra.mxu0 0.0
  %1892 = vmatprep.subr.mxu0 0.0
  %1893 = vmatpush1.msra.mxu0 0.0
  %1894 = vmatprep.subr.mxu0 0.0
  %1895 = vmatpush1.msra.mxu0 0.0
  %1896 = vmatprep.subr.mxu0 0.0
  %1897 = vmatpush1.msra.mxu0 0.0
  %1898 = vmatprep.subr.mxu0 0.0
  %1899 = vmatpush1.msra.mxu0 0.0
  %1900 = vmatprep.subr.mxu0 0.0
  %1901 = vmatpush1.msra.mxu0 0.0
  %1902 = vmatprep.subr.mxu0 0.0
  %1903 = vmatpush1.msra.mxu0 0.0
  %1904 = vmatprep.subr.mxu0 0.0
  %1905 = vmatpush1.msra.mxu0 0.0
  %1906 = vmatprep.subr.mxu0 0.0
  %1907 = vmatpush1.msra.mxu0 0.0
  %1908 = vmatprep.subr.mxu0 0.0
  %1909 = vmatpush1.msra.mxu0 0.0
  %1910 = vmatprep.subr.mxu0 0.0
  %1911 = vmatpush1.msra.mxu0 0.0
  %1912 = vmatprep.subr.mxu0 0.0
  %1913 = vmatpush1.msra.mxu0 0.0
  %1914 = vmatprep.subr.mxu0 0.0
  %1915 = vmatpush1.msra.mxu0 0.0
  %1916 = vmatprep.subr.mxu0 0.0
  %1917 = vmatpush1.msra.mxu0 0.0
  %1918 = vmatprep.subr.mxu0 0.0
  %1919 = vmatpush1.msra.mxu0 0.0
  %1920 = vmatprep.mubr.f32.mxu0 0.0
  %1921 = vmatmul.mubr.f32.gmra.mrb[0].mxu0 %v1839
  %v1922 = vpop.f32.mrb[0].mxu0
  %v1923 = vadd.f32 0.0, %v1922
  %v1924 = vpop.f32.mrb[0].mxu0
  %v1925 = vadd.f32 0.0, %v1924
  %1926 = vmatprep.mubr.f32.mxu0 0.0
  %1927 = vmatmul.mubr.f32.gmra.mrb[0].mxu0 %v1842
  %v1928 = vpop.f32.mrb[0].mxu0
  %v1929 = vadd.f32 0.0, %v1928
  %v1930 = vpop.f32.mrb[0].mxu0
  %v1931 = vadd.f32 0.0, %v1930
  %1932 = vdwg.mxu0
  %1933 = vmatprep.subr.mxu0 %v1854
  %1934 = vmatpush1.msra.mxu0 %v1851
  %1935 = vmatprep.subr.mxu0 0.0
  %1936 = vmatpush1.msra.mxu0 0.0
  %1937 = vmatprep.subr.mxu0 0.0
  %1938 = vmatpush1.msra.mxu0 0.0
  %1939 = vmatprep.subr.mxu0 0.0
  %1940 = vmatpush1.msra.mxu0 0.0
  %1941 = vmatprep.subr.mxu0 0.0
  %1942 = vmatpush1.msra.mxu0 0.0
  %1943 = vmatprep.subr.mxu0 0.0
  %1944 = vmatpush1.msra.mxu0 0.0
  %1945 = vmatprep.subr.mxu0 0.0
  %1946 = vmatpush1.msra.mxu0 0.0
  %1947 = vmatprep.subr.mxu0 0.0
  %1948 = vmatpush1.msra.mxu0 0.0
  %1949 = vmatprep.subr.mxu0 0.0
  %1950 = vmatpush1.msra.mxu0 0.0
  %1951 = vmatprep.subr.mxu0 0.0
  %1952 = vmatpush1.msra.mxu0 0.0
  %1953 = vmatprep.subr.mxu0 0.0
  %1954 = vmatpush1.msra.mxu0 0.0
  %1955 = vmatprep.subr.mxu0 0.0
  %1956 = vmatpush1.msra.mxu0 0.0
  %1957 = vmatprep.subr.mxu0 0.0
  %1958 = vmatpush1.msra.mxu0 0.0
  %1959 = vmatprep.subr.mxu0 0.0
  %1960 = vmatpush1.msra.mxu0 0.0
  %1961 = vmatprep.subr.mxu0 0.0
  %1962 = vmatpush1.msra.mxu0 0.0
  %1963 = vmatprep.subr.mxu0 0.0
  %1964 = vmatpush1.msra.mxu0 0.0
  %1965 = vmatprep.subr.mxu0 0.0
  %1966 = vmatpush1.msra.mxu0 0.0
  %1967 = vmatprep.subr.mxu0 0.0
  %1968 = vmatpush1.msra.mxu0 0.0
  %1969 = vmatprep.subr.mxu0 0.0
  %1970 = vmatpush1.msra.mxu0 0.0
  %1971 = vmatprep.subr.mxu0 0.0
  %1972 = vmatpush1.msra.mxu0 0.0
  %1973 = vmatprep.subr.mxu0 0.0
  %1974 = vmatpush1.msra.mxu0 0.0
  %1975 = vmatprep.subr.mxu0 0.0
  %1976 = vmatpush1.msra.mxu0 0.0
  %1977 = vmatprep.subr.mxu0 0.0
  %1978 = vmatpush1.msra.mxu0 0.0
  %1979 = vmatprep.subr.mxu0 0.0
  %1980 = vmatpush1.msra.mxu0 0.0
  %1981 = vmatprep.subr.mxu0 0.0
  %1982 = vmatpush1.msra.mxu0 0.0
  %1983 = vmatprep.subr.mxu0 0.0
  %1984 = vmatpush1.msra.mxu0 0.0
  %1985 = vmatprep.subr.mxu0 0.0
  %1986 = vmatpush1.msra.mxu0 0.0
  %1987 = vmatprep.subr.mxu0 0.0
  %1988 = vmatpush1.msra.mxu0 0.0
  %1989 = vmatprep.subr.mxu0 0.0
  %1990 = vmatpush1.msra.mxu0 0.0
  %1991 = vmatprep.subr.mxu0 0.0
  %1992 = vmatpush1.msra.mxu0 0.0
  %1993 = vmatprep.subr.mxu0 0.0
  %1994 = vmatpush1.msra.mxu0 0.0
  %1995 = vmatprep.subr.mxu0 0.0
  %1996 = vmatpush1.msra.mxu0 0.0
  %1997 = vmatprep.mubr.f32.mxu0 0.0
  %1998 = vmatmul.mubr.f32.gmra.mrb[0].mxu0 %v1839
  %v1999 = vpop.f32.mrb[0].mxu0
  %v2000 = vadd.f32 0.0, %v1999
  %v2001 = vpop.f32.mrb[0].mxu0
  %v2002 = vadd.f32 0.0, %v2001
  %2003 = vmatprep.mubr.f32.mxu0 0.0
  %2004 = vmatmul.mubr.f32.gmra.mrb[0].mxu0 %v1842
  %v2005 = vpop.f32.mrb[0].mxu0
  %v2006 = vadd.f32 0.0, %v2005
  %v2007 = vpop.f32.mrb[0].mxu0
  %v2008 = vadd.f32 0.0, %v2007
  %2009 = vdwg.mxu0
  %v2010 = vadd.f32 %v1787, %v1923
  %v2011 = vadd.f32 %v1788, %v1925
  %v2012 = vadd.f32 %v1789, %v2000
  %v2013 = vadd.f32 %v1790, %v2002
  %v2014 = vadd.f32 %v1791, %v1929
  %v2015 = vadd.f32 %v1792, %v1931
  %v2016 = vadd.f32 %v1793, %v2006
  %v2017 = vadd.f32 %v1794, %v2008
  %v2018 = vld [vmem:[%s3] sm:$0xff]
  %v2019 = vld [vmem:[%s3 + $0x8] sm:$0xff]
  %2021 = vset.pattern.permute.xlu0 0
  %2022 = vperm.xlu0 %2021, %v2018
  %v2023 = vpop.permute.xlu0 %2022
  %2026 = vset.pattern.permute.xlu0 0
  %2027 = vperm.xlu0 %2026, %v2019
  %v2028 = vpop.permute.xlu0 %2027
  %v2030 = vadd.f32 %v2010, %v2023
  %v2031 = vadd.f32 %v2011, %v2023
  %v2032 = vadd.f32 %v2012, %v2023
  %v2033 = vadd.f32 %v2013, %v2023
  %v2034 = vadd.f32 %v2014, %v2028
  %v2035 = vadd.f32 %v2015, %v2028
  %v2036 = vadd.f32 %v2016, %v2028
  %v2037 = vadd.f32 %v2017, %v2028
  %v2038 = vmax.f32 %v2030, 0.0
  %v2039 = vmax.f32 %v2031, 0.0
  %v2040 = vmax.f32 %v2032, 0.0
  %v2041 = vmax.f32 %v2033, 0.0
  %v2042 = vmax.f32 %v2034, 0.0
  %v2043 = vmax.f32 %v2035, 0.0
  %v2044 = vmax.f32 %v2036, 0.0
  %v2045 = vmax.f32 %v2037, 0.0
  %2046 = vrot.lane.b32.xlu0 %v2038, 17
  %v2047 = vpop.permute.xlu0 %2046
  %2048 = vrot.lane.b32.xlu0 %v2042, 17
  %v2049 = vpop.permute.xlu0 %2048
  %2050 = vrot.lane.b32.xlu0 %v2039, 17
  %v2051 = vpop.permute.xlu0 %2050
  %2052 = vrot.lane.b32.xlu0 %v2043, 17
  %v2053 = vpop.permute.xlu0 %2052
  %2054 = vrot.lane.b32.xlu0 %v2040, 17
  %v2055 = vpop.permute.xlu0 %2054
  %2056 = vrot.lane.b32.xlu0 %v2044, 17
  %v2057 = vpop.permute.xlu0 %2056
  %2058 = vrot.lane.b32.xlu0 %v2041, 17
  %v2059 = vpop.permute.xlu0 %2058
  %2060 = vrot.lane.b32.xlu0 %v2045, 17
  %v2061 = vpop.permute.xlu0 %2060
  %v2062 = vsel %vm50, %v2055, %v2059
  %v2063 = vsel %vm50, %v2057, %v2061
  %v2064 = vsel %vm50, %v2051, %v2055
  %v2065 = vsel %vm50, %v2053, %v2057
  %v2066 = vsel %vm50, %v2047, %v2051
  %v2067 = vsel %vm50, %v2049, %v2053
  %v2068 = vsel %vm50, %v2059, %v2047
  %v2069 = vsel %vm50, %v2061, %v2049
  %v2070 = vld [vmem:[%s4] sm:$0xff]
  %v2071 = vld [vmem:[%s4 + $0x8] sm:$0xff]
  %v2072 = vld [vmem:[%s4 + $0x10] sm:$0xff]
  %v2073 = vld [vmem:[%s4 + $0x18] sm:$0xff]
  %v2074 = vmul.f32 %v2068, %v62
  %v2075 = vmul.f32 %v2066, %v66
  %v2076 = vmul.f32 %v2064, %v70
  %v2077 = vmul.f32 %v2062, %v74
  %v2078 = vmul.f32 %v2069, %v62
  %v2079 = vmul.f32 %v2067, %v66
  %v2080 = vmul.f32 %v2065, %v70
  %v2081 = vmul.f32 %v2063, %v74
  %2082 = vrot.lane.b32.xlu0 %v2038, 16
  %v2083 = vpop.permute.xlu0 %2082
  %2084 = vrot.lane.b32.xlu0 %v2042, 16
  %v2085 = vpop.permute.xlu0 %2084
  %2086 = vrot.lane.b32.xlu0 %v2039, 16
  %v2087 = vpop.permute.xlu0 %2086
  %2088 = vrot.lane.b32.xlu0 %v2043, 16
  %v2089 = vpop.permute.xlu0 %2088
  %2090 = vrot.lane.b32.xlu0 %v2040, 16
  %v2091 = vpop.permute.xlu0 %2090
  %2092 = vrot.lane.b32.xlu0 %v2044, 16
  %v2093 = vpop.permute.xlu0 %2092
  %2094 = vrot.lane.b32.xlu0 %v2041, 16
  %v2095 = vpop.permute.xlu0 %2094
  %2096 = vrot.lane.b32.xlu0 %v2045, 16
  %v2097 = vpop.permute.xlu0 %2096
  %v2098 = vsel %vm91, %v2091, %v2095
  %v2099 = vsel %vm91, %v2093, %v2097
  %v2100 = vsel %vm91, %v2087, %v2091
  %v2101 = vsel %vm91, %v2089, %v2093
  %v2102 = vsel %vm91, %v2083, %v2087
  %v2103 = vsel %vm91, %v2085, %v2089
  %v2104 = vsel %vm91, %v2095, %v2083
  %v2105 = vsel %vm91, %v2097, %v2085
  %s2106 = scalar_lea.vmem %s4, 32
  %v2107 = vld [vmem:[%s2106] sm:$0xff]
  %v2108 = vld [vmem:[%s2106 + $0x8] sm:$0xff]
  %v2109 = vld [vmem:[%s2106 + $0x10] sm:$0xff]
  %v2110 = vld [vmem:[%s2106 + $0x18] sm:$0xff]
  %v2111 = vmul.f32 %v2104, %v105
  %v2112 = vmul.f32 %v2102, %v109
  %v2113 = vmul.f32 %v2100, %v113
  %v2114 = vmul.f32 %v2098, %v117
  %v2115 = vmul.f32 %v2105, %v105
  %v2116 = vmul.f32 %v2103, %v109
  %v2117 = vmul.f32 %v2101, %v113
  %v2118 = vmul.f32 %v2099, %v117
  %vm2119 = vcmask 130048
  %v2121 = vsel %vm2119, %v2107, 0
  %v2124 = vsel %vm2119, %v2108, 0
  %v2127 = vsel %vm2119, %v2109, 0
  %v2130 = vsel %vm2119, %v2110, 0
  %2132 = vmatprep.subr.mxu0 %v2112
  %2133 = vmatpush1.msra.mxu0 %v2111
  %2134 = vmatprep.subr.mxu0 %v2116
  %2135 = vmatpush1.msra.mxu0 %v2115
  %2136 = vmatprep.subr.mxu0 0.0
  %2137 = vmatpush1.msra.mxu0 0.0
  %2138 = vmatprep.subr.mxu0 0.0
  %2139 = vmatpush1.msra.mxu0 0.0
  %2140 = vmatprep.subr.mxu0 0.0
  %2141 = vmatpush1.msra.mxu0 0.0
  %2142 = vmatprep.subr.mxu0 0.0
  %2143 = vmatpush1.msra.mxu0 0.0
  %2144 = vmatprep.subr.mxu0 0.0
  %2145 = vmatpush1.msra.mxu0 0.0
  %2146 = vmatprep.subr.mxu0 0.0
  %2147 = vmatpush1.msra.mxu0 0.0
  %2148 = vmatprep.subr.mxu0 0.0
  %2149 = vmatpush1.msra.mxu0 0.0
  %2150 = vmatprep.subr.mxu0 0.0
  %2151 = vmatpush1.msra.mxu0 0.0
  %2152 = vmatprep.subr.mxu0 0.0
  %2153 = vmatpush1.msra.mxu0 0.0
  %2154 = vmatprep.subr.mxu0 0.0
  %2155 = vmatpush1.msra.mxu0 0.0
  %2156 = vmatprep.subr.mxu0 0.0
  %2157 = vmatpush1.msra.mxu0 0.0
  %2158 = vmatprep.subr.mxu0 0.0
  %2159 = vmatpush1.msra.mxu0 0.0
  %2160 = vmatprep.subr.mxu0 0.0
  %2161 = vmatpush1.msra.mxu0 0.0
  %2162 = vmatprep.subr.mxu0 0.0
  %2163 = vmatpush1.msra.mxu0 0.0
  %2164 = vmatprep.subr.mxu0 0.0
  %2165 = vmatpush1.msra.mxu0 0.0
  %2166 = vmatprep.subr.mxu0 0.0
  %2167 = vmatpush1.msra.mxu0 0.0
  %2168 = vmatprep.subr.mxu0 0.0
  %2169 = vmatpush1.msra.mxu0 0.0
  %2170 = vmatprep.subr.mxu0 0.0
  %2171 = vmatpush1.msra.mxu0 0.0
  %2172 = vmatprep.subr.mxu0 0.0
  %2173 = vmatpush1.msra.mxu0 0.0
  %2174 = vmatprep.subr.mxu0 0.0
  %2175 = vmatpush1.msra.mxu0 0.0
  %2176 = vmatprep.subr.mxu0 0.0
  %2177 = vmatpush1.msra.mxu0 0.0
  %2178 = vmatprep.subr.mxu0 0.0
  %2179 = vmatpush1.msra.mxu0 0.0
  %2180 = vmatprep.subr.mxu0 0.0
  %2181 = vmatpush1.msra.mxu0 0.0
  %2182 = vmatprep.subr.mxu0 0.0
  %2183 = vmatpush1.msra.mxu0 0.0
  %2184 = vmatprep.subr.mxu0 0.0
  %2185 = vmatpush1.msra.mxu0 0.0
  %2186 = vmatprep.subr.mxu0 0.0
  %2187 = vmatpush1.msra.mxu0 0.0
  %2188 = vmatprep.subr.mxu0 0.0
  %2189 = vmatpush1.msra.mxu0 0.0
  %2190 = vmatprep.subr.mxu0 0.0
  %2191 = vmatpush1.msra.mxu0 0.0
  %2192 = vmatprep.subr.mxu0 0.0
  %2193 = vmatpush1.msra.mxu0 0.0
  %2194 = vmatprep.subr.mxu0 0.0
  %2195 = vmatpush1.msra.mxu0 0.0
  %2196 = vmatprep.mubr.f32.mxu0 0.0
  %2197 = vmatmul.mubr.f32.gmra.mrb[0].mxu0 %v2121
  %v2198 = vpop.f32.mrb[0].mxu0
  %v2199 = vadd.f32 0.0, %v2198
  %v2200 = vpop.f32.mrb[0].mxu0
  %v2201 = vadd.f32 0.0, %v2200
  %2202 = vmatprep.mubr.f32.mxu0 0.0
  %2203 = vmatmul.mubr.f32.gmra.mrb[0].mxu0 %v2124
  %v2204 = vpop.f32.mrb[0].mxu0
  %v2205 = vadd.f32 0.0, %v2204
  %v2206 = vpop.f32.mrb[0].mxu0
  %v2207 = vadd.f32 0.0, %v2206
  %2208 = vmatprep.mubr.f32.mxu0 0.0
  %2209 = vmatmul.mubr.f32.gmra.mrb[0].mxu0 %v2127
  %v2210 = vpop.f32.mrb[0].mxu0
  %v2211 = vadd.f32 0.0, %v2210
  %v2212 = vpop.f32.mrb[0].mxu0
  %v2213 = vadd.f32 0.0, %v2212
  %2214 = vmatprep.mubr.f32.mxu0 0.0
  %2215 = vmatmul.mubr.f32.gmra.mrb[0].mxu0 %v2130
  %v2216 = vpop.f32.mrb[0].mxu0
  %v2217 = vadd.f32 0.0, %v2216
  %v2218 = vpop.f32.mrb[0].mxu0
  %v2219 = vadd.f32 0.0, %v2218
  %2220 = vdwg.mxu0
  %2221 = vmatprep.subr.mxu0 %v2114
  %2222 = vmatpush1.msra.mxu0 %v2113
  %2223 = vmatprep.subr.mxu0 %v2118
  %2224 = vmatpush1.msra.mxu0 %v2117
  %2225 = vmatprep.subr.mxu0 0.0
  %2226 = vmatpush1.msra.mxu0 0.0
  %2227 = vmatprep.subr.mxu0 0.0
  %2228 = vmatpush1.msra.mxu0 0.0
  %2229 = vmatprep.subr.mxu0 0.0
  %2230 = vmatpush1.msra.mxu0 0.0
  %2231 = vmatprep.subr.mxu0 0.0
  %2232 = vmatpush1.msra.mxu0 0.0
  %2233 = vmatprep.subr.mxu0 0.0
  %2234 = vmatpush1.msra.mxu0 0.0
  %2235 = vmatprep.subr.mxu0 0.0
  %2236 = vmatpush1.msra.mxu0 0.0
  %2237 = vmatprep.subr.mxu0 0.0
  %2238 = vmatpush1.msra.mxu0 0.0
  %2239 = vmatprep.subr.mxu0 0.0
  %2240 = vmatpush1.msra.mxu0 0.0
  %2241 = vmatprep.subr.mxu0 0.0
  %2242 = vmatpush1.msra.mxu0 0.0
  %2243 = vmatprep.subr.mxu0 0.0
  %2244 = vmatpush1.msra.mxu0 0.0
  %2245 = vmatprep.subr.mxu0 0.0
  %2246 = vmatpush1.msra.mxu0 0.0
  %2247 = vmatprep.subr.mxu0 0.0
  %2248 = vmatpush1.msra.mxu0 0.0
  %2249 = vmatprep.subr.mxu0 0.0
  %2250 = vmatpush1.msra.mxu0 0.0
  %2251 = vmatprep.subr.mxu0 0.0
  %2252 = vmatpush1.msra.mxu0 0.0
  %2253 = vmatprep.subr.mxu0 0.0
  %2254 = vmatpush1.msra.mxu0 0.0
  %2255 = vmatprep.subr.mxu0 0.0
  %2256 = vmatpush1.msra.mxu0 0.0
  %2257 = vmatprep.subr.mxu0 0.0
  %2258 = vmatpush1.msra.mxu0 0.0
  %2259 = vmatprep.subr.mxu0 0.0
  %2260 = vmatpush1.msra.mxu0 0.0
  %2261 = vmatprep.subr.mxu0 0.0
  %2262 = vmatpush1.msra.mxu0 0.0
  %2263 = vmatprep.subr.mxu0 0.0
  %2264 = vmatpush1.msra.mxu0 0.0
  %2265 = vmatprep.subr.mxu0 0.0
  %2266 = vmatpush1.msra.mxu0 0.0
  %2267 = vmatprep.subr.mxu0 0.0
  %2268 = vmatpush1.msra.mxu0 0.0
  %2269 = vmatprep.subr.mxu0 0.0
  %2270 = vmatpush1.msra.mxu0 0.0
  %2271 = vmatprep.subr.mxu0 0.0
  %2272 = vmatpush1.msra.mxu0 0.0
  %2273 = vmatprep.subr.mxu0 0.0
  %2274 = vmatpush1.msra.mxu0 0.0
  %2275 = vmatprep.subr.mxu0 0.0
  %2276 = vmatpush1.msra.mxu0 0.0
  %2277 = vmatprep.subr.mxu0 0.0
  %2278 = vmatpush1.msra.mxu0 0.0
  %2279 = vmatprep.subr.mxu0 0.0
  %2280 = vmatpush1.msra.mxu0 0.0
  %2281 = vmatprep.subr.mxu0 0.0
  %2282 = vmatpush1.msra.mxu0 0.0
  %2283 = vmatprep.subr.mxu0 0.0
  %2284 = vmatpush1.msra.mxu0 0.0
  %2285 = vmatprep.mubr.f32.mxu0 0.0
  %2286 = vmatmul.mubr.f32.gmra.mrb[0].mxu0 %v2121
  %v2287 = vpop.f32.mrb[0].mxu0
  %v2288 = vadd.f32 0.0, %v2287
  %v2289 = vpop.f32.mrb[0].mxu0
  %v2290 = vadd.f32 0.0, %v2289
  %2291 = vmatprep.mubr.f32.mxu0 0.0
  %2292 = vmatmul.mubr.f32.gmra.mrb[0].mxu0 %v2124
  %v2293 = vpop.f32.mrb[0].mxu0
  %v2294 = vadd.f32 0.0, %v2293
  %v2295 = vpop.f32.mrb[0].mxu0
  %v2296 = vadd.f32 0.0, %v2295
  %2297 = vmatprep.mubr.f32.mxu0 0.0
  %2298 = vmatmul.mubr.f32.gmra.mrb[0].mxu0 %v2127
  %v2299 = vpop.f32.mrb[0].mxu0
  %v2300 = vadd.f32 0.0, %v2299
  %v2301 = vpop.f32.mrb[0].mxu0
  %v2302 = vadd.f32 0.0, %v2301
  %2303 = vmatprep.mubr.f32.mxu0 0.0
  %2304 = vmatmul.mubr.f32.gmra.mrb[0].mxu0 %v2130
  %v2305 = vpop.f32.mrb[0].mxu0
  %v2306 = vadd.f32 0.0, %v2305
  %v2307 = vpop.f32.mrb[0].mxu0
  %v2308 = vadd.f32 0.0, %v2307
  %2309 = vdwg.mxu0
  %v2311 = vsel %vm2119, %v2070, 0
  %v2314 = vsel %vm2119, %v2071, 0
  %v2317 = vsel %vm2119, %v2072, 0
  %v2320 = vsel %vm2119, %v2073, 0
  %2322 = vmatprep.subr.mxu0 %v2075
  %2323 = vmatpush1.msra.mxu0 %v2074
  %2324 = vmatprep.subr.mxu0 %v2079
  %2325 = vmatpush1.msra.mxu0 %v2078
  %2326 = vmatprep.subr.mxu0 0.0
  %2327 = vmatpush1.msra.mxu0 0.0
  %2328 = vmatprep.subr.mxu0 0.0
  %2329 = vmatpush1.msra.mxu0 0.0
  %2330 = vmatprep.subr.mxu0 0.0
  %2331 = vmatpush1.msra.mxu0 0.0
  %2332 = vmatprep.subr.mxu0 0.0
  %2333 = vmatpush1.msra.mxu0 0.0
  %2334 = vmatprep.subr.mxu0 0.0
  %2335 = vmatpush1.msra.mxu0 0.0
  %2336 = vmatprep.subr.mxu0 0.0
  %2337 = vmatpush1.msra.mxu0 0.0
  %2338 = vmatprep.subr.mxu0 0.0
  %2339 = vmatpush1.msra.mxu0 0.0
  %2340 = vmatprep.subr.mxu0 0.0
  %2341 = vmatpush1.msra.mxu0 0.0
  %2342 = vmatprep.subr.mxu0 0.0
  %2343 = vmatpush1.msra.mxu0 0.0
  %2344 = vmatprep.subr.mxu0 0.0
  %2345 = vmatpush1.msra.mxu0 0.0
  %2346 = vmatprep.subr.mxu0 0.0
  %2347 = vmatpush1.msra.mxu0 0.0
  %2348 = vmatprep.subr.mxu0 0.0
  %2349 = vmatpush1.msra.mxu0 0.0
  %2350 = vmatprep.subr.mxu0 0.0
  %2351 = vmatpush1.msra.mxu0 0.0
  %2352 = vmatprep.subr.mxu0 0.0
  %2353 = vmatpush1.msra.mxu0 0.0
  %2354 = vmatprep.subr.mxu0 0.0
  %2355 = vmatpush1.msra.mxu0 0.0
  %2356 = vmatprep.subr.mxu0 0.0
  %2357 = vmatpush1.msra.mxu0 0.0
  %2358 = vmatprep.subr.mxu0 0.0
  %2359 = vmatpush1.msra.mxu0 0.0
  %2360 = vmatprep.subr.mxu0 0.0
  %2361 = vmatpush1.msra.mxu0 0.0
  %2362 = vmatprep.subr.mxu0 0.0
  %2363 = vmatpush1.msra.mxu0 0.0
  %2364 = vmatprep.subr.mxu0 0.0
  %2365 = vmatpush1.msra.mxu0 0.0
  %2366 = vmatprep.subr.mxu0 0.0
  %2367 = vmatpush1.msra.mxu0 0.0
  %2368 = vmatprep.subr.mxu0 0.0
  %2369 = vmatpush1.msra.mxu0 0.0
  %2370 = vmatprep.subr.mxu0 0.0
  %2371 = vmatpush1.msra.mxu0 0.0
  %2372 = vmatprep.subr.mxu0 0.0
  %2373 = vmatpush1.msra.mxu0 0.0
  %2374 = vmatprep.subr.mxu0 0.0
  %2375 = vmatpush1.msra.mxu0 0.0
  %2376 = vmatprep.subr.mxu0 0.0
  %2377 = vmatpush1.msra.mxu0 0.0
  %2378 = vmatprep.subr.mxu0 0.0
  %2379 = vmatpush1.msra.mxu0 0.0
  %2380 = vmatprep.subr.mxu0 0.0
  %2381 = vmatpush1.msra.mxu0 0.0
  %2382 = vmatprep.subr.mxu0 0.0
  %2383 = vmatpush1.msra.mxu0 0.0
  %2384 = vmatprep.subr.mxu0 0.0
  %2385 = vmatpush1.msra.mxu0 0.0
  %2386 = vmatprep.mubr.f32.mxu0 0.0
  %2387 = vmatmul.mubr.f32.gmra.mrb[0].mxu0 %v2311
  %v2388 = vpop.f32.mrb[0].mxu0
  %v2389 = vadd.f32 %v2199, %v2388
  %v2390 = vpop.f32.mrb[0].mxu0
  %v2391 = vadd.f32 %v2201, %v2390
  %2392 = vmatprep.mubr.f32.mxu0 0.0
  %2393 = vmatmul.mubr.f32.gmra.mrb[0].mxu0 %v2314
  %v2394 = vpop.f32.mrb[0].mxu0
  %v2395 = vadd.f32 %v2205, %v2394
  %v2396 = vpop.f32.mrb[0].mxu0
  %v2397 = vadd.f32 %v2207, %v2396
  %2398 = vmatprep.mubr.f32.mxu0 0.0
  %2399 = vmatmul.mubr.f32.gmra.mrb[0].mxu0 %v2317
  %v2400 = vpop.f32.mrb[0].mxu0
  %v2401 = vadd.f32 %v2211, %v2400
  %v2402 = vpop.f32.mrb[0].mxu0
  %v2403 = vadd.f32 %v2213, %v2402
  %2404 = vmatprep.mubr.f32.mxu0 0.0
  %2405 = vmatmul.mubr.f32.gmra.mrb[0].mxu0 %v2320
  %v2406 = vpop.f32.mrb[0].mxu0
  %v2407 = vadd.f32 %v2217, %v2406
  %v2408 = vpop.f32.mrb[0].mxu0
  %v2409 = vadd.f32 %v2219, %v2408
  %2410 = vdwg.mxu0
  %2411 = vmatprep.subr.mxu0 %v2077
  %2412 = vmatpush1.msra.mxu0 %v2076
  %2413 = vmatprep.subr.mxu0 %v2081
  %2414 = vmatpush1.msra.mxu0 %v2080
  %2415 = vmatprep.subr.mxu0 0.0
  %2416 = vmatpush1.msra.mxu0 0.0
  %2417 = vmatprep.subr.mxu0 0.0
  %2418 = vmatpush1.msra.mxu0 0.0
  %2419 = vmatprep.subr.mxu0 0.0
  %2420 = vmatpush1.msra.mxu0 0.0
  %2421 = vmatprep.subr.mxu0 0.0
  %2422 = vmatpush1.msra.mxu0 0.0
  %2423 = vmatprep.subr.mxu0 0.0
  %2424 = vmatpush1.msra.mxu0 0.0
  %2425 = vmatprep.subr.mxu0 0.0
  %2426 = vmatpush1.msra.mxu0 0.0
  %2427 = vmatprep.subr.mxu0 0.0
  %2428 = vmatpush1.msra.mxu0 0.0
  %2429 = vmatprep.subr.mxu0 0.0
  %2430 = vmatpush1.msra.mxu0 0.0
  %2431 = vmatprep.subr.mxu0 0.0
  %2432 = vmatpush1.msra.mxu0 0.0
  %2433 = vmatprep.subr.mxu0 0.0
  %2434 = vmatpush1.msra.mxu0 0.0
  %2435 = vmatprep.subr.mxu0 0.0
  %2436 = vmatpush1.msra.mxu0 0.0
  %2437 = vmatprep.subr.mxu0 0.0
  %2438 = vmatpush1.msra.mxu0 0.0
  %2439 = vmatprep.subr.mxu0 0.0
  %2440 = vmatpush1.msra.mxu0 0.0
  %2441 = vmatprep.subr.mxu0 0.0
  %2442 = vmatpush1.msra.mxu0 0.0
  %2443 = vmatprep.subr.mxu0 0.0
  %2444 = vmatpush1.msra.mxu0 0.0
  %2445 = vmatprep.subr.mxu0 0.0
  %2446 = vmatpush1.msra.mxu0 0.0
  %2447 = vmatprep.subr.mxu0 0.0
  %2448 = vmatpush1.msra.mxu0 0.0
  %2449 = vmatprep.subr.mxu0 0.0
  %2450 = vmatpush1.msra.mxu0 0.0
  %2451 = vmatprep.subr.mxu0 0.0
  %2452 = vmatpush1.msra.mxu0 0.0
  %2453 = vmatprep.subr.mxu0 0.0
  %2454 = vmatpush1.msra.mxu0 0.0
  %2455 = vmatprep.subr.mxu0 0.0
  %2456 = vmatpush1.msra.mxu0 0.0
  %2457 = vmatprep.subr.mxu0 0.0
  %2458 = vmatpush1.msra.mxu0 0.0
  %2459 = vmatprep.subr.mxu0 0.0
  %2460 = vmatpush1.msra.mxu0 0.0
  %2461 = vmatprep.subr.mxu0 0.0
  %2462 = vmatpush1.msra.mxu0 0.0
  %2463 = vmatprep.subr.mxu0 0.0
  %2464 = vmatpush1.msra.mxu0 0.0
  %2465 = vmatprep.subr.mxu0 0.0
  %2466 = vmatpush1.msra.mxu0 0.0
  %2467 = vmatprep.subr.mxu0 0.0
  %2468 = vmatpush1.msra.mxu0 0.0
  %2469 = vmatprep.subr.mxu0 0.0
  %2470 = vmatpush1.msra.mxu0 0.0
  %2471 = vmatprep.subr.mxu0 0.0
  %2472 = vmatpush1.msra.mxu0 0.0
  %2473 = vmatprep.subr.mxu0 0.0
  %2474 = vmatpush1.msra.mxu0 0.0
  %2475 = vmatprep.mubr.f32.mxu0 0.0
  %2476 = vmatmul.mubr.f32.gmra.mrb[0].mxu0 %v2311
  %v2477 = vpop.f32.mrb[0].mxu0
  %v2478 = vadd.f32 %v2288, %v2477
  %v2479 = vpop.f32.mrb[0].mxu0
  %v2480 = vadd.f32 %v2290, %v2479
  %2481 = vmatprep.mubr.f32.mxu0 0.0
  %2482 = vmatmul.mubr.f32.gmra.mrb[0].mxu0 %v2314
  %v2483 = vpop.f32.mrb[0].mxu0
  %v2484 = vadd.f32 %v2294, %v2483
  %v2485 = vpop.f32.mrb[0].mxu0
  %v2486 = vadd.f32 %v2296, %v2485
  %2487 = vmatprep.mubr.f32.mxu0 0.0
  %2488 = vmatmul.mubr.f32.gmra.mrb[0].mxu0 %v2317
  %v2489 = vpop.f32.mrb[0].mxu0
  %v2490 = vadd.f32 %v2300, %v2489
  %v2491 = vpop.f32.mrb[0].mxu0
  %v2492 = vadd.f32 %v2302, %v2491
  %2493 = vmatprep.mubr.f32.mxu0 0.0
  %2494 = vmatmul.mubr.f32.gmra.mrb[0].mxu0 %v2320
  %v2495 = vpop.f32.mrb[0].mxu0
  %v2496 = vadd.f32 %v2306, %v2495
  %v2497 = vpop.f32.mrb[0].mxu0
  %v2498 = vadd.f32 %v2308, %v2497
  %2499 = vdwg.mxu0
  %2500 = vrot.lane.b32.xlu0 %v2038, 15
  %v2501 = vpop.permute.xlu0 %2500
  %2502 = vrot.lane.b32.xlu0 %v2042, 15
  %v2503 = vpop.permute.xlu0 %2502
  %2504 = vrot.lane.b32.xlu0 %v2039, 15
  %v2505 = vpop.permute.xlu0 %2504
  %2506 = vrot.lane.b32.xlu0 %v2043, 15
  %v2507 = vpop.permute.xlu0 %2506
  %2508 = vrot.lane.b32.xlu0 %v2040, 15
  %v2509 = vpop.permute.xlu0 %2508
  %2510 = vrot.lane.b32.xlu0 %v2044, 15
  %v2511 = vpop.permute.xlu0 %2510
  %2512 = vrot.lane.b32.xlu0 %v2041, 15
  %v2513 = vpop.permute.xlu0 %2512
  %2514 = vrot.lane.b32.xlu0 %v2045, 15
  %v2515 = vpop.permute.xlu0 %2514
  %v2516 = vsel %vm480, %v2509, %v2513
  %v2517 = vsel %vm480, %v2511, %v2515
  %v2518 = vsel %vm480, %v2505, %v2509
  %v2519 = vsel %vm480, %v2507, %v2511
  %v2520 = vsel %vm480, %v2501, %v2505
  %v2521 = vsel %vm480, %v2503, %v2507
  %v2522 = vsel %vm480, %v2513, %v2501
  %v2523 = vsel %vm480, %v2515, %v2503
  %s2524 = scalar_lea.vmem %s4, 64
  %v2525 = vld [vmem:[%s2524] sm:$0xff]
  %v2526 = vld [vmem:[%s2524 + $0x8] sm:$0xff]
  %v2527 = vld [vmem:[%s2524 + $0x10] sm:$0xff]
  %v2528 = vld [vmem:[%s2524 + $0x18] sm:$0xff]
  %v2529 = vmul.f32 %v2522, %v494
  %v2530 = vmul.f32 %v2520, %v498
  %v2531 = vmul.f32 %v2518, %v502
  %v2532 = vmul.f32 %v2516, %v506
  %v2533 = vmul.f32 %v2523, %v494
  %v2534 = vmul.f32 %v2521, %v498
  %v2535 = vmul.f32 %v2519, %v502
  %v2536 = vmul.f32 %v2517, %v506
  %v2538 = vsel %vm2119, %v2525, 0
  %v2541 = vsel %vm2119, %v2526, 0
  %v2544 = vsel %vm2119, %v2527, 0
  %v2547 = vsel %vm2119, %v2528, 0
  %2549 = vmatprep.subr.mxu0 %v2530
  %2550 = vmatpush1.msra.mxu0 %v2529
  %2551 = vmatprep.subr.mxu0 %v2534
  %2552 = vmatpush1.msra.mxu0 %v2533
  %2553 = vmatprep.subr.mxu0 0.0
  %2554 = vmatpush1.msra.mxu0 0.0
  %2555 = vmatprep.subr.mxu0 0.0
  %2556 = vmatpush1.msra.mxu0 0.0
  %2557 = vmatprep.subr.mxu0 0.0
  %2558 = vmatpush1.msra.mxu0 0.0
  %2559 = vmatprep.subr.mxu0 0.0
  %2560 = vmatpush1.msra.mxu0 0.0
  %2561 = vmatprep.subr.mxu0 0.0
  %2562 = vmatpush1.msra.mxu0 0.0
  %2563 = vmatprep.subr.mxu0 0.0
  %2564 = vmatpush1.msra.mxu0 0.0
  %2565 = vmatprep.subr.mxu0 0.0
  %2566 = vmatpush1.msra.mxu0 0.0
  %2567 = vmatprep.subr.mxu0 0.0
  %2568 = vmatpush1.msra.mxu0 0.0
  %2569 = vmatprep.subr.mxu0 0.0
  %2570 = vmatpush1.msra.mxu0 0.0
  %2571 = vmatprep.subr.mxu0 0.0
  %2572 = vmatpush1.msra.mxu0 0.0
  %2573 = vmatprep.subr.mxu0 0.0
  %2574 = vmatpush1.msra.mxu0 0.0
  %2575 = vmatprep.subr.mxu0 0.0
  %2576 = vmatpush1.msra.mxu0 0.0
  %2577 = vmatprep.subr.mxu0 0.0
  %2578 = vmatpush1.msra.mxu0 0.0
  %2579 = vmatprep.subr.mxu0 0.0
  %2580 = vmatpush1.msra.mxu0 0.0
  %2581 = vmatprep.subr.mxu0 0.0
  %2582 = vmatpush1.msra.mxu0 0.0
  %2583 = vmatprep.subr.mxu0 0.0
  %2584 = vmatpush1.msra.mxu0 0.0
  %2585 = vmatprep.subr.mxu0 0.0
  %2586 = vmatpush1.msra.mxu0 0.0
  %2587 = vmatprep.subr.mxu0 0.0
  %2588 = vmatpush1.msra.mxu0 0.0
  %2589 = vmatprep.subr.mxu0 0.0
  %2590 = vmatpush1.msra.mxu0 0.0
  %2591 = vmatprep.subr.mxu0 0.0
  %2592 = vmatpush1.msra.mxu0 0.0
  %2593 = vmatprep.subr.mxu0 0.0
  %2594 = vmatpush1.msra.mxu0 0.0
  %2595 = vmatprep.subr.mxu0 0.0
  %2596 = vmatpush1.msra.mxu0 0.0
  %2597 = vmatprep.subr.mxu0 0.0
  %2598 = vmatpush1.msra.mxu0 0.0
  %2599 = vmatprep.subr.mxu0 0.0
  %2600 = vmatpush1.msra.mxu0 0.0
  %2601 = vmatprep.subr.mxu0 0.0
  %2602 = vmatpush1.msra.mxu0 0.0
  %2603 = vmatprep.subr.mxu0 0.0
  %2604 = vmatpush1.msra.mxu0 0.0
  %2605 = vmatprep.subr.mxu0 0.0
  %2606 = vmatpush1.msra.mxu0 0.0
  %2607 = vmatprep.subr.mxu0 0.0
  %2608 = vmatpush1.msra.mxu0 0.0
  %2609 = vmatprep.subr.mxu0 0.0
  %2610 = vmatpush1.msra.mxu0 0.0
  %2611 = vmatprep.subr.mxu0 0.0
  %2612 = vmatpush1.msra.mxu0 0.0
  %2613 = vmatprep.mubr.f32.mxu0 0.0
  %2614 = vmatmul.mubr.f32.gmra.mrb[0].mxu0 %v2538
  %v2615 = vpop.f32.mrb[0].mxu0
  %v2616 = vadd.f32 0.0, %v2615
  %v2617 = vpop.f32.mrb[0].mxu0
  %v2618 = vadd.f32 0.0, %v2617
  %2619 = vmatprep.mubr.f32.mxu0 0.0
  %2620 = vmatmul.mubr.f32.gmra.mrb[0].mxu0 %v2541
  %v2621 = vpop.f32.mrb[0].mxu0
  %v2622 = vadd.f32 0.0, %v2621
  %v2623 = vpop.f32.mrb[0].mxu0
  %v2624 = vadd.f32 0.0, %v2623
  %2625 = vmatprep.mubr.f32.mxu0 0.0
  %2626 = vmatmul.mubr.f32.gmra.mrb[0].mxu0 %v2544
  %v2627 = vpop.f32.mrb[0].mxu0
  %v2628 = vadd.f32 0.0, %v2627
  %v2629 = vpop.f32.mrb[0].mxu0
  %v2630 = vadd.f32 0.0, %v2629
  %2631 = vmatprep.mubr.f32.mxu0 0.0
  %2632 = vmatmul.mubr.f32.gmra.mrb[0].mxu0 %v2547
  %v2633 = vpop.f32.mrb[0].mxu0
  %v2634 = vadd.f32 0.0, %v2633
  %v2635 = vpop.f32.mrb[0].mxu0
  %v2636 = vadd.f32 0.0, %v2635
  %2637 = vdwg.mxu0
  %2638 = vmatprep.subr.mxu0 %v2532
  %2639 = vmatpush1.msra.mxu0 %v2531
  %2640 = vmatprep.subr.mxu0 %v2536
  %2641 = vmatpush1.msra.mxu0 %v2535
  %2642 = vmatprep.subr.mxu0 0.0
  %2643 = vmatpush1.msra.mxu0 0.0
  %2644 = vmatprep.subr.mxu0 0.0
  %2645 = vmatpush1.msra.mxu0 0.0
  %2646 = vmatprep.subr.mxu0 0.0
  %2647 = vmatpush1.msra.mxu0 0.0
  %2648 = vmatprep.subr.mxu0 0.0
  %2649 = vmatpush1.msra.mxu0 0.0
  %2650 = vmatprep.subr.mxu0 0.0
  %2651 = vmatpush1.msra.mxu0 0.0
  %2652 = vmatprep.subr.mxu0 0.0
  %2653 = vmatpush1.msra.mxu0 0.0
  %2654 = vmatprep.subr.mxu0 0.0
  %2655 = vmatpush1.msra.mxu0 0.0
  %2656 = vmatprep.subr.mxu0 0.0
  %2657 = vmatpush1.msra.mxu0 0.0
  %2658 = vmatprep.subr.mxu0 0.0
  %2659 = vmatpush1.msra.mxu0 0.0
  %2660 = vmatprep.subr.mxu0 0.0
  %2661 = vmatpush1.msra.mxu0 0.0
  %2662 = vmatprep.subr.mxu0 0.0
  %2663 = vmatpush1.msra.mxu0 0.0
  %2664 = vmatprep.subr.mxu0 0.0
  %2665 = vmatpush1.msra.mxu0 0.0
  %2666 = vmatprep.subr.mxu0 0.0
  %2667 = vmatpush1.msra.mxu0 0.0
  %2668 = vmatprep.subr.mxu0 0.0
  %2669 = vmatpush1.msra.mxu0 0.0
  %2670 = vmatprep.subr.mxu0 0.0
  %2671 = vmatpush1.msra.mxu0 0.0
  %2672 = vmatprep.subr.mxu0 0.0
  %2673 = vmatpush1.msra.mxu0 0.0
  %2674 = vmatprep.subr.mxu0 0.0
  %2675 = vmatpush1.msra.mxu0 0.0
  %2676 = vmatprep.subr.mxu0 0.0
  %2677 = vmatpush1.msra.mxu0 0.0
  %2678 = vmatprep.subr.mxu0 0.0
  %2679 = vmatpush1.msra.mxu0 0.0
  %2680 = vmatprep.subr.mxu0 0.0
  %2681 = vmatpush1.msra.mxu0 0.0
  %2682 = vmatprep.subr.mxu0 0.0
  %2683 = vmatpush1.msra.mxu0 0.0
  %2684 = vmatprep.subr.mxu0 0.0
  %2685 = vmatpush1.msra.mxu0 0.0
  %2686 = vmatprep.subr.mxu0 0.0
  %2687 = vmatpush1.msra.mxu0 0.0
  %2688 = vmatprep.subr.mxu0 0.0
  %2689 = vmatpush1.msra.mxu0 0.0
  %2690 = vmatprep.subr.mxu0 0.0
  %2691 = vmatpush1.msra.mxu0 0.0
  %2692 = vmatprep.subr.mxu0 0.0
  %2693 = vmatpush1.msra.mxu0 0.0
  %2694 = vmatprep.subr.mxu0 0.0
  %2695 = vmatpush1.msra.mxu0 0.0
  %2696 = vmatprep.subr.mxu0 0.0
  %2697 = vmatpush1.msra.mxu0 0.0
  %2698 = vmatprep.subr.mxu0 0.0
  %2699 = vmatpush1.msra.mxu0 0.0
  %2700 = vmatprep.subr.mxu0 0.0
  %2701 = vmatpush1.msra.mxu0 0.0
  %2702 = vmatprep.mubr.f32.mxu0 0.0
  %2703 = vmatmul.mubr.f32.gmra.mrb[0].mxu0 %v2538
  %v2704 = vpop.f32.mrb[0].mxu0
  %v2705 = vadd.f32 0.0, %v2704
  %v2706 = vpop.f32.mrb[0].mxu0
  %v2707 = vadd.f32 0.0, %v2706
  %2708 = vmatprep.mubr.f32.mxu0 0.0
  %2709 = vmatmul.mubr.f32.gmra.mrb[0].mxu0 %v2541
  %v2710 = vpop.f32.mrb[0].mxu0
  %v2711 = vadd.f32 0.0, %v2710
  %v2712 = vpop.f32.mrb[0].mxu0
  %v2713 = vadd.f32 0.0, %v2712
  %2714 = vmatprep.mubr.f32.mxu0 0.0
  %2715 = vmatmul.mubr.f32.gmra.mrb[0].mxu0 %v2544
  %v2716 = vpop.f32.mrb[0].mxu0
  %v2717 = vadd.f32 0.0, %v2716
  %v2718 = vpop.f32.mrb[0].mxu0
  %v2719 = vadd.f32 0.0, %v2718
  %2720 = vmatprep.mubr.f32.mxu0 0.0
  %2721 = vmatmul.mubr.f32.gmra.mrb[0].mxu0 %v2547
  %v2722 = vpop.f32.mrb[0].mxu0
  %v2723 = vadd.f32 0.0, %v2722
  %v2724 = vpop.f32.mrb[0].mxu0
  %v2725 = vadd.f32 0.0, %v2724
  %2726 = vdwg.mxu0
  %v2727 = vadd.f32 %v2389, %v2616
  %v2728 = vadd.f32 %v2391, %v2618
  %v2729 = vadd.f32 %v2478, %v2705
  %v2730 = vadd.f32 %v2480, %v2707
  %v2731 = vadd.f32 %v2395, %v2622
  %v2732 = vadd.f32 %v2397, %v2624
  %v2733 = vadd.f32 %v2484, %v2711
  %v2734 = vadd.f32 %v2486, %v2713
  %v2735 = vadd.f32 %v2401, %v2628
  %v2736 = vadd.f32 %v2403, %v2630
  %v2737 = vadd.f32 %v2490, %v2717
  %v2738 = vadd.f32 %v2492, %v2719
  %v2739 = vadd.f32 %v2407, %v2634
  %v2740 = vadd.f32 %v2409, %v2636
  %v2741 = vadd.f32 %v2496, %v2723
  %v2742 = vadd.f32 %v2498, %v2725
  %2743 = vrot.lane.b32.xlu0 %v2038, 1
  %v2744 = vpop.permute.xlu0 %2743
  %2745 = vrot.lane.b32.xlu0 %v2042, 1
  %v2746 = vpop.permute.xlu0 %2745
  %2747 = vrot.lane.b32.xlu0 %v2039, 1
  %v2748 = vpop.permute.xlu0 %2747
  %2749 = vrot.lane.b32.xlu0 %v2043, 1
  %v2750 = vpop.permute.xlu0 %2749
  %2751 = vrot.lane.b32.xlu0 %v2040, 1
  %v2752 = vpop.permute.xlu0 %2751
  %2753 = vrot.lane.b32.xlu0 %v2044, 1
  %v2754 = vpop.permute.xlu0 %2753
  %2755 = vrot.lane.b32.xlu0 %v2041, 1
  %v2756 = vpop.permute.xlu0 %2755
  %2757 = vrot.lane.b32.xlu0 %v2045, 1
  %v2758 = vpop.permute.xlu0 %2757
  %v2759 = vsel %vm703, %v2752, %v2756
  %v2760 = vsel %vm703, %v2754, %v2758
  %v2761 = vsel %vm703, %v2748, %v2752
  %v2762 = vsel %vm703, %v2750, %v2754
  %v2763 = vsel %vm703, %v2744, %v2748
  %v2764 = vsel %vm703, %v2746, %v2750
  %v2765 = vsel %vm703, %v2756, %v2744
  %v2766 = vsel %vm703, %v2758, %v2746
  %s2767 = scalar_lea.vmem %s4, 96
  %v2768 = vld [vmem:[%s2767] sm:$0xff]
  %v2769 = vld [vmem:[%s2767 + $0x8] sm:$0xff]
  %v2770 = vld [vmem:[%s2767 + $0x10] sm:$0xff]
  %v2771 = vld [vmem:[%s2767 + $0x18] sm:$0xff]
  %v2772 = vmul.f32 %v2765, %v717
  %v2773 = vmul.f32 %v2763, %v721
  %v2774 = vmul.f32 %v2761, %v725
  %v2775 = vmul.f32 %v2759, %v729
  %v2776 = vmul.f32 %v2766, %v717
  %v2777 = vmul.f32 %v2764, %v721
  %v2778 = vmul.f32 %v2762, %v725
  %v2779 = vmul.f32 %v2760, %v729
  %v2781 = vsel %vm2119, %v2768, 0
  %v2784 = vsel %vm2119, %v2769, 0
  %v2787 = vsel %vm2119, %v2770, 0
  %v2790 = vsel %vm2119, %v2771, 0
  %2792 = vmatprep.subr.mxu0 %v2773
  %2793 = vmatpush1.msra.mxu0 %v2772
  %2794 = vmatprep.subr.mxu0 %v2777
  %2795 = vmatpush1.msra.mxu0 %v2776
  %2796 = vmatprep.subr.mxu0 0.0
  %2797 = vmatpush1.msra.mxu0 0.0
  %2798 = vmatprep.subr.mxu0 0.0
  %2799 = vmatpush1.msra.mxu0 0.0
  %2800 = vmatprep.subr.mxu0 0.0
  %2801 = vmatpush1.msra.mxu0 0.0
  %2802 = vmatprep.subr.mxu0 0.0
  %2803 = vmatpush1.msra.mxu0 0.0
  %2804 = vmatprep.subr.mxu0 0.0
  %2805 = vmatpush1.msra.mxu0 0.0
  %2806 = vmatprep.subr.mxu0 0.0
  %2807 = vmatpush1.msra.mxu0 0.0
  %2808 = vmatprep.subr.mxu0 0.0
  %2809 = vmatpush1.msra.mxu0 0.0
  %2810 = vmatprep.subr.mxu0 0.0
  %2811 = vmatpush1.msra.mxu0 0.0
  %2812 = vmatprep.subr.mxu0 0.0
  %2813 = vmatpush1.msra.mxu0 0.0
  %2814 = vmatprep.subr.mxu0 0.0
  %2815 = vmatpush1.msra.mxu0 0.0
  %2816 = vmatprep.subr.mxu0 0.0
  %2817 = vmatpush1.msra.mxu0 0.0
  %2818 = vmatprep.subr.mxu0 0.0
  %2819 = vmatpush1.msra.mxu0 0.0
  %2820 = vmatprep.subr.mxu0 0.0
  %2821 = vmatpush1.msra.mxu0 0.0
  %2822 = vmatprep.subr.mxu0 0.0
  %2823 = vmatpush1.msra.mxu0 0.0
  %2824 = vmatprep.subr.mxu0 0.0
  %2825 = vmatpush1.msra.mxu0 0.0
  %2826 = vmatprep.subr.mxu0 0.0
  %2827 = vmatpush1.msra.mxu0 0.0
  %2828 = vmatprep.subr.mxu0 0.0
  %2829 = vmatpush1.msra.mxu0 0.0
  %2830 = vmatprep.subr.mxu0 0.0
  %2831 = vmatpush1.msra.mxu0 0.0
  %2832 = vmatprep.subr.mxu0 0.0
  %2833 = vmatpush1.msra.mxu0 0.0
  %2834 = vmatprep.subr.mxu0 0.0
  %2835 = vmatpush1.msra.mxu0 0.0
  %2836 = vmatprep.subr.mxu0 0.0
  %2837 = vmatpush1.msra.mxu0 0.0
  %2838 = vmatprep.subr.mxu0 0.0
  %2839 = vmatpush1.msra.mxu0 0.0
  %2840 = vmatprep.subr.mxu0 0.0
  %2841 = vmatpush1.msra.mxu0 0.0
  %2842 = vmatprep.subr.mxu0 0.0
  %2843 = vmatpush1.msra.mxu0 0.0
  %2844 = vmatprep.subr.mxu0 0.0
  %2845 = vmatpush1.msra.mxu0 0.0
  %2846 = vmatprep.subr.mxu0 0.0
  %2847 = vmatpush1.msra.mxu0 0.0
  %2848 = vmatprep.subr.mxu0 0.0
  %2849 = vmatpush1.msra.mxu0 0.0
  %2850 = vmatprep.subr.mxu0 0.0
  %2851 = vmatpush1.msra.mxu0 0.0
  %2852 = vmatprep.subr.mxu0 0.0
  %2853 = vmatpush1.msra.mxu0 0.0
  %2854 = vmatprep.subr.mxu0 0.0
  %2855 = vmatpush1.msra.mxu0 0.0
  %2856 = vmatprep.mubr.f32.mxu0 0.0
  %2857 = vmatmul.mubr.f32.gmra.mrb[0].mxu0 %v2781
  %v2858 = vpop.f32.mrb[0].mxu0
  %v2859 = vadd.f32 0.0, %v2858
  %v2860 = vpop.f32.mrb[0].mxu0
  %v2861 = vadd.f32 0.0, %v2860
  %2862 = vmatprep.mubr.f32.mxu0 0.0
  %2863 = vmatmul.mubr.f32.gmra.mrb[0].mxu0 %v2784
  %v2864 = vpop.f32.mrb[0].mxu0
  %v2865 = vadd.f32 0.0, %v2864
  %v2866 = vpop.f32.mrb[0].mxu0
  %v2867 = vadd.f32 0.0, %v2866
  %2868 = vmatprep.mubr.f32.mxu0 0.0
  %2869 = vmatmul.mubr.f32.gmra.mrb[0].mxu0 %v2787
  %v2870 = vpop.f32.mrb[0].mxu0
  %v2871 = vadd.f32 0.0, %v2870
  %v2872 = vpop.f32.mrb[0].mxu0
  %v2873 = vadd.f32 0.0, %v2872
  %2874 = vmatprep.mubr.f32.mxu0 0.0
  %2875 = vmatmul.mubr.f32.gmra.mrb[0].mxu0 %v2790
  %v2876 = vpop.f32.mrb[0].mxu0
  %v2877 = vadd.f32 0.0, %v2876
  %v2878 = vpop.f32.mrb[0].mxu0
  %v2879 = vadd.f32 0.0, %v2878
  %2880 = vdwg.mxu0
  %2881 = vmatprep.subr.mxu0 %v2775
  %2882 = vmatpush1.msra.mxu0 %v2774
  %2883 = vmatprep.subr.mxu0 %v2779
  %2884 = vmatpush1.msra.mxu0 %v2778
  %2885 = vmatprep.subr.mxu0 0.0
  %2886 = vmatpush1.msra.mxu0 0.0
  %2887 = vmatprep.subr.mxu0 0.0
  %2888 = vmatpush1.msra.mxu0 0.0
  %2889 = vmatprep.subr.mxu0 0.0
  %2890 = vmatpush1.msra.mxu0 0.0
  %2891 = vmatprep.subr.mxu0 0.0
  %2892 = vmatpush1.msra.mxu0 0.0
  %2893 = vmatprep.subr.mxu0 0.0
  %2894 = vmatpush1.msra.mxu0 0.0
  %2895 = vmatprep.subr.mxu0 0.0
  %2896 = vmatpush1.msra.mxu0 0.0
  %2897 = vmatprep.subr.mxu0 0.0
  %2898 = vmatpush1.msra.mxu0 0.0
  %2899 = vmatprep.subr.mxu0 0.0
  %2900 = vmatpush1.msra.mxu0 0.0
  %2901 = vmatprep.subr.mxu0 0.0
  %2902 = vmatpush1.msra.mxu0 0.0
  %2903 = vmatprep.subr.mxu0 0.0
  %2904 = vmatpush1.msra.mxu0 0.0
  %2905 = vmatprep.subr.mxu0 0.0
  %2906 = vmatpush1.msra.mxu0 0.0
  %2907 = vmatprep.subr.mxu0 0.0
  %2908 = vmatpush1.msra.mxu0 0.0
  %2909 = vmatprep.subr.mxu0 0.0
  %2910 = vmatpush1.msra.mxu0 0.0
  %2911 = vmatprep.subr.mxu0 0.0
  %2912 = vmatpush1.msra.mxu0 0.0
  %2913 = vmatprep.subr.mxu0 0.0
  %2914 = vmatpush1.msra.mxu0 0.0
  %2915 = vmatprep.subr.mxu0 0.0
  %2916 = vmatpush1.msra.mxu0 0.0
  %2917 = vmatprep.subr.mxu0 0.0
  %2918 = vmatpush1.msra.mxu0 0.0
  %2919 = vmatprep.subr.mxu0 0.0
  %2920 = vmatpush1.msra.mxu0 0.0
  %2921 = vmatprep.subr.mxu0 0.0
  %2922 = vmatpush1.msra.mxu0 0.0
  %2923 = vmatprep.subr.mxu0 0.0
  %2924 = vmatpush1.msra.mxu0 0.0
  %2925 = vmatprep.subr.mxu0 0.0
  %2926 = vmatpush1.msra.mxu0 0.0
  %2927 = vmatprep.subr.mxu0 0.0
  %2928 = vmatpush1.msra.mxu0 0.0
  %2929 = vmatprep.subr.mxu0 0.0
  %2930 = vmatpush1.msra.mxu0 0.0
  %2931 = vmatprep.subr.mxu0 0.0
  %2932 = vmatpush1.msra.mxu0 0.0
  %2933 = vmatprep.subr.mxu0 0.0
  %2934 = vmatpush1.msra.mxu0 0.0
  %2935 = vmatprep.subr.mxu0 0.0
  %2936 = vmatpush1.msra.mxu0 0.0
  %2937 = vmatprep.subr.mxu0 0.0
  %2938 = vmatpush1.msra.mxu0 0.0
  %2939 = vmatprep.subr.mxu0 0.0
  %2940 = vmatpush1.msra.mxu0 0.0
  %2941 = vmatprep.subr.mxu0 0.0
  %2942 = vmatpush1.msra.mxu0 0.0
  %2943 = vmatprep.subr.mxu0 0.0
  %2944 = vmatpush1.msra.mxu0 0.0
  %2945 = vmatprep.mubr.f32.mxu0 0.0
  %2946 = vmatmul.mubr.f32.gmra.mrb[0].mxu0 %v2781
  %v2947 = vpop.f32.mrb[0].mxu0
  %v2948 = vadd.f32 0.0, %v2947
  %v2949 = vpop.f32.mrb[0].mxu0
  %v2950 = vadd.f32 0.0, %v2949
  %2951 = vmatprep.mubr.f32.mxu0 0.0
  %2952 = vmatmul.mubr.f32.gmra.mrb[0].mxu0 %v2784
  %v2953 = vpop.f32.mrb[0].mxu0
  %v2954 = vadd.f32 0.0, %v2953
  %v2955 = vpop.f32.mrb[0].mxu0
  %v2956 = vadd.f32 0.0, %v2955
  %2957 = vmatprep.mubr.f32.mxu0 0.0
  %2958 = vmatmul.mubr.f32.gmra.mrb[0].mxu0 %v2787
  %v2959 = vpop.f32.mrb[0].mxu0
  %v2960 = vadd.f32 0.0, %v2959
  %v2961 = vpop.f32.mrb[0].mxu0
  %v2962 = vadd.f32 0.0, %v2961
  %2963 = vmatprep.mubr.f32.mxu0 0.0
  %2964 = vmatmul.mubr.f32.gmra.mrb[0].mxu0 %v2790
  %v2965 = vpop.f32.mrb[0].mxu0
  %v2966 = vadd.f32 0.0, %v2965
  %v2967 = vpop.f32.mrb[0].mxu0
  %v2968 = vadd.f32 0.0, %v2967
  %2969 = vdwg.mxu0
  %v2970 = vadd.f32 %v2727, %v2859
  %v2971 = vadd.f32 %v2728, %v2861
  %v2972 = vadd.f32 %v2729, %v2948
  %v2973 = vadd.f32 %v2730, %v2950
  %v2974 = vadd.f32 %v2731, %v2865
  %v2975 = vadd.f32 %v2732, %v2867
  %v2976 = vadd.f32 %v2733, %v2954
  %v2977 = vadd.f32 %v2734, %v2956
  %v2978 = vadd.f32 %v2735, %v2871
  %v2979 = vadd.f32 %v2736, %v2873
  %v2980 = vadd.f32 %v2737, %v2960
  %v2981 = vadd.f32 %v2738, %v2962
  %v2982 = vadd.f32 %v2739, %v2877
  %v2983 = vadd.f32 %v2740, %v2879
  %v2984 = vadd.f32 %v2741, %v2966
  %v2985 = vadd.f32 %v2742, %v2968
  %s2986 = scalar_lea.vmem %s4, 128
  %v2987 = vld [vmem:[%s2986] sm:$0xff]
  %v2988 = vld [vmem:[%s2986 + $0x8] sm:$0xff]
  %v2989 = vld [vmem:[%s2986 + $0x10] sm:$0xff]
  %v2990 = vld [vmem:[%s2986 + $0x18] sm:$0xff]
  %v2995 = vmul.f32 %v2038, %v927
  %v2996 = vmul.f32 %v2039, %v931
  %v2997 = vmul.f32 %v2040, %v935
  %v2998 = vmul.f32 %v2041, %v939
  %v2999 = vmul.f32 %v2042, %v927
  %v3000 = vmul.f32 %v2043, %v931
  %v3001 = vmul.f32 %v2044, %v935
  %v3002 = vmul.f32 %v2045, %v939
  %v3004 = vsel %vm2119, %v2987, 0
  %v3007 = vsel %vm2119, %v2988, 0
  %v3010 = vsel %vm2119, %v2989, 0
  %v3013 = vsel %vm2119, %v2990, 0
  %3015 = vmatprep.subr.mxu0 %v2996
  %3016 = vmatpush1.msra.mxu0 %v2995
  %3017 = vmatprep.subr.mxu0 %v3000
  %3018 = vmatpush1.msra.mxu0 %v2999
  %3019 = vmatprep.subr.mxu0 0.0
  %3020 = vmatpush1.msra.mxu0 0.0
  %3021 = vmatprep.subr.mxu0 0.0
  %3022 = vmatpush1.msra.mxu0 0.0
  %3023 = vmatprep.subr.mxu0 0.0
  %3024 = vmatpush1.msra.mxu0 0.0
  %3025 = vmatprep.subr.mxu0 0.0
  %3026 = vmatpush1.msra.mxu0 0.0
  %3027 = vmatprep.subr.mxu0 0.0
  %3028 = vmatpush1.msra.mxu0 0.0
  %3029 = vmatprep.subr.mxu0 0.0
  %3030 = vmatpush1.msra.mxu0 0.0
  %3031 = vmatprep.subr.mxu0 0.0
  %3032 = vmatpush1.msra.mxu0 0.0
  %3033 = vmatprep.subr.mxu0 0.0
  %3034 = vmatpush1.msra.mxu0 0.0
  %3035 = vmatprep.subr.mxu0 0.0
  %3036 = vmatpush1.msra.mxu0 0.0
  %3037 = vmatprep.subr.mxu0 0.0
  %3038 = vmatpush1.msra.mxu0 0.0
  %3039 = vmatprep.subr.mxu0 0.0
  %3040 = vmatpush1.msra.mxu0 0.0
  %3041 = vmatprep.subr.mxu0 0.0
  %3042 = vmatpush1.msra.mxu0 0.0
  %3043 = vmatprep.subr.mxu0 0.0
  %3044 = vmatpush1.msra.mxu0 0.0
  %3045 = vmatprep.subr.mxu0 0.0
  %3046 = vmatpush1.msra.mxu0 0.0
  %3047 = vmatprep.subr.mxu0 0.0
  %3048 = vmatpush1.msra.mxu0 0.0
  %3049 = vmatprep.subr.mxu0 0.0
  %3050 = vmatpush1.msra.mxu0 0.0
  %3051 = vmatprep.subr.mxu0 0.0
  %3052 = vmatpush1.msra.mxu0 0.0
  %3053 = vmatprep.subr.mxu0 0.0
  %3054 = vmatpush1.msra.mxu0 0.0
  %3055 = vmatprep.subr.mxu0 0.0
  %3056 = vmatpush1.msra.mxu0 0.0
  %3057 = vmatprep.subr.mxu0 0.0
  %3058 = vmatpush1.msra.mxu0 0.0
  %3059 = vmatprep.subr.mxu0 0.0
  %3060 = vmatpush1.msra.mxu0 0.0
  %3061 = vmatprep.subr.mxu0 0.0
  %3062 = vmatpush1.msra.mxu0 0.0
  %3063 = vmatprep.subr.mxu0 0.0
  %3064 = vmatpush1.msra.mxu0 0.0
  %3065 = vmatprep.subr.mxu0 0.0
  %3066 = vmatpush1.msra.mxu0 0.0
  %3067 = vmatprep.subr.mxu0 0.0
  %3068 = vmatpush1.msra.mxu0 0.0
  %3069 = vmatprep.subr.mxu0 0.0
  %3070 = vmatpush1.msra.mxu0 0.0
  %3071 = vmatprep.subr.mxu0 0.0
  %3072 = vmatpush1.msra.mxu0 0.0
  %3073 = vmatprep.subr.mxu0 0.0
  %3074 = vmatpush1.msra.mxu0 0.0
  %3075 = vmatprep.subr.mxu0 0.0
  %3076 = vmatpush1.msra.mxu0 0.0
  %3077 = vmatprep.subr.mxu0 0.0
  %3078 = vmatpush1.msra.mxu0 0.0
  %3079 = vmatprep.mubr.f32.mxu0 0.0
  %3080 = vmatmul.mubr.f32.gmra.mrb[0].mxu0 %v3004
  %v3081 = vpop.f32.mrb[0].mxu0
  %v3082 = vadd.f32 0.0, %v3081
  %v3083 = vpop.f32.mrb[0].mxu0
  %v3084 = vadd.f32 0.0, %v3083
  %3085 = vmatprep.mubr.f32.mxu0 0.0
  %3086 = vmatmul.mubr.f32.gmra.mrb[0].mxu0 %v3007
  %v3087 = vpop.f32.mrb[0].mxu0
  %v3088 = vadd.f32 0.0, %v3087
  %v3089 = vpop.f32.mrb[0].mxu0
  %v3090 = vadd.f32 0.0, %v3089
  %3091 = vmatprep.mubr.f32.mxu0 0.0
  %3092 = vmatmul.mubr.f32.gmra.mrb[0].mxu0 %v3010
  %v3093 = vpop.f32.mrb[0].mxu0
  %v3094 = vadd.f32 0.0, %v3093
  %v3095 = vpop.f32.mrb[0].mxu0
  %v3096 = vadd.f32 0.0, %v3095
  %3097 = vmatprep.mubr.f32.mxu0 0.0
  %3098 = vmatmul.mubr.f32.gmra.mrb[0].mxu0 %v3013
  %v3099 = vpop.f32.mrb[0].mxu0
  %v3100 = vadd.f32 0.0, %v3099
  %v3101 = vpop.f32.mrb[0].mxu0
  %v3102 = vadd.f32 0.0, %v3101
  %3103 = vdwg.mxu0
  %3104 = vmatprep.subr.mxu0 %v2998
  %3105 = vmatpush1.msra.mxu0 %v2997
  %3106 = vmatprep.subr.mxu0 %v3002
  %3107 = vmatpush1.msra.mxu0 %v3001
  %3108 = vmatprep.subr.mxu0 0.0
  %3109 = vmatpush1.msra.mxu0 0.0
  %3110 = vmatprep.subr.mxu0 0.0
  %3111 = vmatpush1.msra.mxu0 0.0
  %3112 = vmatprep.subr.mxu0 0.0
  %3113 = vmatpush1.msra.mxu0 0.0
  %3114 = vmatprep.subr.mxu0 0.0
  %3115 = vmatpush1.msra.mxu0 0.0
  %3116 = vmatprep.subr.mxu0 0.0
  %3117 = vmatpush1.msra.mxu0 0.0
  %3118 = vmatprep.subr.mxu0 0.0
  %3119 = vmatpush1.msra.mxu0 0.0
  %3120 = vmatprep.subr.mxu0 0.0
  %3121 = vmatpush1.msra.mxu0 0.0
  %3122 = vmatprep.subr.mxu0 0.0
  %3123 = vmatpush1.msra.mxu0 0.0
  %3124 = vmatprep.subr.mxu0 0.0
  %3125 = vmatpush1.msra.mxu0 0.0
  %3126 = vmatprep.subr.mxu0 0.0
  %3127 = vmatpush1.msra.mxu0 0.0
  %3128 = vmatprep.subr.mxu0 0.0
  %3129 = vmatpush1.msra.mxu0 0.0
  %3130 = vmatprep.subr.mxu0 0.0
  %3131 = vmatpush1.msra.mxu0 0.0
  %3132 = vmatprep.subr.mxu0 0.0
  %3133 = vmatpush1.msra.mxu0 0.0
  %3134 = vmatprep.subr.mxu0 0.0
  %3135 = vmatpush1.msra.mxu0 0.0
  %3136 = vmatprep.subr.mxu0 0.0
  %3137 = vmatpush1.msra.mxu0 0.0
  %3138 = vmatprep.subr.mxu0 0.0
  %3139 = vmatpush1.msra.mxu0 0.0
  %3140 = vmatprep.subr.mxu0 0.0
  %3141 = vmatpush1.msra.mxu0 0.0
  %3142 = vmatprep.subr.mxu0 0.0
  %3143 = vmatpush1.msra.mxu0 0.0
  %3144 = vmatprep.subr.mxu0 0.0
  %3145 = vmatpush1.msra.mxu0 0.0
  %3146 = vmatprep.subr.mxu0 0.0
  %3147 = vmatpush1.msra.mxu0 0.0
  %3148 = vmatprep.subr.mxu0 0.0
  %3149 = vmatpush1.msra.mxu0 0.0
  %3150 = vmatprep.subr.mxu0 0.0
  %3151 = vmatpush1.msra.mxu0 0.0
  %3152 = vmatprep.subr.mxu0 0.0
  %3153 = vmatpush1.msra.mxu0 0.0
  %3154 = vmatprep.subr.mxu0 0.0
  %3155 = vmatpush1.msra.mxu0 0.0
  %3156 = vmatprep.subr.mxu0 0.0
  %3157 = vmatpush1.msra.mxu0 0.0
  %3158 = vmatprep.subr.mxu0 0.0
  %3159 = vmatpush1.msra.mxu0 0.0
  %3160 = vmatprep.subr.mxu0 0.0
  %3161 = vmatpush1.msra.mxu0 0.0
  %3162 = vmatprep.subr.mxu0 0.0
  %3163 = vmatpush1.msra.mxu0 0.0
  %3164 = vmatprep.subr.mxu0 0.0
  %3165 = vmatpush1.msra.mxu0 0.0
  %3166 = vmatprep.subr.mxu0 0.0
  %3167 = vmatpush1.msra.mxu0 0.0
  %3168 = vmatprep.mubr.f32.mxu0 0.0
  %3169 = vmatmul.mubr.f32.gmra.mrb[0].mxu0 %v3004
  %v3170 = vpop.f32.mrb[0].mxu0
  %v3171 = vadd.f32 0.0, %v3170
  %v3172 = vpop.f32.mrb[0].mxu0
  %v3173 = vadd.f32 0.0, %v3172
  %3174 = vmatprep.mubr.f32.mxu0 0.0
  %3175 = vmatmul.mubr.f32.gmra.mrb[0].mxu0 %v3007
  %v3176 = vpop.f32.mrb[0].mxu0
  %v3177 = vadd.f32 0.0, %v3176
  %v3178 = vpop.f32.mrb[0].mxu0
  %v3179 = vadd.f32 0.0, %v3178
  %3180 = vmatprep.mubr.f32.mxu0 0.0
  %3181 = vmatmul.mubr.f32.gmra.mrb[0].mxu0 %v3010
  %v3182 = vpop.f32.mrb[0].mxu0
  %v3183 = vadd.f32 0.0, %v3182
  %v3184 = vpop.f32.mrb[0].mxu0
  %v3185 = vadd.f32 0.0, %v3184
  %3186 = vmatprep.mubr.f32.mxu0 0.0
  %3187 = vmatmul.mubr.f32.gmra.mrb[0].mxu0 %v3013
  %v3188 = vpop.f32.mrb[0].mxu0
  %v3189 = vadd.f32 0.0, %v3188
  %v3190 = vpop.f32.mrb[0].mxu0
  %v3191 = vadd.f32 0.0, %v3190
  %3192 = vdwg.mxu0
  %v3193 = vadd.f32 %v2970, %v3082
  %v3194 = vadd.f32 %v2971, %v3084
  %v3195 = vadd.f32 %v2972, %v3171
  %v3196 = vadd.f32 %v2973, %v3173
  %v3197 = vadd.f32 %v2974, %v3088
  %v3198 = vadd.f32 %v2975, %v3090
  %v3199 = vadd.f32 %v2976, %v3177
  %v3200 = vadd.f32 %v2977, %v3179
  %v3201 = vadd.f32 %v2978, %v3094
  %v3202 = vadd.f32 %v2979, %v3096
  %v3203 = vadd.f32 %v2980, %v3183
  %v3204 = vadd.f32 %v2981, %v3185
  %v3205 = vadd.f32 %v2982, %v3100
  %v3206 = vadd.f32 %v2983, %v3102
  %v3207 = vadd.f32 %v2984, %v3189
  %v3208 = vadd.f32 %v2985, %v3191
  %3209 = vrot.lane.b32.xlu0 %v2038, 127
  %v3210 = vpop.permute.xlu0 %3209
  %3211 = vrot.lane.b32.xlu0 %v2042, 127
  %v3212 = vpop.permute.xlu0 %3211
  %3213 = vrot.lane.b32.xlu0 %v2039, 127
  %v3214 = vpop.permute.xlu0 %3213
  %3215 = vrot.lane.b32.xlu0 %v2043, 127
  %v3216 = vpop.permute.xlu0 %3215
  %3217 = vrot.lane.b32.xlu0 %v2040, 127
  %v3218 = vpop.permute.xlu0 %3217
  %3219 = vrot.lane.b32.xlu0 %v2044, 127
  %v3220 = vpop.permute.xlu0 %3219
  %3221 = vrot.lane.b32.xlu0 %v2041, 127
  %v3222 = vpop.permute.xlu0 %3221
  %3223 = vrot.lane.b32.xlu0 %v2045, 127
  %v3224 = vpop.permute.xlu0 %3223
  %v3225 = vsel %vm1134, %v3218, %v3222
  %v3226 = vsel %vm1134, %v3220, %v3224
  %v3227 = vsel %vm1134, %v3214, %v3218
  %v3228 = vsel %vm1134, %v3216, %v3220
  %v3229 = vsel %vm1134, %v3210, %v3214
  %v3230 = vsel %vm1134, %v3212, %v3216
  %v3231 = vsel %vm1134, %v3222, %v3210
  %v3232 = vsel %vm1134, %v3224, %v3212
  %s3233 = scalar_lea.vmem %s4, 160
  %v3234 = vld [vmem:[%s3233] sm:$0xff]
  %v3235 = vld [vmem:[%s3233 + $0x8] sm:$0xff]
  %v3236 = vld [vmem:[%s3233 + $0x10] sm:$0xff]
  %v3237 = vld [vmem:[%s3233 + $0x18] sm:$0xff]
  %v3238 = vmul.f32 %v3229, %v1148
  %v3239 = vmul.f32 %v3227, %v1152
  %v3240 = vmul.f32 %v3225, %v1156
  %v3241 = vmul.f32 %v3231, %v1160
  %v3242 = vmul.f32 %v3230, %v1148
  %v3243 = vmul.f32 %v3228, %v1152
  %v3244 = vmul.f32 %v3226, %v1156
  %v3245 = vmul.f32 %v3232, %v1160
  %v3247 = vsel %vm2119, %v3234, 0
  %v3250 = vsel %vm2119, %v3235, 0
  %v3253 = vsel %vm2119, %v3236, 0
  %v3256 = vsel %vm2119, %v3237, 0
  %3258 = vmatprep.subr.mxu0 %v3239
  %3259 = vmatpush1.msra.mxu0 %v3238
  %3260 = vmatprep.subr.mxu0 %v3243
  %3261 = vmatpush1.msra.mxu0 %v3242
  %3262 = vmatprep.subr.mxu0 0.0
  %3263 = vmatpush1.msra.mxu0 0.0
  %3264 = vmatprep.subr.mxu0 0.0
  %3265 = vmatpush1.msra.mxu0 0.0
  %3266 = vmatprep.subr.mxu0 0.0
  %3267 = vmatpush1.msra.mxu0 0.0
  %3268 = vmatprep.subr.mxu0 0.0
  %3269 = vmatpush1.msra.mxu0 0.0
  %3270 = vmatprep.subr.mxu0 0.0
  %3271 = vmatpush1.msra.mxu0 0.0
  %3272 = vmatprep.subr.mxu0 0.0
  %3273 = vmatpush1.msra.mxu0 0.0
  %3274 = vmatprep.subr.mxu0 0.0
  %3275 = vmatpush1.msra.mxu0 0.0
  %3276 = vmatprep.subr.mxu0 0.0
  %3277 = vmatpush1.msra.mxu0 0.0
  %3278 = vmatprep.subr.mxu0 0.0
  %3279 = vmatpush1.msra.mxu0 0.0
  %3280 = vmatprep.subr.mxu0 0.0
  %3281 = vmatpush1.msra.mxu0 0.0
  %3282 = vmatprep.subr.mxu0 0.0
  %3283 = vmatpush1.msra.mxu0 0.0
  %3284 = vmatprep.subr.mxu0 0.0
  %3285 = vmatpush1.msra.mxu0 0.0
  %3286 = vmatprep.subr.mxu0 0.0
  %3287 = vmatpush1.msra.mxu0 0.0
  %3288 = vmatprep.subr.mxu0 0.0
  %3289 = vmatpush1.msra.mxu0 0.0
  %3290 = vmatprep.subr.mxu0 0.0
  %3291 = vmatpush1.msra.mxu0 0.0
  %3292 = vmatprep.subr.mxu0 0.0
  %3293 = vmatpush1.msra.mxu0 0.0
  %3294 = vmatprep.subr.mxu0 0.0
  %3295 = vmatpush1.msra.mxu0 0.0
  %3296 = vmatprep.subr.mxu0 0.0
  %3297 = vmatpush1.msra.mxu0 0.0
  %3298 = vmatprep.subr.mxu0 0.0
  %3299 = vmatpush1.msra.mxu0 0.0
  %3300 = vmatprep.subr.mxu0 0.0
  %3301 = vmatpush1.msra.mxu0 0.0
  %3302 = vmatprep.subr.mxu0 0.0
  %3303 = vmatpush1.msra.mxu0 0.0
  %3304 = vmatprep.subr.mxu0 0.0
  %3305 = vmatpush1.msra.mxu0 0.0
  %3306 = vmatprep.subr.mxu0 0.0
  %3307 = vmatpush1.msra.mxu0 0.0
  %3308 = vmatprep.subr.mxu0 0.0
  %3309 = vmatpush1.msra.mxu0 0.0
  %3310 = vmatprep.subr.mxu0 0.0
  %3311 = vmatpush1.msra.mxu0 0.0
  %3312 = vmatprep.subr.mxu0 0.0
  %3313 = vmatpush1.msra.mxu0 0.0
  %3314 = vmatprep.subr.mxu0 0.0
  %3315 = vmatpush1.msra.mxu0 0.0
  %3316 = vmatprep.subr.mxu0 0.0
  %3317 = vmatpush1.msra.mxu0 0.0
  %3318 = vmatprep.subr.mxu0 0.0
  %3319 = vmatpush1.msra.mxu0 0.0
  %3320 = vmatprep.subr.mxu0 0.0
  %3321 = vmatpush1.msra.mxu0 0.0
  %3322 = vmatprep.mubr.f32.mxu0 0.0
  %3323 = vmatmul.mubr.f32.gmra.mrb[0].mxu0 %v3247
  %v3324 = vpop.f32.mrb[0].mxu0
  %v3325 = vadd.f32 0.0, %v3324
  %v3326 = vpop.f32.mrb[0].mxu0
  %v3327 = vadd.f32 0.0, %v3326
  %3328 = vmatprep.mubr.f32.mxu0 0.0
  %3329 = vmatmul.mubr.f32.gmra.mrb[0].mxu0 %v3250
  %v3330 = vpop.f32.mrb[0].mxu0
  %v3331 = vadd.f32 0.0, %v3330
  %v3332 = vpop.f32.mrb[0].mxu0
  %v3333 = vadd.f32 0.0, %v3332
  %3334 = vmatprep.mubr.f32.mxu0 0.0
  %3335 = vmatmul.mubr.f32.gmra.mrb[0].mxu0 %v3253
  %v3336 = vpop.f32.mrb[0].mxu0
  %v3337 = vadd.f32 0.0, %v3336
  %v3338 = vpop.f32.mrb[0].mxu0
  %v3339 = vadd.f32 0.0, %v3338
  %3340 = vmatprep.mubr.f32.mxu0 0.0
  %3341 = vmatmul.mubr.f32.gmra.mrb[0].mxu0 %v3256
  %v3342 = vpop.f32.mrb[0].mxu0
  %v3343 = vadd.f32 0.0, %v3342
  %v3344 = vpop.f32.mrb[0].mxu0
  %v3345 = vadd.f32 0.0, %v3344
  %3346 = vdwg.mxu0
  %3347 = vmatprep.subr.mxu0 %v3241
  %3348 = vmatpush1.msra.mxu0 %v3240
  %3349 = vmatprep.subr.mxu0 %v3245
  %3350 = vmatpush1.msra.mxu0 %v3244
  %3351 = vmatprep.subr.mxu0 0.0
  %3352 = vmatpush1.msra.mxu0 0.0
  %3353 = vmatprep.subr.mxu0 0.0
  %3354 = vmatpush1.msra.mxu0 0.0
  %3355 = vmatprep.subr.mxu0 0.0
  %3356 = vmatpush1.msra.mxu0 0.0
  %3357 = vmatprep.subr.mxu0 0.0
  %3358 = vmatpush1.msra.mxu0 0.0
  %3359 = vmatprep.subr.mxu0 0.0
  %3360 = vmatpush1.msra.mxu0 0.0
  %3361 = vmatprep.subr.mxu0 0.0
  %3362 = vmatpush1.msra.mxu0 0.0
  %3363 = vmatprep.subr.mxu0 0.0
  %3364 = vmatpush1.msra.mxu0 0.0
  %3365 = vmatprep.subr.mxu0 0.0
  %3366 = vmatpush1.msra.mxu0 0.0
  %3367 = vmatprep.subr.mxu0 0.0
  %3368 = vmatpush1.msra.mxu0 0.0
  %3369 = vmatprep.subr.mxu0 0.0
  %3370 = vmatpush1.msra.mxu0 0.0
  %3371 = vmatprep.subr.mxu0 0.0
  %3372 = vmatpush1.msra.mxu0 0.0
  %3373 = vmatprep.subr.mxu0 0.0
  %3374 = vmatpush1.msra.mxu0 0.0
  %3375 = vmatprep.subr.mxu0 0.0
  %3376 = vmatpush1.msra.mxu0 0.0
  %3377 = vmatprep.subr.mxu0 0.0
  %3378 = vmatpush1.msra.mxu0 0.0
  %3379 = vmatprep.subr.mxu0 0.0
  %3380 = vmatpush1.msra.mxu0 0.0
  %3381 = vmatprep.subr.mxu0 0.0
  %3382 = vmatpush1.msra.mxu0 0.0
  %3383 = vmatprep.subr.mxu0 0.0
  %3384 = vmatpush1.msra.mxu0 0.0
  %3385 = vmatprep.subr.mxu0 0.0
  %3386 = vmatpush1.msra.mxu0 0.0
  %3387 = vmatprep.subr.mxu0 0.0
  %3388 = vmatpush1.msra.mxu0 0.0
  %3389 = vmatprep.subr.mxu0 0.0
  %3390 = vmatpush1.msra.mxu0 0.0
  %3391 = vmatprep.subr.mxu0 0.0
  %3392 = vmatpush1.msra.mxu0 0.0
  %3393 = vmatprep.subr.mxu0 0.0
  %3394 = vmatpush1.msra.mxu0 0.0
  %3395 = vmatprep.subr.mxu0 0.0
  %3396 = vmatpush1.msra.mxu0 0.0
  %3397 = vmatprep.subr.mxu0 0.0
  %3398 = vmatpush1.msra.mxu0 0.0
  %3399 = vmatprep.subr.mxu0 0.0
  %3400 = vmatpush1.msra.mxu0 0.0
  %3401 = vmatprep.subr.mxu0 0.0
  %3402 = vmatpush1.msra.mxu0 0.0
  %3403 = vmatprep.subr.mxu0 0.0
  %3404 = vmatpush1.msra.mxu0 0.0
  %3405 = vmatprep.subr.mxu0 0.0
  %3406 = vmatpush1.msra.mxu0 0.0
  %3407 = vmatprep.subr.mxu0 0.0
  %3408 = vmatpush1.msra.mxu0 0.0
  %3409 = vmatprep.subr.mxu0 0.0
  %3410 = vmatpush1.msra.mxu0 0.0
  %3411 = vmatprep.mubr.f32.mxu0 0.0
  %3412 = vmatmul.mubr.f32.gmra.mrb[0].mxu0 %v3247
  %v3413 = vpop.f32.mrb[0].mxu0
  %v3414 = vadd.f32 0.0, %v3413
  %v3415 = vpop.f32.mrb[0].mxu0
  %v3416 = vadd.f32 0.0, %v3415
  %3417 = vmatprep.mubr.f32.mxu0 0.0
  %3418 = vmatmul.mubr.f32.gmra.mrb[0].mxu0 %v3250
  %v3419 = vpop.f32.mrb[0].mxu0
  %v3420 = vadd.f32 0.0, %v3419
  %v3421 = vpop.f32.mrb[0].mxu0
  %v3422 = vadd.f32 0.0, %v3421
  %3423 = vmatprep.mubr.f32.mxu0 0.0
  %3424 = vmatmul.mubr.f32.gmra.mrb[0].mxu0 %v3253
  %v3425 = vpop.f32.mrb[0].mxu0
  %v3426 = vadd.f32 0.0, %v3425
  %v3427 = vpop.f32.mrb[0].mxu0
  %v3428 = vadd.f32 0.0, %v3427
  %3429 = vmatprep.mubr.f32.mxu0 0.0
  %3430 = vmatmul.mubr.f32.gmra.mrb[0].mxu0 %v3256
  %v3431 = vpop.f32.mrb[0].mxu0
  %v3432 = vadd.f32 0.0, %v3431
  %v3433 = vpop.f32.mrb[0].mxu0
  %v3434 = vadd.f32 0.0, %v3433
  %3435 = vdwg.mxu0
  %v3436 = vadd.f32 %v3193, %v3325
  %v3437 = vadd.f32 %v3194, %v3327
  %v3438 = vadd.f32 %v3195, %v3414
  %v3439 = vadd.f32 %v3196, %v3416
  %v3440 = vadd.f32 %v3197, %v3331
  %v3441 = vadd.f32 %v3198, %v3333
  %v3442 = vadd.f32 %v3199, %v3420
  %v3443 = vadd.f32 %v3200, %v3422
  %v3444 = vadd.f32 %v3201, %v3337
  %v3445 = vadd.f32 %v3202, %v3339
  %v3446 = vadd.f32 %v3203, %v3426
  %v3447 = vadd.f32 %v3204, %v3428
  %v3448 = vadd.f32 %v3205, %v3343
  %v3449 = vadd.f32 %v3206, %v3345
  %v3450 = vadd.f32 %v3207, %v3432
  %v3451 = vadd.f32 %v3208, %v3434
  %3452 = vrot.lane.b32.xlu0 %v2038, 113
  %v3453 = vpop.permute.xlu0 %3452
  %3454 = vrot.lane.b32.xlu0 %v2042, 113
  %v3455 = vpop.permute.xlu0 %3454
  %3456 = vrot.lane.b32.xlu0 %v2039, 113
  %v3457 = vpop.permute.xlu0 %3456
  %3458 = vrot.lane.b32.xlu0 %v2043, 113
  %v3459 = vpop.permute.xlu0 %3458
  %3460 = vrot.lane.b32.xlu0 %v2040, 113
  %v3461 = vpop.permute.xlu0 %3460
  %3462 = vrot.lane.b32.xlu0 %v2044, 113
  %v3463 = vpop.permute.xlu0 %3462
  %3464 = vrot.lane.b32.xlu0 %v2041, 113
  %v3465 = vpop.permute.xlu0 %3464
  %3466 = vrot.lane.b32.xlu0 %v2045, 113
  %v3467 = vpop.permute.xlu0 %3466
  %v3468 = vsel %vm1357, %v3461, %v3465
  %v3469 = vsel %vm1357, %v3463, %v3467
  %v3470 = vsel %vm1357, %v3457, %v3461
  %v3471 = vsel %vm1357, %v3459, %v3463
  %v3472 = vsel %vm1357, %v3453, %v3457
  %v3473 = vsel %vm1357, %v3455, %v3459
  %v3474 = vsel %vm1357, %v3465, %v3453
  %v3475 = vsel %vm1357, %v3467, %v3455
  %s3476 = scalar_lea.vmem %s4, 192
  %v3477 = vld [vmem:[%s3476] sm:$0xff]
  %v3478 = vld [vmem:[%s3476 + $0x8] sm:$0xff]
  %v3479 = vld [vmem:[%s3476 + $0x10] sm:$0xff]
  %v3480 = vld [vmem:[%s3476 + $0x18] sm:$0xff]
  %v3481 = vmul.f32 %v3472, %v1371
  %v3482 = vmul.f32 %v3470, %v1375
  %v3483 = vmul.f32 %v3468, %v1379
  %v3484 = vmul.f32 %v3474, %v1383
  %v3485 = vmul.f32 %v3473, %v1371
  %v3486 = vmul.f32 %v3471, %v1375
  %v3487 = vmul.f32 %v3469, %v1379
  %v3488 = vmul.f32 %v3475, %v1383
  %v3490 = vsel %vm2119, %v3477, 0
  %v3493 = vsel %vm2119, %v3478, 0
  %v3496 = vsel %vm2119, %v3479, 0
  %v3499 = vsel %vm2119, %v3480, 0
  %3501 = vmatprep.subr.mxu0 %v3482
  %3502 = vmatpush1.msra.mxu0 %v3481
  %3503 = vmatprep.subr.mxu0 %v3486
  %3504 = vmatpush1.msra.mxu0 %v3485
  %3505 = vmatprep.subr.mxu0 0.0
  %3506 = vmatpush1.msra.mxu0 0.0
  %3507 = vmatprep.subr.mxu0 0.0
  %3508 = vmatpush1.msra.mxu0 0.0
  %3509 = vmatprep.subr.mxu0 0.0
  %3510 = vmatpush1.msra.mxu0 0.0
  %3511 = vmatprep.subr.mxu0 0.0
  %3512 = vmatpush1.msra.mxu0 0.0
  %3513 = vmatprep.subr.mxu0 0.0
  %3514 = vmatpush1.msra.mxu0 0.0
  %3515 = vmatprep.subr.mxu0 0.0
  %3516 = vmatpush1.msra.mxu0 0.0
  %3517 = vmatprep.subr.mxu0 0.0
  %3518 = vmatpush1.msra.mxu0 0.0
  %3519 = vmatprep.subr.mxu0 0.0
  %3520 = vmatpush1.msra.mxu0 0.0
  %3521 = vmatprep.subr.mxu0 0.0
  %3522 = vmatpush1.msra.mxu0 0.0
  %3523 = vmatprep.subr.mxu0 0.0
  %3524 = vmatpush1.msra.mxu0 0.0
  %3525 = vmatprep.subr.mxu0 0.0
  %3526 = vmatpush1.msra.mxu0 0.0
  %3527 = vmatprep.subr.mxu0 0.0
  %3528 = vmatpush1.msra.mxu0 0.0
  %3529 = vmatprep.subr.mxu0 0.0
  %3530 = vmatpush1.msra.mxu0 0.0
  %3531 = vmatprep.subr.mxu0 0.0
  %3532 = vmatpush1.msra.mxu0 0.0
  %3533 = vmatprep.subr.mxu0 0.0
  %3534 = vmatpush1.msra.mxu0 0.0
  %3535 = vmatprep.subr.mxu0 0.0
  %3536 = vmatpush1.msra.mxu0 0.0
  %3537 = vmatprep.subr.mxu0 0.0
  %3538 = vmatpush1.msra.mxu0 0.0
  %3539 = vmatprep.subr.mxu0 0.0
  %3540 = vmatpush1.msra.mxu0 0.0
  %3541 = vmatprep.subr.mxu0 0.0
  %3542 = vmatpush1.msra.mxu0 0.0
  %3543 = vmatprep.subr.mxu0 0.0
  %3544 = vmatpush1.msra.mxu0 0.0
  %3545 = vmatprep.subr.mxu0 0.0
  %3546 = vmatpush1.msra.mxu0 0.0
  %3547 = vmatprep.subr.mxu0 0.0
  %3548 = vmatpush1.msra.mxu0 0.0
  %3549 = vmatprep.subr.mxu0 0.0
  %3550 = vmatpush1.msra.mxu0 0.0
  %3551 = vmatprep.subr.mxu0 0.0
  %3552 = vmatpush1.msra.mxu0 0.0
  %3553 = vmatprep.subr.mxu0 0.0
  %3554 = vmatpush1.msra.mxu0 0.0
  %3555 = vmatprep.subr.mxu0 0.0
  %3556 = vmatpush1.msra.mxu0 0.0
  %3557 = vmatprep.subr.mxu0 0.0
  %3558 = vmatpush1.msra.mxu0 0.0
  %3559 = vmatprep.subr.mxu0 0.0
  %3560 = vmatpush1.msra.mxu0 0.0
  %3561 = vmatprep.subr.mxu0 0.0
  %3562 = vmatpush1.msra.mxu0 0.0
  %3563 = vmatprep.subr.mxu0 0.0
  %3564 = vmatpush1.msra.mxu0 0.0
  %3565 = vmatprep.mubr.f32.mxu0 0.0
  %3566 = vmatmul.mubr.f32.gmra.mrb[0].mxu0 %v3490
  %v3567 = vpop.f32.mrb[0].mxu0
  %v3568 = vadd.f32 0.0, %v3567
  %v3569 = vpop.f32.mrb[0].mxu0
  %v3570 = vadd.f32 0.0, %v3569
  %3571 = vmatprep.mubr.f32.mxu0 0.0
  %3572 = vmatmul.mubr.f32.gmra.mrb[0].mxu0 %v3493
  %v3573 = vpop.f32.mrb[0].mxu0
  %v3574 = vadd.f32 0.0, %v3573
  %v3575 = vpop.f32.mrb[0].mxu0
  %v3576 = vadd.f32 0.0, %v3575
  %3577 = vmatprep.mubr.f32.mxu0 0.0
  %3578 = vmatmul.mubr.f32.gmra.mrb[0].mxu0 %v3496
  %v3579 = vpop.f32.mrb[0].mxu0
  %v3580 = vadd.f32 0.0, %v3579
  %v3581 = vpop.f32.mrb[0].mxu0
  %v3582 = vadd.f32 0.0, %v3581
  %3583 = vmatprep.mubr.f32.mxu0 0.0
  %3584 = vmatmul.mubr.f32.gmra.mrb[0].mxu0 %v3499
  %v3585 = vpop.f32.mrb[0].mxu0
  %v3586 = vadd.f32 0.0, %v3585
  %v3587 = vpop.f32.mrb[0].mxu0
  %v3588 = vadd.f32 0.0, %v3587
  %3589 = vdwg.mxu0
  %3590 = vmatprep.subr.mxu0 %v3484
  %3591 = vmatpush1.msra.mxu0 %v3483
  %3592 = vmatprep.subr.mxu0 %v3488
  %3593 = vmatpush1.msra.mxu0 %v3487
  %3594 = vmatprep.subr.mxu0 0.0
  %3595 = vmatpush1.msra.mxu0 0.0
  %3596 = vmatprep.subr.mxu0 0.0
  %3597 = vmatpush1.msra.mxu0 0.0
  %3598 = vmatprep.subr.mxu0 0.0
  %3599 = vmatpush1.msra.mxu0 0.0
  %3600 = vmatprep.subr.mxu0 0.0
  %3601 = vmatpush1.msra.mxu0 0.0
  %3602 = vmatprep.subr.mxu0 0.0
  %3603 = vmatpush1.msra.mxu0 0.0
  %3604 = vmatprep.subr.mxu0 0.0
  %3605 = vmatpush1.msra.mxu0 0.0
  %3606 = vmatprep.subr.mxu0 0.0
  %3607 = vmatpush1.msra.mxu0 0.0
  %3608 = vmatprep.subr.mxu0 0.0
  %3609 = vmatpush1.msra.mxu0 0.0
  %3610 = vmatprep.subr.mxu0 0.0
  %3611 = vmatpush1.msra.mxu0 0.0
  %3612 = vmatprep.subr.mxu0 0.0
  %3613 = vmatpush1.msra.mxu0 0.0
  %3614 = vmatprep.subr.mxu0 0.0
  %3615 = vmatpush1.msra.mxu0 0.0
  %3616 = vmatprep.subr.mxu0 0.0
  %3617 = vmatpush1.msra.mxu0 0.0
  %3618 = vmatprep.subr.mxu0 0.0
  %3619 = vmatpush1.msra.mxu0 0.0
  %3620 = vmatprep.subr.mxu0 0.0
  %3621 = vmatpush1.msra.mxu0 0.0
  %3622 = vmatprep.subr.mxu0 0.0
  %3623 = vmatpush1.msra.mxu0 0.0
  %3624 = vmatprep.subr.mxu0 0.0
  %3625 = vmatpush1.msra.mxu0 0.0
  %3626 = vmatprep.subr.mxu0 0.0
  %3627 = vmatpush1.msra.mxu0 0.0
  %3628 = vmatprep.subr.mxu0 0.0
  %3629 = vmatpush1.msra.mxu0 0.0
  %3630 = vmatprep.subr.mxu0 0.0
  %3631 = vmatpush1.msra.mxu0 0.0
  %3632 = vmatprep.subr.mxu0 0.0
  %3633 = vmatpush1.msra.mxu0 0.0
  %3634 = vmatprep.subr.mxu0 0.0
  %3635 = vmatpush1.msra.mxu0 0.0
  %3636 = vmatprep.subr.mxu0 0.0
  %3637 = vmatpush1.msra.mxu0 0.0
  %3638 = vmatprep.subr.mxu0 0.0
  %3639 = vmatpush1.msra.mxu0 0.0
  %3640 = vmatprep.subr.mxu0 0.0
  %3641 = vmatpush1.msra.mxu0 0.0
  %3642 = vmatprep.subr.mxu0 0.0
  %3643 = vmatpush1.msra.mxu0 0.0
  %3644 = vmatprep.subr.mxu0 0.0
  %3645 = vmatpush1.msra.mxu0 0.0
  %3646 = vmatprep.subr.mxu0 0.0
  %3647 = vmatpush1.msra.mxu0 0.0
  %3648 = vmatprep.subr.mxu0 0.0
  %3649 = vmatpush1.msra.mxu0 0.0
  %3650 = vmatprep.subr.mxu0 0.0
  %3651 = vmatpush1.msra.mxu0 0.0
  %3652 = vmatprep.subr.mxu0 0.0
  %3653 = vmatpush1.msra.mxu0 0.0
  %3654 = vmatprep.mubr.f32.mxu0 0.0
  %3655 = vmatmul.mubr.f32.gmra.mrb[0].mxu0 %v3490
  %v3656 = vpop.f32.mrb[0].mxu0
  %v3657 = vadd.f32 0.0, %v3656
  %v3658 = vpop.f32.mrb[0].mxu0
  %v3659 = vadd.f32 0.0, %v3658
  %3660 = vmatprep.mubr.f32.mxu0 0.0
  %3661 = vmatmul.mubr.f32.gmra.mrb[0].mxu0 %v3493
  %v3662 = vpop.f32.mrb[0].mxu0
  %v3663 = vadd.f32 0.0, %v3662
  %v3664 = vpop.f32.mrb[0].mxu0
  %v3665 = vadd.f32 0.0, %v3664
  %3666 = vmatprep.mubr.f32.mxu0 0.0
  %3667 = vmatmul.mubr.f32.gmra.mrb[0].mxu0 %v3496
  %v3668 = vpop.f32.mrb[0].mxu0
  %v3669 = vadd.f32 0.0, %v3668
  %v3670 = vpop.f32.mrb[0].mxu0
  %v3671 = vadd.f32 0.0, %v3670
  %3672 = vmatprep.mubr.f32.mxu0 0.0
  %3673 = vmatmul.mubr.f32.gmra.mrb[0].mxu0 %v3499
  %v3674 = vpop.f32.mrb[0].mxu0
  %v3675 = vadd.f32 0.0, %v3674
  %v3676 = vpop.f32.mrb[0].mxu0
  %v3677 = vadd.f32 0.0, %v3676
  %3678 = vdwg.mxu0
  %v3679 = vadd.f32 %v3436, %v3568
  %v3680 = vadd.f32 %v3437, %v3570
  %v3681 = vadd.f32 %v3438, %v3657
  %v3682 = vadd.f32 %v3439, %v3659
  %v3683 = vadd.f32 %v3440, %v3574
  %v3684 = vadd.f32 %v3441, %v3576
  %v3685 = vadd.f32 %v3442, %v3663
  %v3686 = vadd.f32 %v3443, %v3665
  %v3687 = vadd.f32 %v3444, %v3580
  %v3688 = vadd.f32 %v3445, %v3582
  %v3689 = vadd.f32 %v3446, %v3669
  %v3690 = vadd.f32 %v3447, %v3671
  %v3691 = vadd.f32 %v3448, %v3586
  %v3692 = vadd.f32 %v3449, %v3588
  %v3693 = vadd.f32 %v3450, %v3675
  %v3694 = vadd.f32 %v3451, %v3677
  %3695 = vrot.lane.b32.xlu0 %v2038, 112
  %v3696 = vpop.permute.xlu0 %3695
  %3697 = vrot.lane.b32.xlu0 %v2042, 112
  %v3698 = vpop.permute.xlu0 %3697
  %3699 = vrot.lane.b32.xlu0 %v2039, 112
  %v3700 = vpop.permute.xlu0 %3699
  %3701 = vrot.lane.b32.xlu0 %v2043, 112
  %v3702 = vpop.permute.xlu0 %3701
  %3703 = vrot.lane.b32.xlu0 %v2040, 112
  %v3704 = vpop.permute.xlu0 %3703
  %3705 = vrot.lane.b32.xlu0 %v2044, 112
  %v3706 = vpop.permute.xlu0 %3705
  %3707 = vrot.lane.b32.xlu0 %v2041, 112
  %v3708 = vpop.permute.xlu0 %3707
  %3709 = vrot.lane.b32.xlu0 %v2045, 112
  %v3710 = vpop.permute.xlu0 %3709
  %v3711 = vsel %vm1580, %v3704, %v3708
  %v3712 = vsel %vm1580, %v3706, %v3710
  %v3713 = vsel %vm1580, %v3700, %v3704
  %v3714 = vsel %vm1580, %v3702, %v3706
  %v3715 = vsel %vm1580, %v3696, %v3700
  %v3716 = vsel %vm1580, %v3698, %v3702
  %v3717 = vsel %vm1580, %v3708, %v3696
  %v3718 = vsel %vm1580, %v3710, %v3698
  %s3719 = scalar_lea.vmem %s4, 224
  %v3720 = vld [vmem:[%s3719] sm:$0xff]
  %v3721 = vld [vmem:[%s3719 + $0x8] sm:$0xff]
  %v3722 = vld [vmem:[%s3719 + $0x10] sm:$0xff]
  %v3723 = vld [vmem:[%s3719 + $0x18] sm:$0xff]
  %v3724 = vmul.f32 %v3715, %v1594
  %v3725 = vmul.f32 %v3713, %v1598
  %v3726 = vmul.f32 %v3711, %v1602
  %v3727 = vmul.f32 %v3717, %v1606
  %v3728 = vmul.f32 %v3716, %v1594
  %v3729 = vmul.f32 %v3714, %v1598
  %v3730 = vmul.f32 %v3712, %v1602
  %v3731 = vmul.f32 %v3718, %v1606
  %v3733 = vsel %vm2119, %v3720, 0
  %v3736 = vsel %vm2119, %v3721, 0
  %v3739 = vsel %vm2119, %v3722, 0
  %v3742 = vsel %vm2119, %v3723, 0
  %3744 = vmatprep.subr.mxu0 %v3725
  %3745 = vmatpush1.msra.mxu0 %v3724
  %3746 = vmatprep.subr.mxu0 %v3729
  %3747 = vmatpush1.msra.mxu0 %v3728
  %3748 = vmatprep.subr.mxu0 0.0
  %3749 = vmatpush1.msra.mxu0 0.0
  %3750 = vmatprep.subr.mxu0 0.0
  %3751 = vmatpush1.msra.mxu0 0.0
  %3752 = vmatprep.subr.mxu0 0.0
  %3753 = vmatpush1.msra.mxu0 0.0
  %3754 = vmatprep.subr.mxu0 0.0
  %3755 = vmatpush1.msra.mxu0 0.0
  %3756 = vmatprep.subr.mxu0 0.0
  %3757 = vmatpush1.msra.mxu0 0.0
  %3758 = vmatprep.subr.mxu0 0.0
  %3759 = vmatpush1.msra.mxu0 0.0
  %3760 = vmatprep.subr.mxu0 0.0
  %3761 = vmatpush1.msra.mxu0 0.0
  %3762 = vmatprep.subr.mxu0 0.0
  %3763 = vmatpush1.msra.mxu0 0.0
  %3764 = vmatprep.subr.mxu0 0.0
  %3765 = vmatpush1.msra.mxu0 0.0
  %3766 = vmatprep.subr.mxu0 0.0
  %3767 = vmatpush1.msra.mxu0 0.0
  %3768 = vmatprep.subr.mxu0 0.0
  %3769 = vmatpush1.msra.mxu0 0.0
  %3770 = vmatprep.subr.mxu0 0.0
  %3771 = vmatpush1.msra.mxu0 0.0
  %3772 = vmatprep.subr.mxu0 0.0
  %3773 = vmatpush1.msra.mxu0 0.0
  %3774 = vmatprep.subr.mxu0 0.0
  %3775 = vmatpush1.msra.mxu0 0.0
  %3776 = vmatprep.subr.mxu0 0.0
  %3777 = vmatpush1.msra.mxu0 0.0
  %3778 = vmatprep.subr.mxu0 0.0
  %3779 = vmatpush1.msra.mxu0 0.0
  %3780 = vmatprep.subr.mxu0 0.0
  %3781 = vmatpush1.msra.mxu0 0.0
  %3782 = vmatprep.subr.mxu0 0.0
  %3783 = vmatpush1.msra.mxu0 0.0
  %3784 = vmatprep.subr.mxu0 0.0
  %3785 = vmatpush1.msra.mxu0 0.0
  %3786 = vmatprep.subr.mxu0 0.0
  %3787 = vmatpush1.msra.mxu0 0.0
  %3788 = vmatprep.subr.mxu0 0.0
  %3789 = vmatpush1.msra.mxu0 0.0
  %3790 = vmatprep.subr.mxu0 0.0
  %3791 = vmatpush1.msra.mxu0 0.0
  %3792 = vmatprep.subr.mxu0 0.0
  %3793 = vmatpush1.msra.mxu0 0.0
  %3794 = vmatprep.subr.mxu0 0.0
  %3795 = vmatpush1.msra.mxu0 0.0
  %3796 = vmatprep.subr.mxu0 0.0
  %3797 = vmatpush1.msra.mxu0 0.0
  %3798 = vmatprep.subr.mxu0 0.0
  %3799 = vmatpush1.msra.mxu0 0.0
  %3800 = vmatprep.subr.mxu0 0.0
  %3801 = vmatpush1.msra.mxu0 0.0
  %3802 = vmatprep.subr.mxu0 0.0
  %3803 = vmatpush1.msra.mxu0 0.0
  %3804 = vmatprep.subr.mxu0 0.0
  %3805 = vmatpush1.msra.mxu0 0.0
  %3806 = vmatprep.subr.mxu0 0.0
  %3807 = vmatpush1.msra.mxu0 0.0
  %3808 = vmatprep.mubr.f32.mxu0 0.0
  %3809 = vmatmul.mubr.f32.gmra.mrb[0].mxu0 %v3733
  %v3810 = vpop.f32.mrb[0].mxu0
  %v3811 = vadd.f32 0.0, %v3810
  %v3812 = vpop.f32.mrb[0].mxu0
  %v3813 = vadd.f32 0.0, %v3812
  %3814 = vmatprep.mubr.f32.mxu0 0.0
  %3815 = vmatmul.mubr.f32.gmra.mrb[0].mxu0 %v3736
  %v3816 = vpop.f32.mrb[0].mxu0
  %v3817 = vadd.f32 0.0, %v3816
  %v3818 = vpop.f32.mrb[0].mxu0
  %v3819 = vadd.f32 0.0, %v3818
  %3820 = vmatprep.mubr.f32.mxu0 0.0
  %3821 = vmatmul.mubr.f32.gmra.mrb[0].mxu0 %v3739
  %v3822 = vpop.f32.mrb[0].mxu0
  %v3823 = vadd.f32 0.0, %v3822
  %v3824 = vpop.f32.mrb[0].mxu0
  %v3825 = vadd.f32 0.0, %v3824
  %3826 = vmatprep.mubr.f32.mxu0 0.0
  %3827 = vmatmul.mubr.f32.gmra.mrb[0].mxu0 %v3742
  %v3828 = vpop.f32.mrb[0].mxu0
  %v3829 = vadd.f32 0.0, %v3828
  %v3830 = vpop.f32.mrb[0].mxu0
  %v3831 = vadd.f32 0.0, %v3830
  %3832 = vdwg.mxu0
  %3833 = vmatprep.subr.mxu0 %v3727
  %3834 = vmatpush1.msra.mxu0 %v3726
  %3835 = vmatprep.subr.mxu0 %v3731
  %3836 = vmatpush1.msra.mxu0 %v3730
  %3837 = vmatprep.subr.mxu0 0.0
  %3838 = vmatpush1.msra.mxu0 0.0
  %3839 = vmatprep.subr.mxu0 0.0
  %3840 = vmatpush1.msra.mxu0 0.0
  %3841 = vmatprep.subr.mxu0 0.0
  %3842 = vmatpush1.msra.mxu0 0.0
  %3843 = vmatprep.subr.mxu0 0.0
  %3844 = vmatpush1.msra.mxu0 0.0
  %3845 = vmatprep.subr.mxu0 0.0
  %3846 = vmatpush1.msra.mxu0 0.0
  %3847 = vmatprep.subr.mxu0 0.0
  %3848 = vmatpush1.msra.mxu0 0.0
  %3849 = vmatprep.subr.mxu0 0.0
  %3850 = vmatpush1.msra.mxu0 0.0
  %3851 = vmatprep.subr.mxu0 0.0
  %3852 = vmatpush1.msra.mxu0 0.0
  %3853 = vmatprep.subr.mxu0 0.0
  %3854 = vmatpush1.msra.mxu0 0.0
  %3855 = vmatprep.subr.mxu0 0.0
  %3856 = vmatpush1.msra.mxu0 0.0
  %3857 = vmatprep.subr.mxu0 0.0
  %3858 = vmatpush1.msra.mxu0 0.0
  %3859 = vmatprep.subr.mxu0 0.0
  %3860 = vmatpush1.msra.mxu0 0.0
  %3861 = vmatprep.subr.mxu0 0.0
  %3862 = vmatpush1.msra.mxu0 0.0
  %3863 = vmatprep.subr.mxu0 0.0
  %3864 = vmatpush1.msra.mxu0 0.0
  %3865 = vmatprep.subr.mxu0 0.0
  %3866 = vmatpush1.msra.mxu0 0.0
  %3867 = vmatprep.subr.mxu0 0.0
  %3868 = vmatpush1.msra.mxu0 0.0
  %3869 = vmatprep.subr.mxu0 0.0
  %3870 = vmatpush1.msra.mxu0 0.0
  %3871 = vmatprep.subr.mxu0 0.0
  %3872 = vmatpush1.msra.mxu0 0.0
  %3873 = vmatprep.subr.mxu0 0.0
  %3874 = vmatpush1.msra.mxu0 0.0
  %3875 = vmatprep.subr.mxu0 0.0
  %3876 = vmatpush1.msra.mxu0 0.0
  %3877 = vmatprep.subr.mxu0 0.0
  %3878 = vmatpush1.msra.mxu0 0.0
  %3879 = vmatprep.subr.mxu0 0.0
  %3880 = vmatpush1.msra.mxu0 0.0
  %3881 = vmatprep.subr.mxu0 0.0
  %3882 = vmatpush1.msra.mxu0 0.0
  %3883 = vmatprep.subr.mxu0 0.0
  %3884 = vmatpush1.msra.mxu0 0.0
  %3885 = vmatprep.subr.mxu0 0.0
  %3886 = vmatpush1.msra.mxu0 0.0
  %3887 = vmatprep.subr.mxu0 0.0
  %3888 = vmatpush1.msra.mxu0 0.0
  %3889 = vmatprep.subr.mxu0 0.0
  %3890 = vmatpush1.msra.mxu0 0.0
  %3891 = vmatprep.subr.mxu0 0.0
  %3892 = vmatpush1.msra.mxu0 0.0
  %3893 = vmatprep.subr.mxu0 0.0
  %3894 = vmatpush1.msra.mxu0 0.0
  %3895 = vmatprep.subr.mxu0 0.0
  %3896 = vmatpush1.msra.mxu0 0.0
  %3897 = vmatprep.mubr.f32.mxu0 0.0
  %3898 = vmatmul.mubr.f32.gmra.mrb[0].mxu0 %v3733
  %v3899 = vpop.f32.mrb[0].mxu0
  %v3900 = vadd.f32 0.0, %v3899
  %v3901 = vpop.f32.mrb[0].mxu0
  %v3902 = vadd.f32 0.0, %v3901
  %3903 = vmatprep.mubr.f32.mxu0 0.0
  %3904 = vmatmul.mubr.f32.gmra.mrb[0].mxu0 %v3736
  %v3905 = vpop.f32.mrb[0].mxu0
  %v3906 = vadd.f32 0.0, %v3905
  %v3907 = vpop.f32.mrb[0].mxu0
  %v3908 = vadd.f32 0.0, %v3907
  %3909 = vmatprep.mubr.f32.mxu0 0.0
  %3910 = vmatmul.mubr.f32.gmra.mrb[0].mxu0 %v3739
  %v3911 = vpop.f32.mrb[0].mxu0
  %v3912 = vadd.f32 0.0, %v3911
  %v3913 = vpop.f32.mrb[0].mxu0
  %v3914 = vadd.f32 0.0, %v3913
  %3915 = vmatprep.mubr.f32.mxu0 0.0
  %3916 = vmatmul.mubr.f32.gmra.mrb[0].mxu0 %v3742
  %v3917 = vpop.f32.mrb[0].mxu0
  %v3918 = vadd.f32 0.0, %v3917
  %v3919 = vpop.f32.mrb[0].mxu0
  %v3920 = vadd.f32 0.0, %v3919
  %3921 = vdwg.mxu0
  %v3922 = vadd.f32 %v3679, %v3811
  %v3923 = vadd.f32 %v3680, %v3813
  %v3924 = vadd.f32 %v3681, %v3900
  %v3925 = vadd.f32 %v3682, %v3902
  %v3926 = vadd.f32 %v3683, %v3817
  %v3927 = vadd.f32 %v3684, %v3819
  %v3928 = vadd.f32 %v3685, %v3906
  %v3929 = vadd.f32 %v3686, %v3908
  %v3930 = vadd.f32 %v3687, %v3823
  %v3931 = vadd.f32 %v3688, %v3825
  %v3932 = vadd.f32 %v3689, %v3912
  %v3933 = vadd.f32 %v3690, %v3914
  %v3934 = vadd.f32 %v3691, %v3829
  %v3935 = vadd.f32 %v3692, %v3831
  %v3936 = vadd.f32 %v3693, %v3918
  %v3937 = vadd.f32 %v3694, %v3920
  %3938 = vrot.lane.b32.xlu0 %v2038, 111
  %v3939 = vpop.permute.xlu0 %3938
  %3940 = vrot.lane.b32.xlu0 %v2042, 111
  %v3941 = vpop.permute.xlu0 %3940
  %3942 = vrot.lane.b32.xlu0 %v2039, 111
  %v3943 = vpop.permute.xlu0 %3942
  %3944 = vrot.lane.b32.xlu0 %v2043, 111
  %v3945 = vpop.permute.xlu0 %3944
  %3946 = vrot.lane.b32.xlu0 %v2040, 111
  %v3947 = vpop.permute.xlu0 %3946
  %3948 = vrot.lane.b32.xlu0 %v2044, 111
  %v3949 = vpop.permute.xlu0 %3948
  %3950 = vrot.lane.b32.xlu0 %v2041, 111
  %v3951 = vpop.permute.xlu0 %3950
  %3952 = vrot.lane.b32.xlu0 %v2045, 111
  %v3953 = vpop.permute.xlu0 %3952
  %v3954 = vsel %vm1803, %v3947, %v3951
  %v3955 = vsel %vm1803, %v3949, %v3953
  %v3956 = vsel %vm1803, %v3943, %v3947
  %v3957 = vsel %vm1803, %v3945, %v3949
  %v3958 = vsel %vm1803, %v3939, %v3943
  %v3959 = vsel %vm1803, %v3941, %v3945
  %v3960 = vsel %vm1803, %v3951, %v3939
  %v3961 = vsel %vm1803, %v3953, %v3941
  %s3962 = scalar_lea.vmem %s4, 256
  %v3963 = vld [vmem:[%s3962] sm:$0xff]
  %v3964 = vld [vmem:[%s3962 + $0x8] sm:$0xff]
  %v3965 = vld [vmem:[%s3962 + $0x10] sm:$0xff]
  %v3966 = vld [vmem:[%s3962 + $0x18] sm:$0xff]
  %v3967 = vmul.f32 %v3958, %v1817
  %v3968 = vmul.f32 %v3956, %v1821
  %v3969 = vmul.f32 %v3954, %v1825
  %v3970 = vmul.f32 %v3960, %v1829
  %v3971 = vmul.f32 %v3959, %v1817
  %v3972 = vmul.f32 %v3957, %v1821
  %v3973 = vmul.f32 %v3955, %v1825
  %v3974 = vmul.f32 %v3961, %v1829
  %v3976 = vsel %vm2119, %v3963, 0
  %v3979 = vsel %vm2119, %v3964, 0
  %v3982 = vsel %vm2119, %v3965, 0
  %v3985 = vsel %vm2119, %v3966, 0
  %3987 = vmatprep.subr.mxu0 %v3968
  %3988 = vmatpush1.msra.mxu0 %v3967
  %3989 = vmatprep.subr.mxu0 %v3972
  %3990 = vmatpush1.msra.mxu0 %v3971
  %3991 = vmatprep.subr.mxu0 0.0
  %3992 = vmatpush1.msra.mxu0 0.0
  %3993 = vmatprep.subr.mxu0 0.0
  %3994 = vmatpush1.msra.mxu0 0.0
  %3995 = vmatprep.subr.mxu0 0.0
  %3996 = vmatpush1.msra.mxu0 0.0
  %3997 = vmatprep.subr.mxu0 0.0
  %3998 = vmatpush1.msra.mxu0 0.0
  %3999 = vmatprep.subr.mxu0 0.0
  %4000 = vmatpush1.msra.mxu0 0.0
  %4001 = vmatprep.subr.mxu0 0.0
  %4002 = vmatpush1.msra.mxu0 0.0
  %4003 = vmatprep.subr.mxu0 0.0
  %4004 = vmatpush1.msra.mxu0 0.0
  %4005 = vmatprep.subr.mxu0 0.0
  %4006 = vmatpush1.msra.mxu0 0.0
  %4007 = vmatprep.subr.mxu0 0.0
  %4008 = vmatpush1.msra.mxu0 0.0
  %4009 = vmatprep.subr.mxu0 0.0
  %4010 = vmatpush1.msra.mxu0 0.0
  %4011 = vmatprep.subr.mxu0 0.0
  %4012 = vmatpush1.msra.mxu0 0.0
  %4013 = vmatprep.subr.mxu0 0.0
  %4014 = vmatpush1.msra.mxu0 0.0
  %4015 = vmatprep.subr.mxu0 0.0
  %4016 = vmatpush1.msra.mxu0 0.0
  %4017 = vmatprep.subr.mxu0 0.0
  %4018 = vmatpush1.msra.mxu0 0.0
  %4019 = vmatprep.subr.mxu0 0.0
  %4020 = vmatpush1.msra.mxu0 0.0
  %4021 = vmatprep.subr.mxu0 0.0
  %4022 = vmatpush1.msra.mxu0 0.0
  %4023 = vmatprep.subr.mxu0 0.0
  %4024 = vmatpush1.msra.mxu0 0.0
  %4025 = vmatprep.subr.mxu0 0.0
  %4026 = vmatpush1.msra.mxu0 0.0
  %4027 = vmatprep.subr.mxu0 0.0
  %4028 = vmatpush1.msra.mxu0 0.0
  %4029 = vmatprep.subr.mxu0 0.0
  %4030 = vmatpush1.msra.mxu0 0.0
  %4031 = vmatprep.subr.mxu0 0.0
  %4032 = vmatpush1.msra.mxu0 0.0
  %4033 = vmatprep.subr.mxu0 0.0
  %4034 = vmatpush1.msra.mxu0 0.0
  %4035 = vmatprep.subr.mxu0 0.0
  %4036 = vmatpush1.msra.mxu0 0.0
  %4037 = vmatprep.subr.mxu0 0.0
  %4038 = vmatpush1.msra.mxu0 0.0
  %4039 = vmatprep.subr.mxu0 0.0
  %4040 = vmatpush1.msra.mxu0 0.0
  %4041 = vmatprep.subr.mxu0 0.0
  %4042 = vmatpush1.msra.mxu0 0.0
  %4043 = vmatprep.subr.mxu0 0.0
  %4044 = vmatpush1.msra.mxu0 0.0
  %4045 = vmatprep.subr.mxu0 0.0
  %4046 = vmatpush1.msra.mxu0 0.0
  %4047 = vmatprep.subr.mxu0 0.0
  %4048 = vmatpush1.msra.mxu0 0.0
  %4049 = vmatprep.subr.mxu0 0.0
  %4050 = vmatpush1.msra.mxu0 0.0
  %4051 = vmatprep.mubr.f32.mxu0 0.0
  %4052 = vmatmul.mubr.f32.gmra.mrb[0].mxu0 %v3976
  %v4053 = vpop.f32.mrb[0].mxu0
  %v4054 = vadd.f32 0.0, %v4053
  %v4055 = vpop.f32.mrb[0].mxu0
  %v4056 = vadd.f32 0.0, %v4055
  %4057 = vmatprep.mubr.f32.mxu0 0.0
  %4058 = vmatmul.mubr.f32.gmra.mrb[0].mxu0 %v3979
  %v4059 = vpop.f32.mrb[0].mxu0
  %v4060 = vadd.f32 0.0, %v4059
  %v4061 = vpop.f32.mrb[0].mxu0
  %v4062 = vadd.f32 0.0, %v4061
  %4063 = vmatprep.mubr.f32.mxu0 0.0
  %4064 = vmatmul.mubr.f32.gmra.mrb[0].mxu0 %v3982
  %v4065 = vpop.f32.mrb[0].mxu0
  %v4066 = vadd.f32 0.0, %v4065
  %v4067 = vpop.f32.mrb[0].mxu0
  %v4068 = vadd.f32 0.0, %v4067
  %4069 = vmatprep.mubr.f32.mxu0 0.0
  %4070 = vmatmul.mubr.f32.gmra.mrb[0].mxu0 %v3985
  %v4071 = vpop.f32.mrb[0].mxu0
  %v4072 = vadd.f32 0.0, %v4071
  %v4073 = vpop.f32.mrb[0].mxu0
  %v4074 = vadd.f32 0.0, %v4073
  %4075 = vdwg.mxu0
  %4076 = vmatprep.subr.mxu0 %v3970
  %4077 = vmatpush1.msra.mxu0 %v3969
  %4078 = vmatprep.subr.mxu0 %v3974
  %4079 = vmatpush1.msra.mxu0 %v3973
  %4080 = vmatprep.subr.mxu0 0.0
  %4081 = vmatpush1.msra.mxu0 0.0
  %4082 = vmatprep.subr.mxu0 0.0
  %4083 = vmatpush1.msra.mxu0 0.0
  %4084 = vmatprep.subr.mxu0 0.0
  %4085 = vmatpush1.msra.mxu0 0.0
  %4086 = vmatprep.subr.mxu0 0.0
  %4087 = vmatpush1.msra.mxu0 0.0
  %4088 = vmatprep.subr.mxu0 0.0
  %4089 = vmatpush1.msra.mxu0 0.0
  %4090 = vmatprep.subr.mxu0 0.0
  %4091 = vmatpush1.msra.mxu0 0.0
  %4092 = vmatprep.subr.mxu0 0.0
  %4093 = vmatpush1.msra.mxu0 0.0
  %4094 = vmatprep.subr.mxu0 0.0
  %4095 = vmatpush1.msra.mxu0 0.0
  %4096 = vmatprep.subr.mxu0 0.0
  %4097 = vmatpush1.msra.mxu0 0.0
  %4098 = vmatprep.subr.mxu0 0.0
  %4099 = vmatpush1.msra.mxu0 0.0
  %4100 = vmatprep.subr.mxu0 0.0
  %4101 = vmatpush1.msra.mxu0 0.0
  %4102 = vmatprep.subr.mxu0 0.0
  %4103 = vmatpush1.msra.mxu0 0.0
  %4104 = vmatprep.subr.mxu0 0.0
  %4105 = vmatpush1.msra.mxu0 0.0
  %4106 = vmatprep.subr.mxu0 0.0
  %4107 = vmatpush1.msra.mxu0 0.0
  %4108 = vmatprep.subr.mxu0 0.0
  %4109 = vmatpush1.msra.mxu0 0.0
  %4110 = vmatprep.subr.mxu0 0.0
  %4111 = vmatpush1.msra.mxu0 0.0
  %4112 = vmatprep.subr.mxu0 0.0
  %4113 = vmatpush1.msra.mxu0 0.0
  %4114 = vmatprep.subr.mxu0 0.0
  %4115 = vmatpush1.msra.mxu0 0.0
  %4116 = vmatprep.subr.mxu0 0.0
  %4117 = vmatpush1.msra.mxu0 0.0
  %4118 = vmatprep.subr.mxu0 0.0
  %4119 = vmatpush1.msra.mxu0 0.0
  %4120 = vmatprep.subr.mxu0 0.0
  %4121 = vmatpush1.msra.mxu0 0.0
  %4122 = vmatprep.subr.mxu0 0.0
  %4123 = vmatpush1.msra.mxu0 0.0
  %4124 = vmatprep.subr.mxu0 0.0
  %4125 = vmatpush1.msra.mxu0 0.0
  %4126 = vmatprep.subr.mxu0 0.0
  %4127 = vmatpush1.msra.mxu0 0.0
  %4128 = vmatprep.subr.mxu0 0.0
  %4129 = vmatpush1.msra.mxu0 0.0
  %4130 = vmatprep.subr.mxu0 0.0
  %4131 = vmatpush1.msra.mxu0 0.0
  %4132 = vmatprep.subr.mxu0 0.0
  %4133 = vmatpush1.msra.mxu0 0.0
  %4134 = vmatprep.subr.mxu0 0.0
  %4135 = vmatpush1.msra.mxu0 0.0
  %4136 = vmatprep.subr.mxu0 0.0
  %4137 = vmatpush1.msra.mxu0 0.0
  %4138 = vmatprep.subr.mxu0 0.0
  %4139 = vmatpush1.msra.mxu0 0.0
  %4140 = vmatprep.mubr.f32.mxu0 0.0
  %4141 = vmatmul.mubr.f32.gmra.mrb[0].mxu0 %v3976
  %v4142 = vpop.f32.mrb[0].mxu0
  %v4143 = vadd.f32 0.0, %v4142
  %v4144 = vpop.f32.mrb[0].mxu0
  %v4145 = vadd.f32 0.0, %v4144
  %4146 = vmatprep.mubr.f32.mxu0 0.0
  %4147 = vmatmul.mubr.f32.gmra.mrb[0].mxu0 %v3979
  %v4148 = vpop.f32.mrb[0].mxu0
  %v4149 = vadd.f32 0.0, %v4148
  %v4150 = vpop.f32.mrb[0].mxu0
  %v4151 = vadd.f32 0.0, %v4150
  %4152 = vmatprep.mubr.f32.mxu0 0.0
  %4153 = vmatmul.mubr.f32.gmra.mrb[0].mxu0 %v3982
  %v4154 = vpop.f32.mrb[0].mxu0
  %v4155 = vadd.f32 0.0, %v4154
  %v4156 = vpop.f32.mrb[0].mxu0
  %v4157 = vadd.f32 0.0, %v4156
  %4158 = vmatprep.mubr.f32.mxu0 0.0
  %4159 = vmatmul.mubr.f32.gmra.mrb[0].mxu0 %v3985
  %v4160 = vpop.f32.mrb[0].mxu0
  %v4161 = vadd.f32 0.0, %v4160
  %v4162 = vpop.f32.mrb[0].mxu0
  %v4163 = vadd.f32 0.0, %v4162
  %4164 = vdwg.mxu0
  %v4165 = vadd.f32 %v3922, %v4054
  %v4166 = vadd.f32 %v3923, %v4056
  %v4167 = vadd.f32 %v3924, %v4143
  %v4168 = vadd.f32 %v3925, %v4145
  %v4169 = vadd.f32 %v3926, %v4060
  %v4170 = vadd.f32 %v3927, %v4062
  %v4171 = vadd.f32 %v3928, %v4149
  %v4172 = vadd.f32 %v3929, %v4151
  %v4173 = vadd.f32 %v3930, %v4066
  %v4174 = vadd.f32 %v3931, %v4068
  %v4175 = vadd.f32 %v3932, %v4155
  %v4176 = vadd.f32 %v3933, %v4157
  %v4177 = vadd.f32 %v3934, %v4072
  %v4178 = vadd.f32 %v3935, %v4074
  %v4179 = vadd.f32 %v3936, %v4161
  %v4180 = vadd.f32 %v3937, %v4163
  %v4181 = vld [vmem:[%s5] sm:$0xff]
  %v4182 = vld [vmem:[%s5 + $0x8] sm:$0xff]
  %v4183 = vld [vmem:[%s5 + $0x10] sm:$0xff]
  %v4184 = vld [vmem:[%s5 + $0x18] sm:$0xff]
  %4186 = vset.pattern.permute.xlu0 0
  %4187 = vperm.xlu0 %4186, %v4181
  %v4188 = vpop.permute.xlu0 %4187
  %4191 = vset.pattern.permute.xlu0 0
  %4192 = vperm.xlu0 %4191, %v4182
  %v4193 = vpop.permute.xlu0 %4192
  %4196 = vset.pattern.permute.xlu0 0
  %4197 = vperm.xlu0 %4196, %v4183
  %v4198 = vpop.permute.xlu0 %4197
  %4201 = vset.pattern.permute.xlu0 0
  %4202 = vperm.xlu0 %4201, %v4184
  %v4203 = vpop.permute.xlu0 %4202
  %v4205 = vadd.f32 %v4165, %v4188
  %v4206 = vadd.f32 %v4166, %v4188
  %v4207 = vadd.f32 %v4167, %v4188
  %v4208 = vadd.f32 %v4168, %v4188
  %v4209 = vadd.f32 %v4169, %v4193
  %v4210 = vadd.f32 %v4170, %v4193
  %v4211 = vadd.f32 %v4171, %v4193
  %v4212 = vadd.f32 %v4172, %v4193
  %v4213 = vadd.f32 %v4173, %v4198
  %v4214 = vadd.f32 %v4174, %v4198
  %v4215 = vadd.f32 %v4175, %v4198
  %v4216 = vadd.f32 %v4176, %v4198
  %v4217 = vadd.f32 %v4177, %v4203
  %v4218 = vadd.f32 %v4178, %v4203
  %v4219 = vadd.f32 %v4179, %v4203
  %v4220 = vadd.f32 %v4180, %v4203
  %v4221 = vmax.f32 %v4205, 0.0
  %v4222 = vmax.f32 %v4206, 0.0
  %v4223 = vmax.f32 %v4207, 0.0
  %v4224 = vmax.f32 %v4208, 0.0
  %v4225 = vmax.f32 %v4209, 0.0
  %v4226 = vmax.f32 %v4210, 0.0
  %v4227 = vmax.f32 %v4211, 0.0
  %v4228 = vmax.f32 %v4212, 0.0
  %v4229 = vmax.f32 %v4213, 0.0
  %v4230 = vmax.f32 %v4214, 0.0
  %v4231 = vmax.f32 %v4215, 0.0
  %v4232 = vmax.f32 %v4216, 0.0
  %v4233 = vmax.f32 %v4217, 0.0
  %v4234 = vmax.f32 %v4218, 0.0
  %v4235 = vmax.f32 %v4219, 0.0
  %v4236 = vmax.f32 %v4220, 0.0
  %v4237 = vld [vmem:[%s6] sm:$0xff]
  %v4238 = vld [vmem:[%s6 + $0x8] sm:$0xff]
  %v4239 = vld [vmem:[%s6 + $0x10] sm:$0xff]
  %v4240 = vld [vmem:[%s6 + $0x18] sm:$0xff]
  %4241 = vmatprep.subr.mxu0 %v4222
  %4242 = vmatpush1.xpose.msra.mxu0 %v4221
  %4243 = vmatprep.subr.mxu0 %v4226
  %4244 = vmatpush1.xpose.msra.mxu0 %v4225
  %4245 = vmatprep.subr.mxu0 %v4230
  %4246 = vmatpush1.xpose.msra.mxu0 %v4229
  %4247 = vmatprep.subr.mxu0 %v4234
  %4248 = vmatpush1.xpose.msra.mxu0 %v4233
  %4249 = vmatprep.subr.mxu0 0.0
  %4250 = vmatpush1.xpose.msra.mxu0 0.0
  %4251 = vmatprep.subr.mxu0 0.0
  %4252 = vmatpush1.xpose.msra.mxu0 0.0
  %4253 = vmatprep.subr.mxu0 0.0
  %4254 = vmatpush1.xpose.msra.mxu0 0.0
  %4255 = vmatprep.subr.mxu0 0.0
  %4256 = vmatpush1.xpose.msra.mxu0 0.0
  %4257 = vmatprep.subr.mxu0 0.0
  %4258 = vmatpush1.xpose.msra.mxu0 0.0
  %4259 = vmatprep.subr.mxu0 0.0
  %4260 = vmatpush1.xpose.msra.mxu0 0.0
  %4261 = vmatprep.subr.mxu0 0.0
  %4262 = vmatpush1.xpose.msra.mxu0 0.0
  %4263 = vmatprep.subr.mxu0 0.0
  %4264 = vmatpush1.xpose.msra.mxu0 0.0
  %4265 = vmatprep.subr.mxu0 0.0
  %4266 = vmatpush1.xpose.msra.mxu0 0.0
  %4267 = vmatprep.subr.mxu0 0.0
  %4268 = vmatpush1.xpose.msra.mxu0 0.0
  %4269 = vmatprep.subr.mxu0 0.0
  %4270 = vmatpush1.xpose.msra.mxu0 0.0
  %4271 = vmatprep.subr.mxu0 0.0
  %4272 = vmatpush1.xpose.msra.mxu0 0.0
  %4273 = vmatprep.subr.mxu0 0.0
  %4274 = vmatpush1.xpose.msra.mxu0 0.0
  %4275 = vmatprep.subr.mxu0 0.0
  %4276 = vmatpush1.xpose.msra.mxu0 0.0
  %4277 = vmatprep.subr.mxu0 0.0
  %4278 = vmatpush1.xpose.msra.mxu0 0.0
  %4279 = vmatprep.subr.mxu0 0.0
  %4280 = vmatpush1.xpose.msra.mxu0 0.0
  %4281 = vmatprep.subr.mxu0 0.0
  %4282 = vmatpush1.xpose.msra.mxu0 0.0
  %4283 = vmatprep.subr.mxu0 0.0
  %4284 = vmatpush1.xpose.msra.mxu0 0.0
  %4285 = vmatprep.subr.mxu0 0.0
  %4286 = vmatpush1.xpose.msra.mxu0 0.0
  %4287 = vmatprep.subr.mxu0 0.0
  %4288 = vmatpush1.xpose.msra.mxu0 0.0
  %4289 = vmatprep.subr.mxu0 0.0
  %4290 = vmatpush1.xpose.msra.mxu0 0.0
  %4291 = vmatprep.subr.mxu0 0.0
  %4292 = vmatpush1.xpose.msra.mxu0 0.0
  %4293 = vmatprep.subr.mxu0 0.0
  %4294 = vmatpush1.xpose.msra.mxu0 0.0
  %4295 = vmatprep.subr.mxu0 0.0
  %4296 = vmatpush1.xpose.msra.mxu0 0.0
  %4297 = vmatprep.subr.mxu0 0.0
  %4298 = vmatpush1.xpose.msra.mxu0 0.0
  %4299 = vmatprep.subr.mxu0 0.0
  %4300 = vmatpush1.xpose.msra.mxu0 0.0
  %4301 = vmatprep.subr.mxu0 0.0
  %4302 = vmatpush1.xpose.msra.mxu0 0.0
  %4303 = vmatprep.subr.mxu0 0.0
  %4304 = vmatpush1.xpose.msra.mxu0 0.0
  %4305 = vmatprep.mubr.f32.mxu0 %v4238
  %4306 = vmatmul.mubr.f32.gmra.mrb[0].mxu0 %v4237
  %v4307 = vpop.f32.mrb[0].mxu0
  %v4308 = vadd.f32 0.0, %v4307
  %v4309 = vpop.f32.mrb[0].mxu0
  %4310 = vdwg.mxu0
  %4311 = vmatprep.subr.mxu0 %v4224
  %4312 = vmatpush1.xpose.msra.mxu0 %v4223
  %4313 = vmatprep.subr.mxu0 %v4228
  %4314 = vmatpush1.xpose.msra.mxu0 %v4227
  %4315 = vmatprep.subr.mxu0 %v4232
  %4316 = vmatpush1.xpose.msra.mxu0 %v4231
  %4317 = vmatprep.subr.mxu0 %v4236
  %4318 = vmatpush1.xpose.msra.mxu0 %v4235
  %4319 = vmatprep.subr.mxu0 0.0
  %4320 = vmatpush1.xpose.msra.mxu0 0.0
  %4321 = vmatprep.subr.mxu0 0.0
  %4322 = vmatpush1.xpose.msra.mxu0 0.0
  %4323 = vmatprep.subr.mxu0 0.0
  %4324 = vmatpush1.xpose.msra.mxu0 0.0
  %4325 = vmatprep.subr.mxu0 0.0
  %4326 = vmatpush1.xpose.msra.mxu0 0.0
  %4327 = vmatprep.subr.mxu0 0.0
  %4328 = vmatpush1.xpose.msra.mxu0 0.0
  %4329 = vmatprep.subr.mxu0 0.0
  %4330 = vmatpush1.xpose.msra.mxu0 0.0
  %4331 = vmatprep.subr.mxu0 0.0
  %4332 = vmatpush1.xpose.msra.mxu0 0.0
  %4333 = vmatprep.subr.mxu0 0.0
  %4334 = vmatpush1.xpose.msra.mxu0 0.0
  %4335 = vmatprep.subr.mxu0 0.0
  %4336 = vmatpush1.xpose.msra.mxu0 0.0
  %4337 = vmatprep.subr.mxu0 0.0
  %4338 = vmatpush1.xpose.msra.mxu0 0.0
  %4339 = vmatprep.subr.mxu0 0.0
  %4340 = vmatpush1.xpose.msra.mxu0 0.0
  %4341 = vmatprep.subr.mxu0 0.0
  %4342 = vmatpush1.xpose.msra.mxu0 0.0
  %4343 = vmatprep.subr.mxu0 0.0
  %4344 = vmatpush1.xpose.msra.mxu0 0.0
  %4345 = vmatprep.subr.mxu0 0.0
  %4346 = vmatpush1.xpose.msra.mxu0 0.0
  %4347 = vmatprep.subr.mxu0 0.0
  %4348 = vmatpush1.xpose.msra.mxu0 0.0
  %4349 = vmatprep.subr.mxu0 0.0
  %4350 = vmatpush1.xpose.msra.mxu0 0.0
  %4351 = vmatprep.subr.mxu0 0.0
  %4352 = vmatpush1.xpose.msra.mxu0 0.0
  %4353 = vmatprep.subr.mxu0 0.0
  %4354 = vmatpush1.xpose.msra.mxu0 0.0
  %4355 = vmatprep.subr.mxu0 0.0
  %4356 = vmatpush1.xpose.msra.mxu0 0.0
  %4357 = vmatprep.subr.mxu0 0.0
  %4358 = vmatpush1.xpose.msra.mxu0 0.0
  %4359 = vmatprep.subr.mxu0 0.0
  %4360 = vmatpush1.xpose.msra.mxu0 0.0
  %4361 = vmatprep.subr.mxu0 0.0
  %4362 = vmatpush1.xpose.msra.mxu0 0.0
  %4363 = vmatprep.subr.mxu0 0.0
  %4364 = vmatpush1.xpose.msra.mxu0 0.0
  %4365 = vmatprep.subr.mxu0 0.0
  %4366 = vmatpush1.xpose.msra.mxu0 0.0
  %4367 = vmatprep.subr.mxu0 0.0
  %4368 = vmatpush1.xpose.msra.mxu0 0.0
  %4369 = vmatprep.subr.mxu0 0.0
  %4370 = vmatpush1.xpose.msra.mxu0 0.0
  %4371 = vmatprep.subr.mxu0 0.0
  %4372 = vmatpush1.xpose.msra.mxu0 0.0
  %4373 = vmatprep.subr.mxu0 0.0
  %4374 = vmatpush1.xpose.msra.mxu0 0.0
  %4375 = vmatprep.mubr.f32.mxu0 %v4240
  %4376 = vmatmul.mubr.f32.gmra.mrb[0].mxu0 %v4239
  %v4377 = vpop.f32.mrb[0].mxu0
  %v4378 = vadd.f32 %v4308, %v4377
  %v4379 = vpop.f32.mrb[0].mxu0
  %4380 = vdwg.mxu0
  %v4381 = vld [vmem:[%s7] sm:$0xff]
  %v4382 = vld [vmem:[%s7 + $0x8] sm:$0xff]
  %v4383 = vld [vmem:[%s7 + $0x10] sm:$0xff]
  %v4384 = vld [vmem:[%s7 + $0x18] sm:$0xff]
  %v4385 = vld [vmem:[%s8] sm:$0x1]
  %v4387 = vlaneseq
  %v4388 = vshrl.u32 %v4387, 7
  %v4389 = vsub.s32 0, %v4388
  %v4390 = vrot.slane %v4385, %v4389
  %vm4392 = vcmask 261120
  %v4394 = vsel %vm4392, %v4378, 0
  %4396 = vmatprep.subr.mxu0 0.0
  %4397 = vmatpush1.msra.mxu0 %v4381
  %4398 = vmatprep.subr.mxu0 0.0
  %4399 = vmatpush1.msra.mxu0 %v4382
  %4400 = vmatprep.subr.mxu0 0.0
  %4401 = vmatpush1.msra.mxu0 %v4383
  %4402 = vmatprep.subr.mxu0 0.0
  %4403 = vmatpush1.msra.mxu0 %v4384
  %4404 = vmatprep.subr.mxu0 0.0
  %4405 = vmatpush1.msra.mxu0 0.0
  %4406 = vmatprep.subr.mxu0 0.0
  %4407 = vmatpush1.msra.mxu0 0.0
  %4408 = vmatprep.subr.mxu0 0.0
  %4409 = vmatpush1.msra.mxu0 0.0
  %4410 = vmatprep.subr.mxu0 0.0
  %4411 = vmatpush1.msra.mxu0 0.0
  %4412 = vmatprep.subr.mxu0 0.0
  %4413 = vmatpush1.msra.mxu0 0.0
  %4414 = vmatprep.subr.mxu0 0.0
  %4415 = vmatpush1.msra.mxu0 0.0
  %4416 = vmatprep.subr.mxu0 0.0
  %4417 = vmatpush1.msra.mxu0 0.0
  %4418 = vmatprep.subr.mxu0 0.0
  %4419 = vmatpush1.msra.mxu0 0.0
  %4420 = vmatprep.subr.mxu0 0.0
  %4421 = vmatpush1.msra.mxu0 0.0
  %4422 = vmatprep.subr.mxu0 0.0
  %4423 = vmatpush1.msra.mxu0 0.0
  %4424 = vmatprep.subr.mxu0 0.0
  %4425 = vmatpush1.msra.mxu0 0.0
  %4426 = vmatprep.subr.mxu0 0.0
  %4427 = vmatpush1.msra.mxu0 0.0
  %4428 = vmatprep.subr.mxu0 0.0
  %4429 = vmatpush1.msra.mxu0 0.0
  %4430 = vmatprep.subr.mxu0 0.0
  %4431 = vmatpush1.msra.mxu0 0.0
  %4432 = vmatprep.subr.mxu0 0.0
  %4433 = vmatpush1.msra.mxu0 0.0
  %4434 = vmatprep.subr.mxu0 0.0
  %4435 = vmatpush1.msra.mxu0 0.0
  %4436 = vmatprep.subr.mxu0 0.0
  %4437 = vmatpush1.msra.mxu0 0.0
  %4438 = vmatprep.subr.mxu0 0.0
  %4439 = vmatpush1.msra.mxu0 0.0
  %4440 = vmatprep.subr.mxu0 0.0
  %4441 = vmatpush1.msra.mxu0 0.0
  %4442 = vmatprep.subr.mxu0 0.0
  %4443 = vmatpush1.msra.mxu0 0.0
  %4444 = vmatprep.subr.mxu0 0.0
  %4445 = vmatpush1.msra.mxu0 0.0
  %4446 = vmatprep.subr.mxu0 0.0
  %4447 = vmatpush1.msra.mxu0 0.0
  %4448 = vmatprep.subr.mxu0 0.0
  %4449 = vmatpush1.msra.mxu0 0.0
  %4450 = vmatprep.subr.mxu0 0.0
  %4451 = vmatpush1.msra.mxu0 0.0
  %4452 = vmatprep.subr.mxu0 0.0
  %4453 = vmatpush1.msra.mxu0 0.0
  %4454 = vmatprep.subr.mxu0 0.0
  %4455 = vmatpush1.msra.mxu0 0.0
  %4456 = vmatprep.subr.mxu0 0.0
  %4457 = vmatpush1.msra.mxu0 0.0
  %4458 = vmatprep.subr.mxu0 0.0
  %4459 = vmatpush1.msra.mxu0 0.0
  %4460 = vmatprep.mubr.f32.mxu0 0.0
  %4461 = vmatmul.mubr.f32.gmra.mrb[0].mxu0 %v4394
  %v4462 = vpop.f32.mrb[0].mxu0
  %v4463 = vadd.f32 %v4390, %v4462
  %v4464 = vpop.f32.mrb[0].mxu0
  %4465 = vdwg.mxu0
  %4466 = vst [vmem:[%s9] sm:$0xff] %v4463
  // Predicated region
  $region38: #{premodel_forward.1} parent=0 // pred_check
    _
  $region39: #{premodel_forward.1} parent=0 // pred_check_branch
    %4468 = sbr.rel (0) target = $region41
  $region40: #{premodel_forward.1} parent=0 // pred_region
    _
  $region41: #{premodel_forward.1} parent=0 // pred_fallthru
    _
  // Predicated region
  $region42: #{premodel_forward.1} parent=0 // pred_check
    _
  $region43: #{premodel_forward.1} parent=0 // pred_check_branch
    %4470 = sbr.rel (0) target = $region45
  $region44: #{premodel_forward.1} parent=0 // pred_region
    _
  $region45: #{premodel_forward.1} parent=0 // pred_fallthru
    _

</llo_original>
